<compile_context>
chip_gen: v5e
topology: v5e:2x2
jax: 0.10.0
libtpu: 0.0.40
codegen_flags: <defaults>
</compile_context>

<pallas_src>
import jax
import jax.numpy as jnp
from jax import lax
from jax.experimental import pallas as pl
from jax.experimental.pallas import tpu as pltpu


# ----------------------------- small helpers ------------------------------------

def _lrelu(x, slope=0.1):
    return jnp.where(x > 0, x, slope * x)


def _pick_row_tile(rows, bytes_per_row, budget=4 << 20):
    """Largest divisor of `rows` (preferring multiples of 8) whose single-buffer
    block footprint stays under `budget` bytes (Pallas double-buffers on top)."""
    divs = [d for d in range(1, rows + 1) if rows % d == 0]
    fits = [d for d in divs if d * bytes_per_row <= budget]
    if not fits:
        return 1
    pref = [d for d in fits if d % 8 == 0]
    return max(pref) if pref else max(fits)


# ----------------------------- Pallas kernel 1: band fuse ------------------------
# grouped 1x1 conv -> LeakyReLU -> grouped 1x1 conv -> softmax(+0.25) over the 4
# bands, then complex re-weighting of the original bands and sum over bands.
# Each band is a full (B, THF, Wh) lane-dense slab; weights are SMEM scalars.

def fuse_kernel(real_ref, imag_ref, w_ref, outr_ref, outi_ref):
    c = pl.program_id(0)
    vr = [real_ref[:, 0, k, :, :] for k in range(4)]   # 4 x (B, THF, Wh)
    vi = [imag_ref[:, 0, k, :, :] for k in range(4)]

    def conv4(v, base):
        # per-channel grouped 1x1 conv, 4 in -> 4 out; weights at
        # w_ref[c, base : base+16] (row-major o,k), bias at [base+16 : base+20].
        out = []
        for o in range(4):
            acc = v[0] * w_ref[c, base + 4 * o]
            for k in range(1, 4):
                acc = acc + v[k] * w_ref[c, base + 4 * o + k]
            out.append(acc + w_ref[c, base + 16 + o])
        return out

    def softmax_weights(v, base):
        h = [_lrelu(t) for t in conv4(v, base)]
        y = conv4(h, base + 20)            # softmax +0.25 shift folded into bias
        m = jnp.maximum(jnp.maximum(y[0], y[1]), jnp.maximum(y[2], y[3]))
        e = [jnp.exp(t - m) for t in y]    # exp on the EUP
        inv = pl.reciprocal(e[0] + e[1] + e[2] + e[3], approx=True)
        return [t * inv for t in e]

    wr = softmax_weights(vr, 0)            # real softmax weights, 4 x (B, THF, Wh)
    wi = softmax_weights(vi, 40)           # imag softmax weights

    # (vr + i*vi) * (wr + i*wi), summed over the 4 bands
    sr = vr[0] * wr[0] - vi[0] * wi[0]
    si = vr[0] * wi[0] + vi[0] * wr[0]
    for k in range(1, 4):
        sr = sr + vr[k] * wr[k] - vi[k] * wi[k]
        si = si + vr[k] * wi[k] + vi[k] * wr[k]

    outr_ref[:, 0, :, :] = sr              # two separate lane-dense stores
    outi_ref[:, 0, :, :] = si


def fuse_weight_apply(real, imag, wpack):
    """real, imag: (B, C, 4, Hh, Wh) f32; wpack: (C, 80) f32 (SMEM).
    Returns (real_out, imag_out), each (B, C, Hh, Wh)."""
    B, C, _, Hh, Wh = real.shape
    # single-buffer bytes per output row: 2 band inputs (4 slabs each) + 2 outputs
    bytes_per_row = 4 * B * Wh * (2 * 4 + 2)
    THF = _pick_row_tile(Hh, bytes_per_row)

    band_spec = pl.BlockSpec((B, 1, 4, THF, Wh), lambda c, t: (0, c, 0, t, 0))
    out_spec = pl.BlockSpec((B, 1, THF, Wh), lambda c, t: (0, c, t, 0))
    out_sds = jax.ShapeDtypeStruct((B, C, Hh, Wh), jnp.float32)

    return pl.pallas_call(
        fuse_kernel,
        grid=(C, Hh // THF),
        in_specs=[band_spec, band_spec,
                  pl.BlockSpec(memory_space=pltpu.MemorySpace.SMEM)],
        out_specs=(out_spec, out_spec),
        out_shape=(out_sds, out_sds),
        compiler_params=pltpu.CompilerParams(
            dimension_semantics=("parallel", "parallel"),
            vmem_limit_bytes=32 * 1024 * 1024),
    )(real, imag, wpack)


# ----------------------------- Pallas kernel 2: head -----------------------------
# out[b,o,i,j] = leaky_relu( sum_c w[o,c] * (|ifft| + avgpool2x2(x))[b,c,i,j] + bias[o] )
# 2x2 avg pool fused in-kernel: vertical pairs via lane-half slices of the
# (free) x reshape, horizontal pairs via an MXU matmul with a 0/0.25 matrix.

def head_kernel(img_ref, x2_ref, ph_ref, wt_ref, bias_ref, out_ref):
    C, TH, Wh = img_ref.shape[1], img_ref.shape[2], img_ref.shape[3]
    W = 2 * Wh
    # vertical pair-sum: x rows 2i and 2i+1 are the two lane-halves of x2 row i
    xv = x2_ref[0, :, :, pl.ds(0, W)] + x2_ref[0, :, :, pl.ds(W, W)]   # (C, TH, W)
    # horizontal pair-sum + /4 on the MXU (pooling matrix ph is 0 / 0.25)
    pool = jnp.dot(xv.reshape(C * TH, W), ph_ref[...],
                   precision=lax.Precision.HIGHEST,
                   preferred_element_type=jnp.float32).reshape(C, TH, Wh)
    s = img_ref[0] + pool                                              # (C, TH, Wh)

    O = wt_ref.shape[0]
    # Channel mix (1x1 conv C -> O) with SMEM scalar weights; O lane-dense stores.
    # TODO(synk): for production channel counts (C >= ~32, O >= ~64) replace this
    # scalar-MAC loop (and the SMEM weight table) with an MXU jnp.dot on
    # 128-padded (O, C) x (C, TH*Wh) VMEM tiles.
    for o in range(O):
        acc = s[0] * wt_ref[o, 0]
        for ci in range(1, C):
            acc = acc + s[ci] * wt_ref[o, ci]
        acc = acc + bias_ref[o]
        out_ref[0, o] = _lrelu(acc)


def head_apply(img, x2, ph, wt, bias):
    """img: (B, C, Hh, Wh); x2: (B, C, Hh, 2*W) (free reshape of x);
    ph: (W, Wh) pooling matrix; wt: (O, C); bias: (O,) -> (B, O, Hh, Wh)."""
    B, C, Hh, Wh = img.shape
    O = wt.shape[0]
    bytes_per_row = 4 * Wh * (C + 4 * C + O)    # img + x2 (4*Wh wide) + out
    TH = _pick_row_tile(Hh, bytes_per_row)

    return pl.pallas_call(
        head_kernel,
        grid=(B, Hh // TH),
        in_specs=[
            pl.BlockSpec((1, C, TH, Wh), lambda b, t: (b, 0, t, 0)),
            pl.BlockSpec((1, C, TH, 4 * Wh), lambda b, t: (b, 0, t, 0)),
            pl.BlockSpec((2 * Wh, Wh), lambda b, t: (0, 0)),   # DMA'd once
            pl.BlockSpec(memory_space=pltpu.MemorySpace.SMEM),
            pl.BlockSpec(memory_space=pltpu.MemorySpace.SMEM),
        ],
        out_specs=pl.BlockSpec((1, O, TH, Wh), lambda b, t: (b, 0, t, 0)),
        out_shape=jax.ShapeDtypeStruct((B, O, Hh, Wh), jnp.float32),
        compiler_params=pltpu.CompilerParams(
            dimension_semantics=("parallel", "parallel"),
            vmem_limit_bytes=32 * 1024 * 1024),
    )(img, x2, ph, wt, bias)


# ----------------------------- JAX glue ------------------------------------------

def _stack_bands(f, H, W):
    """Reproduce the 16-quadrant shuffle -> stack of [fuse_A..D], (B,C,4,H/2,W/2)."""
    mr, mc = H // 4, W // 4
    A_  = f[:, :, :mr, :mc];            t2  = f[:, :, :mr, mc:2 * mc]
    t1  = f[:, :, :mr, 2 * mc:3 * mc];  B_  = f[:, :, :mr, 3 * mc:]
    t5  = f[:, :, mr:2 * mr, :mc];      t6  = f[:, :, mr:2 * mr, mc:2 * mc]
    t7  = f[:, :, mr:2 * mr, 2 * mc:3 * mc]; t8 = f[:, :, mr:2 * mr, 3 * mc:]
    t9  = f[:, :, 2 * mr:3 * mr, :mc];  t10 = f[:, :, 2 * mr:3 * mr, mc:2 * mc]
    t11 = f[:, :, 2 * mr:3 * mr, 2 * mc:3 * mc]; t12 = f[:, :, 2 * mr:3 * mr, 3 * mc:]
    C_  = f[:, :, 3 * mr:, :mc];        t3  = f[:, :, 3 * mr:, mc:2 * mc]
    t4  = f[:, :, 3 * mr:, 2 * mc:3 * mc]; D_ = f[:, :, 3 * mr:, 3 * mc:]

    cat = jnp.concatenate
    fuse_A = cat([cat([A_,  B_], -1), cat([C_,  D_], -1)], -2)
    fuse_B = cat([cat([t1,  t2], -1), cat([t4,  t3], -1)], -2)
    fuse_C = cat([cat([t9, t12], -1), cat([t5,  t8], -1)], -2)
    fuse_D = cat([cat([t11, t10], -1), cat([t7,  t6], -1)], -2)
    return jnp.stack([fuse_A, fuse_B, fuse_C, fuse_D], axis=2)
    # TODO(synk): the PyTorch ComplexResize fallback (quadrants of unequal size,
    # i.e. H or W not divisible by 4) is not implemented.


def _pool_matrix(W):
    """(W, W//2) matrix, 0.25 where the input column feeds that output column."""
    rows = jnp.arange(W)[:, None]
    cols = jnp.arange(W // 2)[None, :]
    return jnp.where(rows // 2 == cols, 0.25, 0.0).astype(jnp.float32)


def _pack_fuse_weights(p):
    """Pack per-channel grouped-conv weights into one (C, 80) SMEM table:
    [0:16] w1r | [16:20] b1r | [20:36] w2r | [36:40] b2r+0.25 | 40..80 imag."""
    C = p["wr1"].shape[0]
    real = jnp.concatenate([p["wr1"].reshape(C, 16), p["br1"][:, :, 0],
                            p["wr2"].reshape(C, 16), p["br2"][:, :, 0] + 0.25],
                           axis=1)
    imag = jnp.concatenate([p["wi1"].reshape(C, 16), p["bi1"][:, :, 0],
                            p["wi2"].reshape(C, 16), p["bi2"][:, :, 0] + 0.25],
                           axis=1)
    return jnp.concatenate([real, imag], axis=1)   # (C, 80)


def fouri_down_forward(x, p):
    B, C, H, W = x.shape
    assert H % 4 == 0 and W % 4 == 0, "FouriDown quadrant split needs H, W % 4 == 0"
    Hh, Wh = H // 2, W // 2

    img_fft = jnp.fft.fft2(x)                                  # complex64, NCHW
    bands = _stack_bands(img_fft, H, W)                        # (B, C, 4, Hh, Wh)
    real = jnp.real(bands).astype(jnp.float32)
    imag = jnp.imag(bands).astype(jnp.float32)
    # TODO(synk): the quadrant shuffle above is still XLA slice/concat glue; the
    # band softmax needs all 4 bands per step, so pushing the shuffle into the
    # fuse kernel's index_map (grid over quadrants) is left for a later pass.

    fr, fi = fuse_weight_apply(real, imag, _pack_fuse_weights(p))   # 2x (B,C,Hh,Wh)
    img = jnp.abs(jnp.fft.ifft2(lax.complex(fr, fi)))               # (B, C, Hh, Wh)

    # bilinear scale=0.5 / align_corners=False == 2x2 average pool for even H, W;
    # the pool itself is fused into the head kernel -- only this free contiguous
    # reshape of x happens in glue (no pool intermediate in HBM).
    x2 = x.reshape(B, C, Hh, 2 * W)

    y = head_apply(img, x2, _pool_matrix(W),
                   jnp.transpose(p["w2x"]), p["b2x"][0])            # (B, O, Hh, Wh)
    return y


# ----------------------------- pure-JAX reference --------------------------------

def reference_forward(x, p):
    B, C, H, W = x.shape
    Hh, Wh = H // 2, W // 2
    bands = _stack_bands(jnp.fft.fft2(x), H, W)
    real = jnp.real(bands)
    imag = jnp.imag(bands)

    hi_prec = lax.Precision.HIGHEST

    def grouped(v, w1, b1, w2, b2):
        h = jnp.einsum("cok,bckhw->bcohw", w1, v, precision=hi_prec) \
            + b1[None, :, :, :, None]
        h = jnp.where(h > 0, h, 0.1 * h)
        return jnp.einsum("cok,bckhw->bcohw", w2, h, precision=hi_prec) \
            + b2[None, :, :, :, None]

    rw = grouped(real, p["wr1"], p["br1"], p["wr2"], p["br2"])
    iw = grouped(imag, p["wi1"], p["bi1"], p["wi2"], p["bi2"])
    rs = jax.nn.softmax(rw + 0.25, axis=2)
    iss = jax.nn.softmax(iw + 0.25, axis=2)
    out_r = jnp.sum(real * rs - imag * iss, axis=2)
    out_i = jnp.sum(real * iss + imag * rs, axis=2)
    img = jnp.abs(jnp.fft.ifft2(lax.complex(out_r, out_i)))
    pool = x.reshape(B, C, Hh, 2, Wh, 2).mean(axis=(3, 5))
    y = img + pool
    z = jnp.einsum("co,bchw->bohw", p["w2x"], y, precision=hi_prec) \
        + p["b2x"][0][None, :, None, None]
    return jnp.where(z > 0, z, 0.1 * z)


# ----------------------------- params & main -------------------------------------

def init_params(key, C, base):
    ks = jax.random.split(key, 10)
    s = 0.1
    n = jax.random.normal
    return {
        # grouped 1x1 convs (groups=C, 4 in / 4 out per group) as (C, 4, 4)
        "wr1": n(ks[0], (C, 4, 4), jnp.float32) * s,
        "br1": n(ks[1], (C, 4, 1), jnp.float32) * s,
        "wr2": n(ks[2], (C, 4, 4), jnp.float32) * s,
        "br2": n(ks[3], (C, 4, 1), jnp.float32) * s,
        "wi1": n(ks[4], (C, 4, 4), jnp.float32) * s,
        "bi1": n(ks[5], (C, 4, 1), jnp.float32) * s,
        "wi2": n(ks[6], (C, 4, 4), jnp.float32) * s,
        "bi2": n(ks[7], (C, 4, 1), jnp.float32) * s,
        # channel2x 1x1 conv, stored as (C_in, base) so out = in @ w + bias
        "w2x": n(ks[8], (C, base), jnp.float32) * s,
        "b2x": n(ks[9], (1, base), jnp.float32) * s,
    }


if __name__ == "__main__":
    B, C, H, W = 2, 4, 16, 16          # x: NCHW, in_channel=4
    base_channel = 8

    key = jax.random.PRNGKey(0)
    kx, kp = jax.random.split(key)
    x = jax.random.normal(kx, (B, C, H, W), jnp.float32)
    params = init_params(kp, C, base_channel)

    out = jax.jit(fouri_down_forward)(x, params)
    out = jax.block_until_ready(out)
    assert out.shape == (B, base_channel, H // 2, W // 2), out.shape

    ref = jax.block_until_ready(jax.jit(reference_forward)(x, params))
    err = float(jnp.max(jnp.abs(out - ref)))
    # Tolerance covers the ~2^-12 relative error of the EUP approximate
    # reciprocal in the in-kernel softmax (scaled by the output magnitude).
    scale = max(1.0, float(jnp.max(jnp.abs(ref))))
    assert err < 2e-3 * scale, f"mismatch vs reference: {err} (scale {scale})"

    print("KERNEL_OK")
</pallas_src>

<mosaic_0001>
module attributes {stable_mosaic.version = 11 : i64} {
  func.func @fuse_kernel(%arg0: i32, %arg1: i32, %arg2: memref<2x1x4x8x8xf32, #tpu.memory_space<vmem>>, %arg3: memref<2x1x4x8x8xf32, #tpu.memory_space<vmem>>, %arg4: memref<4x80xf32, #tpu.memory_space<smem>>, %arg5: memref<2x1x8x8xf32, #tpu.memory_space<vmem>>, %arg6: memref<2x1x8x8xf32, #tpu.memory_space<vmem>>) attributes {dimension_semantics = [#tpu.dimension_semantics<parallel>, #tpu.dimension_semantics<parallel>], iteration_bounds = array<i64: 4, 1>, scalar_prefetch = 0 : i64, scratch_operands = 0 : i64, tpu.core_type = #tpu.core_type<tc>, window_params = [{transform_indices = @transform_0, window_bounds = array<i64: 2, 1, 4, 8, 8>}, {transform_indices = @transform_1, window_bounds = array<i64: 2, 1, 4, 8, 8>}, {transform_indices = @transform_2, window_bounds = array<i64: 4, 80>}, {transform_indices = @transform_3, window_bounds = array<i64: 2, 1, 8, 8>}, {transform_indices = @transform_4, window_bounds = array<i64: 2, 1, 8, 8>}]} {
    %c0 = arith.constant 0 : index
    %c0_0 = arith.constant 0 : index
    %c0_1 = arith.constant 0 : index
    %c0_2 = arith.constant 0 : index
    %c0_3 = arith.constant 0 : index
    %0 = vector.load %arg2[%c0, %c0_0, %c0_1, %c0_2, %c0_3] : memref<2x1x4x8x8xf32, #tpu.memory_space<vmem>>, vector<2x1x1x8x8xf32>
    %1 = vector.shape_cast %0 : vector<2x1x1x8x8xf32> to vector<2x8x8xf32>
    %c0_4 = arith.constant 0 : index
    %c0_5 = arith.constant 0 : index
    %c1 = arith.constant 1 : index
    %c0_6 = arith.constant 0 : index
    %c0_7 = arith.constant 0 : index
    %2 = vector.load %arg2[%c0_4, %c0_5, %c1, %c0_6, %c0_7] : memref<2x1x4x8x8xf32, #tpu.memory_space<vmem>>, vector<2x1x1x8x8xf32>
    %3 = vector.shape_cast %2 : vector<2x1x1x8x8xf32> to vector<2x8x8xf32>
    %c0_8 = arith.constant 0 : index
    %c0_9 = arith.constant 0 : index
    %c2 = arith.constant 2 : index
    %c0_10 = arith.constant 0 : index
    %c0_11 = arith.constant 0 : index
    %4 = vector.load %arg2[%c0_8, %c0_9, %c2, %c0_10, %c0_11] : memref<2x1x4x8x8xf32, #tpu.memory_space<vmem>>, vector<2x1x1x8x8xf32>
    %5 = vector.shape_cast %4 : vector<2x1x1x8x8xf32> to vector<2x8x8xf32>
    %c0_12 = arith.constant 0 : index
    %c0_13 = arith.constant 0 : index
    %c3 = arith.constant 3 : index
    %c0_14 = arith.constant 0 : index
    %c0_15 = arith.constant 0 : index
    %6 = vector.load %arg2[%c0_12, %c0_13, %c3, %c0_14, %c0_15] : memref<2x1x4x8x8xf32, #tpu.memory_space<vmem>>, vector<2x1x1x8x8xf32>
    %7 = vector.shape_cast %6 : vector<2x1x1x8x8xf32> to vector<2x8x8xf32>
    %c0_16 = arith.constant 0 : index
    %c0_17 = arith.constant 0 : index
    %c0_18 = arith.constant 0 : index
    %c0_19 = arith.constant 0 : index
    %c0_20 = arith.constant 0 : index
    %8 = vector.load %arg3[%c0_16, %c0_17, %c0_18, %c0_19, %c0_20] : memref<2x1x4x8x8xf32, #tpu.memory_space<vmem>>, vector<2x1x1x8x8xf32>
    %9 = vector.shape_cast %8 : vector<2x1x1x8x8xf32> to vector<2x8x8xf32>
    %c0_21 = arith.constant 0 : index
    %c0_22 = arith.constant 0 : index
    %c1_23 = arith.constant 1 : index
    %c0_24 = arith.constant 0 : index
    %c0_25 = arith.constant 0 : index
    %10 = vector.load %arg3[%c0_21, %c0_22, %c1_23, %c0_24, %c0_25] : memref<2x1x4x8x8xf32, #tpu.memory_space<vmem>>, vector<2x1x1x8x8xf32>
    %11 = vector.shape_cast %10 : vector<2x1x1x8x8xf32> to vector<2x8x8xf32>
    %c0_26 = arith.constant 0 : index
    %c0_27 = arith.constant 0 : index
    %c2_28 = arith.constant 2 : index
    %c0_29 = arith.constant 0 : index
    %c0_30 = arith.constant 0 : index
    %12 = vector.load %arg3[%c0_26, %c0_27, %c2_28, %c0_29, %c0_30] : memref<2x1x4x8x8xf32, #tpu.memory_space<vmem>>, vector<2x1x1x8x8xf32>
    %13 = vector.shape_cast %12 : vector<2x1x1x8x8xf32> to vector<2x8x8xf32>
    %c0_31 = arith.constant 0 : index
    %c0_32 = arith.constant 0 : index
    %c3_33 = arith.constant 3 : index
    %c0_34 = arith.constant 0 : index
    %c0_35 = arith.constant 0 : index
    %14 = vector.load %arg3[%c0_31, %c0_32, %c3_33, %c0_34, %c0_35] : memref<2x1x4x8x8xf32, #tpu.memory_space<vmem>>, vector<2x1x1x8x8xf32>
    %15 = vector.shape_cast %14 : vector<2x1x1x8x8xf32> to vector<2x8x8xf32>
    %16 = arith.index_cast %arg0 : i32 to index
    %c0_36 = arith.constant 0 : index
    %17 = memref.load %arg4[%16, %c0_36] : memref<4x80xf32, #tpu.memory_space<smem>>
    %18 = vector.broadcast %17 : f32 to vector<2x8x8xf32>
    %19 = arith.mulf %1, %18 : vector<2x8x8xf32>
    %20 = arith.index_cast %arg0 : i32 to index
    %c1_37 = arith.constant 1 : index
    %21 = memref.load %arg4[%20, %c1_37] : memref<4x80xf32, #tpu.memory_space<smem>>
    %22 = vector.broadcast %21 : f32 to vector<2x8x8xf32>
    %23 = arith.mulf %3, %22 : vector<2x8x8xf32>
    %24 = arith.addf %19, %23 : vector<2x8x8xf32>
    %25 = arith.index_cast %arg0 : i32 to index
    %c2_38 = arith.constant 2 : index
    %26 = memref.load %arg4[%25, %c2_38] : memref<4x80xf32, #tpu.memory_space<smem>>
    %27 = vector.broadcast %26 : f32 to vector<2x8x8xf32>
    %28 = arith.mulf %5, %27 : vector<2x8x8xf32>
    %29 = arith.addf %24, %28 : vector<2x8x8xf32>
    %30 = arith.index_cast %arg0 : i32 to index
    %c3_39 = arith.constant 3 : index
    %31 = memref.load %arg4[%30, %c3_39] : memref<4x80xf32, #tpu.memory_space<smem>>
    %32 = vector.broadcast %31 : f32 to vector<2x8x8xf32>
    %33 = arith.mulf %7, %32 : vector<2x8x8xf32>
    %34 = arith.addf %29, %33 : vector<2x8x8xf32>
    %35 = arith.index_cast %arg0 : i32 to index
    %c16 = arith.constant 16 : index
    %36 = memref.load %arg4[%35, %c16] : memref<4x80xf32, #tpu.memory_space<smem>>
    %37 = vector.broadcast %36 : f32 to vector<2x8x8xf32>
    %38 = arith.addf %34, %37 : vector<2x8x8xf32>
    %39 = arith.index_cast %arg0 : i32 to index
    %c4 = arith.constant 4 : index
    %40 = memref.load %arg4[%39, %c4] : memref<4x80xf32, #tpu.memory_space<smem>>
    %41 = vector.broadcast %40 : f32 to vector<2x8x8xf32>
    %42 = arith.mulf %1, %41 : vector<2x8x8xf32>
    %43 = arith.index_cast %arg0 : i32 to index
    %c5 = arith.constant 5 : index
    %44 = memref.load %arg4[%43, %c5] : memref<4x80xf32, #tpu.memory_space<smem>>
    %45 = vector.broadcast %44 : f32 to vector<2x8x8xf32>
    %46 = arith.mulf %3, %45 : vector<2x8x8xf32>
    %47 = arith.addf %42, %46 : vector<2x8x8xf32>
    %48 = arith.index_cast %arg0 : i32 to index
    %c6 = arith.constant 6 : index
    %49 = memref.load %arg4[%48, %c6] : memref<4x80xf32, #tpu.memory_space<smem>>
    %50 = vector.broadcast %49 : f32 to vector<2x8x8xf32>
    %51 = arith.mulf %5, %50 : vector<2x8x8xf32>
    %52 = arith.addf %47, %51 : vector<2x8x8xf32>
    %53 = arith.index_cast %arg0 : i32 to index
    %c7 = arith.constant 7 : index
    %54 = memref.load %arg4[%53, %c7] : memref<4x80xf32, #tpu.memory_space<smem>>
    %55 = vector.broadcast %54 : f32 to vector<2x8x8xf32>
    %56 = arith.mulf %7, %55 : vector<2x8x8xf32>
    %57 = arith.addf %52, %56 : vector<2x8x8xf32>
    %58 = arith.index_cast %arg0 : i32 to index
    %c17 = arith.constant 17 : index
    %59 = memref.load %arg4[%58, %c17] : memref<4x80xf32, #tpu.memory_space<smem>>
    %60 = vector.broadcast %59 : f32 to vector<2x8x8xf32>
    %61 = arith.addf %57, %60 : vector<2x8x8xf32>
    %62 = arith.index_cast %arg0 : i32 to index
    %c8 = arith.constant 8 : index
    %63 = memref.load %arg4[%62, %c8] : memref<4x80xf32, #tpu.memory_space<smem>>
    %64 = vector.broadcast %63 : f32 to vector<2x8x8xf32>
    %65 = arith.mulf %1, %64 : vector<2x8x8xf32>
    %66 = arith.index_cast %arg0 : i32 to index
    %c9 = arith.constant 9 : index
    %67 = memref.load %arg4[%66, %c9] : memref<4x80xf32, #tpu.memory_space<smem>>
    %68 = vector.broadcast %67 : f32 to vector<2x8x8xf32>
    %69 = arith.mulf %3, %68 : vector<2x8x8xf32>
    %70 = arith.addf %65, %69 : vector<2x8x8xf32>
    %71 = arith.index_cast %arg0 : i32 to index
    %c10 = arith.constant 10 : index
    %72 = memref.load %arg4[%71, %c10] : memref<4x80xf32, #tpu.memory_space<smem>>
    %73 = vector.broadcast %72 : f32 to vector<2x8x8xf32>
    %74 = arith.mulf %5, %73 : vector<2x8x8xf32>
    %75 = arith.addf %70, %74 : vector<2x8x8xf32>
    %76 = arith.index_cast %arg0 : i32 to index
    %c11 = arith.constant 11 : index
    %77 = memref.load %arg4[%76, %c11] : memref<4x80xf32, #tpu.memory_space<smem>>
    %78 = vector.broadcast %77 : f32 to vector<2x8x8xf32>
    %79 = arith.mulf %7, %78 : vector<2x8x8xf32>
    %80 = arith.addf %75, %79 : vector<2x8x8xf32>
    %81 = arith.index_cast %arg0 : i32 to index
    %c18 = arith.constant 18 : index
    %82 = memref.load %arg4[%81, %c18] : memref<4x80xf32, #tpu.memory_space<smem>>
    %83 = vector.broadcast %82 : f32 to vector<2x8x8xf32>
    %84 = arith.addf %80, %83 : vector<2x8x8xf32>
    %85 = arith.index_cast %arg0 : i32 to index
    %c12 = arith.constant 12 : index
    %86 = memref.load %arg4[%85, %c12] : memref<4x80xf32, #tpu.memory_space<smem>>
    %87 = vector.broadcast %86 : f32 to vector<2x8x8xf32>
    %88 = arith.mulf %1, %87 : vector<2x8x8xf32>
    %89 = arith.index_cast %arg0 : i32 to index
    %c13 = arith.constant 13 : index
    %90 = memref.load %arg4[%89, %c13] : memref<4x80xf32, #tpu.memory_space<smem>>
    %91 = vector.broadcast %90 : f32 to vector<2x8x8xf32>
    %92 = arith.mulf %3, %91 : vector<2x8x8xf32>
    %93 = arith.addf %88, %92 : vector<2x8x8xf32>
    %94 = arith.index_cast %arg0 : i32 to index
    %c14 = arith.constant 14 : index
    %95 = memref.load %arg4[%94, %c14] : memref<4x80xf32, #tpu.memory_space<smem>>
    %96 = vector.broadcast %95 : f32 to vector<2x8x8xf32>
    %97 = arith.mulf %5, %96 : vector<2x8x8xf32>
    %98 = arith.addf %93, %97 : vector<2x8x8xf32>
    %99 = arith.index_cast %arg0 : i32 to index
    %c15 = arith.constant 15 : index
    %100 = memref.load %arg4[%99, %c15] : memref<4x80xf32, #tpu.memory_space<smem>>
    %101 = vector.broadcast %100 : f32 to vector<2x8x8xf32>
    %102 = arith.mulf %7, %101 : vector<2x8x8xf32>
    %103 = arith.addf %98, %102 : vector<2x8x8xf32>
    %104 = arith.index_cast %arg0 : i32 to index
    %c19 = arith.constant 19 : index
    %105 = memref.load %arg4[%104, %c19] : memref<4x80xf32, #tpu.memory_space<smem>>
    %106 = vector.broadcast %105 : f32 to vector<2x8x8xf32>
    %107 = arith.addf %103, %106 : vector<2x8x8xf32>
    %cst = arith.constant 0.000000e+00 : f32
    %108 = vector.broadcast %cst : f32 to vector<2x8x8xf32>
    %109 = arith.cmpf ogt, %38, %108 : vector<2x8x8xf32>
    %cst_40 = arith.constant 1.000000e-01 : f32
    %110 = vector.broadcast %cst_40 : f32 to vector<2x8x8xf32>
    %111 = arith.mulf %110, %38 : vector<2x8x8xf32>
    %112 = arith.select %109, %38, %111 : vector<2x8x8xi1>, vector<2x8x8xf32>
    %cst_41 = arith.constant 0.000000e+00 : f32
    %113 = vector.broadcast %cst_41 : f32 to vector<2x8x8xf32>
    %114 = arith.cmpf ogt, %61, %113 : vector<2x8x8xf32>
    %cst_42 = arith.constant 1.000000e-01 : f32
    %115 = vector.broadcast %cst_42 : f32 to vector<2x8x8xf32>
    %116 = arith.mulf %115, %61 : vector<2x8x8xf32>
    %117 = arith.select %114, %61, %116 : vector<2x8x8xi1>, vector<2x8x8xf32>
    %cst_43 = arith.constant 0.000000e+00 : f32
    %118 = vector.broadcast %cst_43 : f32 to vector<2x8x8xf32>
    %119 = arith.cmpf ogt, %84, %118 : vector<2x8x8xf32>
    %cst_44 = arith.constant 1.000000e-01 : f32
    %120 = vector.broadcast %cst_44 : f32 to vector<2x8x8xf32>
    %121 = arith.mulf %120, %84 : vector<2x8x8xf32>
    %122 = arith.select %119, %84, %121 : vector<2x8x8xi1>, vector<2x8x8xf32>
    %cst_45 = arith.constant 0.000000e+00 : f32
    %123 = vector.broadcast %cst_45 : f32 to vector<2x8x8xf32>
    %124 = arith.cmpf ogt, %107, %123 : vector<2x8x8xf32>
    %cst_46 = arith.constant 1.000000e-01 : f32
    %125 = vector.broadcast %cst_46 : f32 to vector<2x8x8xf32>
    %126 = arith.mulf %125, %107 : vector<2x8x8xf32>
    %127 = arith.select %124, %107, %126 : vector<2x8x8xi1>, vector<2x8x8xf32>
    %128 = arith.index_cast %arg0 : i32 to index
    %c20 = arith.constant 20 : index
    %129 = memref.load %arg4[%128, %c20] : memref<4x80xf32, #tpu.memory_space<smem>>
    %130 = vector.broadcast %129 : f32 to vector<2x8x8xf32>
    %131 = arith.mulf %112, %130 : vector<2x8x8xf32>
    %132 = arith.index_cast %arg0 : i32 to index
    %c21 = arith.constant 21 : index
    %133 = memref.load %arg4[%132, %c21] : memref<4x80xf32, #tpu.memory_space<smem>>
    %134 = vector.broadcast %133 : f32 to vector<2x8x8xf32>
    %135 = arith.mulf %117, %134 : vector<2x8x8xf32>
    %136 = arith.addf %131, %135 : vector<2x8x8xf32>
    %137 = arith.index_cast %arg0 : i32 to index
    %c22 = arith.constant 22 : index
    %138 = memref.load %arg4[%137, %c22] : memref<4x80xf32, #tpu.memory_space<smem>>
    %139 = vector.broadcast %138 : f32 to vector<2x8x8xf32>
    %140 = arith.mulf %122, %139 : vector<2x8x8xf32>
    %141 = arith.addf %136, %140 : vector<2x8x8xf32>
    %142 = arith.index_cast %arg0 : i32 to index
    %c23 = arith.constant 23 : index
    %143 = memref.load %arg4[%142, %c23] : memref<4x80xf32, #tpu.memory_space<smem>>
    %144 = vector.broadcast %143 : f32 to vector<2x8x8xf32>
    %145 = arith.mulf %127, %144 : vector<2x8x8xf32>
    %146 = arith.addf %141, %145 : vector<2x8x8xf32>
    %147 = arith.index_cast %arg0 : i32 to index
    %c36 = arith.constant 36 : index
    %148 = memref.load %arg4[%147, %c36] : memref<4x80xf32, #tpu.memory_space<smem>>
    %149 = vector.broadcast %148 : f32 to vector<2x8x8xf32>
    %150 = arith.addf %146, %149 : vector<2x8x8xf32>
    %151 = arith.index_cast %arg0 : i32 to index
    %c24 = arith.constant 24 : index
    %152 = memref.load %arg4[%151, %c24] : memref<4x80xf32, #tpu.memory_space<smem>>
    %153 = vector.broadcast %152 : f32 to vector<2x8x8xf32>
    %154 = arith.mulf %112, %153 : vector<2x8x8xf32>
    %155 = arith.index_cast %arg0 : i32 to index
    %c25 = arith.constant 25 : index
    %156 = memref.load %arg4[%155, %c25] : memref<4x80xf32, #tpu.memory_space<smem>>
    %157 = vector.broadcast %156 : f32 to vector<2x8x8xf32>
    %158 = arith.mulf %117, %157 : vector<2x8x8xf32>
    %159 = arith.addf %154, %158 : vector<2x8x8xf32>
    %160 = arith.index_cast %arg0 : i32 to index
    %c26 = arith.constant 26 : index
    %161 = memref.load %arg4[%160, %c26] : memref<4x80xf32, #tpu.memory_space<smem>>
    %162 = vector.broadcast %161 : f32 to vector<2x8x8xf32>
    %163 = arith.mulf %122, %162 : vector<2x8x8xf32>
    %164 = arith.addf %159, %163 : vector<2x8x8xf32>
    %165 = arith.index_cast %arg0 : i32 to index
    %c27 = arith.constant 27 : index
    %166 = memref.load %arg4[%165, %c27] : memref<4x80xf32, #tpu.memory_space<smem>>
    %167 = vector.broadcast %166 : f32 to vector<2x8x8xf32>
    %168 = arith.mulf %127, %167 : vector<2x8x8xf32>
    %169 = arith.addf %164, %168 : vector<2x8x8xf32>
    %170 = arith.index_cast %arg0 : i32 to index
    %c37 = arith.constant 37 : index
    %171 = memref.load %arg4[%170, %c37] : memref<4x80xf32, #tpu.memory_space<smem>>
    %172 = vector.broadcast %171 : f32 to vector<2x8x8xf32>
    %173 = arith.addf %169, %172 : vector<2x8x8xf32>
    %174 = arith.index_cast %arg0 : i32 to index
    %c28 = arith.constant 28 : index
    %175 = memref.load %arg4[%174, %c28] : memref<4x80xf32, #tpu.memory_space<smem>>
    %176 = vector.broadcast %175 : f32 to vector<2x8x8xf32>
    %177 = arith.mulf %112, %176 : vector<2x8x8xf32>
    %178 = arith.index_cast %arg0 : i32 to index
    %c29 = arith.constant 29 : index
    %179 = memref.load %arg4[%178, %c29] : memref<4x80xf32, #tpu.memory_space<smem>>
    %180 = vector.broadcast %179 : f32 to vector<2x8x8xf32>
    %181 = arith.mulf %117, %180 : vector<2x8x8xf32>
    %182 = arith.addf %177, %181 : vector<2x8x8xf32>
    %183 = arith.index_cast %arg0 : i32 to index
    %c30 = arith.constant 30 : index
    %184 = memref.load %arg4[%183, %c30] : memref<4x80xf32, #tpu.memory_space<smem>>
    %185 = vector.broadcast %184 : f32 to vector<2x8x8xf32>
    %186 = arith.mulf %122, %185 : vector<2x8x8xf32>
    %187 = arith.addf %182, %186 : vector<2x8x8xf32>
    %188 = arith.index_cast %arg0 : i32 to index
    %c31 = arith.constant 31 : index
    %189 = memref.load %arg4[%188, %c31] : memref<4x80xf32, #tpu.memory_space<smem>>
    %190 = vector.broadcast %189 : f32 to vector<2x8x8xf32>
    %191 = arith.mulf %127, %190 : vector<2x8x8xf32>
    %192 = arith.addf %187, %191 : vector<2x8x8xf32>
    %193 = arith.index_cast %arg0 : i32 to index
    %c38 = arith.constant 38 : index
    %194 = memref.load %arg4[%193, %c38] : memref<4x80xf32, #tpu.memory_space<smem>>
    %195 = vector.broadcast %194 : f32 to vector<2x8x8xf32>
    %196 = arith.addf %192, %195 : vector<2x8x8xf32>
    %197 = arith.index_cast %arg0 : i32 to index
    %c32 = arith.constant 32 : index
    %198 = memref.load %arg4[%197, %c32] : memref<4x80xf32, #tpu.memory_space<smem>>
    %199 = vector.broadcast %198 : f32 to vector<2x8x8xf32>
    %200 = arith.mulf %112, %199 : vector<2x8x8xf32>
    %201 = arith.index_cast %arg0 : i32 to index
    %c33 = arith.constant 33 : index
    %202 = memref.load %arg4[%201, %c33] : memref<4x80xf32, #tpu.memory_space<smem>>
    %203 = vector.broadcast %202 : f32 to vector<2x8x8xf32>
    %204 = arith.mulf %117, %203 : vector<2x8x8xf32>
    %205 = arith.addf %200, %204 : vector<2x8x8xf32>
    %206 = arith.index_cast %arg0 : i32 to index
    %c34 = arith.constant 34 : index
    %207 = memref.load %arg4[%206, %c34] : memref<4x80xf32, #tpu.memory_space<smem>>
    %208 = vector.broadcast %207 : f32 to vector<2x8x8xf32>
    %209 = arith.mulf %122, %208 : vector<2x8x8xf32>
    %210 = arith.addf %205, %209 : vector<2x8x8xf32>
    %211 = arith.index_cast %arg0 : i32 to index
    %c35 = arith.constant 35 : index
    %212 = memref.load %arg4[%211, %c35] : memref<4x80xf32, #tpu.memory_space<smem>>
    %213 = vector.broadcast %212 : f32 to vector<2x8x8xf32>
    %214 = arith.mulf %127, %213 : vector<2x8x8xf32>
    %215 = arith.addf %210, %214 : vector<2x8x8xf32>
    %216 = arith.index_cast %arg0 : i32 to index
    %c39 = arith.constant 39 : index
    %217 = memref.load %arg4[%216, %c39] : memref<4x80xf32, #tpu.memory_space<smem>>
    %218 = vector.broadcast %217 : f32 to vector<2x8x8xf32>
    %219 = arith.addf %215, %218 : vector<2x8x8xf32>
    %220 = arith.maximumf %150, %173 : vector<2x8x8xf32>
    %221 = arith.maximumf %196, %219 : vector<2x8x8xf32>
    %222 = arith.maximumf %220, %221 : vector<2x8x8xf32>
    %223 = arith.subf %150, %222 : vector<2x8x8xf32>
    %224 = math.exp %223 : vector<2x8x8xf32>
    %225 = arith.subf %173, %222 : vector<2x8x8xf32>
    %226 = math.exp %225 : vector<2x8x8xf32>
    %227 = arith.subf %196, %222 : vector<2x8x8xf32>
    %228 = math.exp %227 : vector<2x8x8xf32>
    %229 = arith.subf %219, %222 : vector<2x8x8xf32>
    %230 = math.exp %229 : vector<2x8x8xf32>
    %231 = arith.addf %224, %226 : vector<2x8x8xf32>
    %232 = arith.addf %231, %228 : vector<2x8x8xf32>
    %233 = arith.addf %232, %230 : vector<2x8x8xf32>
    %234 = tpu.reciprocal %233 {approx = true} : vector<2x8x8xf32> -> vector<2x8x8xf32>
    %235 = arith.mulf %224, %234 : vector<2x8x8xf32>
    %236 = arith.mulf %226, %234 : vector<2x8x8xf32>
    %237 = arith.mulf %228, %234 : vector<2x8x8xf32>
    %238 = arith.mulf %230, %234 : vector<2x8x8xf32>
    %239 = arith.index_cast %arg0 : i32 to index
    %c40 = arith.constant 40 : index
    %240 = memref.load %arg4[%239, %c40] : memref<4x80xf32, #tpu.memory_space<smem>>
    %241 = vector.broadcast %240 : f32 to vector<2x8x8xf32>
    %242 = arith.mulf %9, %241 : vector<2x8x8xf32>
    %243 = arith.index_cast %arg0 : i32 to index
    %c41 = arith.constant 41 : index
    %244 = memref.load %arg4[%243, %c41] : memref<4x80xf32, #tpu.memory_space<smem>>
    %245 = vector.broadcast %244 : f32 to vector<2x8x8xf32>
    %246 = arith.mulf %11, %245 : vector<2x8x8xf32>
    %247 = arith.addf %242, %246 : vector<2x8x8xf32>
    %248 = arith.index_cast %arg0 : i32 to index
    %c42 = arith.constant 42 : index
    %249 = memref.load %arg4[%248, %c42] : memref<4x80xf32, #tpu.memory_space<smem>>
    %250 = vector.broadcast %249 : f32 to vector<2x8x8xf32>
    %251 = arith.mulf %13, %250 : vector<2x8x8xf32>
    %252 = arith.addf %247, %251 : vector<2x8x8xf32>
    %253 = arith.index_cast %arg0 : i32 to index
    %c43 = arith.constant 43 : index
    %254 = memref.load %arg4[%253, %c43] : memref<4x80xf32, #tpu.memory_space<smem>>
    %255 = vector.broadcast %254 : f32 to vector<2x8x8xf32>
    %256 = arith.mulf %15, %255 : vector<2x8x8xf32>
    %257 = arith.addf %252, %256 : vector<2x8x8xf32>
    %258 = arith.index_cast %arg0 : i32 to index
    %c56 = arith.constant 56 : index
    %259 = memref.load %arg4[%258, %c56] : memref<4x80xf32, #tpu.memory_space<smem>>
    %260 = vector.broadcast %259 : f32 to vector<2x8x8xf32>
    %261 = arith.addf %257, %260 : vector<2x8x8xf32>
    %262 = arith.index_cast %arg0 : i32 to index
    %c44 = arith.constant 44 : index
    %263 = memref.load %arg4[%262, %c44] : memref<4x80xf32, #tpu.memory_space<smem>>
    %264 = vector.broadcast %263 : f32 to vector<2x8x8xf32>
    %265 = arith.mulf %9, %264 : vector<2x8x8xf32>
    %266 = arith.index_cast %arg0 : i32 to index
    %c45 = arith.constant 45 : index
    %267 = memref.load %arg4[%266, %c45] : memref<4x80xf32, #tpu.memory_space<smem>>
    %268 = vector.broadcast %267 : f32 to vector<2x8x8xf32>
    %269 = arith.mulf %11, %268 : vector<2x8x8xf32>
    %270 = arith.addf %265, %269 : vector<2x8x8xf32>
    %271 = arith.index_cast %arg0 : i32 to index
    %c46 = arith.constant 46 : index
    %272 = memref.load %arg4[%271, %c46] : memref<4x80xf32, #tpu.memory_space<smem>>
    %273 = vector.broadcast %272 : f32 to vector<2x8x8xf32>
    %274 = arith.mulf %13, %273 : vector<2x8x8xf32>
    %275 = arith.addf %270, %274 : vector<2x8x8xf32>
    %276 = arith.index_cast %arg0 : i32 to index
    %c47 = arith.constant 47 : index
    %277 = memref.load %arg4[%276, %c47] : memref<4x80xf32, #tpu.memory_space<smem>>
    %278 = vector.broadcast %277 : f32 to vector<2x8x8xf32>
    %279 = arith.mulf %15, %278 : vector<2x8x8xf32>
    %280 = arith.addf %275, %279 : vector<2x8x8xf32>
    %281 = arith.index_cast %arg0 : i32 to index
    %c57 = arith.constant 57 : index
    %282 = memref.load %arg4[%281, %c57] : memref<4x80xf32, #tpu.memory_space<smem>>
    %283 = vector.broadcast %282 : f32 to vector<2x8x8xf32>
    %284 = arith.addf %280, %283 : vector<2x8x8xf32>
    %285 = arith.index_cast %arg0 : i32 to index
    %c48 = arith.constant 48 : index
    %286 = memref.load %arg4[%285, %c48] : memref<4x80xf32, #tpu.memory_space<smem>>
    %287 = vector.broadcast %286 : f32 to vector<2x8x8xf32>
    %288 = arith.mulf %9, %287 : vector<2x8x8xf32>
    %289 = arith.index_cast %arg0 : i32 to index
    %c49 = arith.constant 49 : index
    %290 = memref.load %arg4[%289, %c49] : memref<4x80xf32, #tpu.memory_space<smem>>
    %291 = vector.broadcast %290 : f32 to vector<2x8x8xf32>
    %292 = arith.mulf %11, %291 : vector<2x8x8xf32>
    %293 = arith.addf %288, %292 : vector<2x8x8xf32>
    %294 = arith.index_cast %arg0 : i32 to index
    %c50 = arith.constant 50 : index
    %295 = memref.load %arg4[%294, %c50] : memref<4x80xf32, #tpu.memory_space<smem>>
    %296 = vector.broadcast %295 : f32 to vector<2x8x8xf32>
    %297 = arith.mulf %13, %296 : vector<2x8x8xf32>
    %298 = arith.addf %293, %297 : vector<2x8x8xf32>
    %299 = arith.index_cast %arg0 : i32 to index
    %c51 = arith.constant 51 : index
    %300 = memref.load %arg4[%299, %c51] : memref<4x80xf32, #tpu.memory_space<smem>>
    %301 = vector.broadcast %300 : f32 to vector<2x8x8xf32>
    %302 = arith.mulf %15, %301 : vector<2x8x8xf32>
    %303 = arith.addf %298, %302 : vector<2x8x8xf32>
    %304 = arith.index_cast %arg0 : i32 to index
    %c58 = arith.constant 58 : index
    %305 = memref.load %arg4[%304, %c58] : memref<4x80xf32, #tpu.memory_space<smem>>
    %306 = vector.broadcast %305 : f32 to vector<2x8x8xf32>
    %307 = arith.addf %303, %306 : vector<2x8x8xf32>
    %308 = arith.index_cast %arg0 : i32 to index
    %c52 = arith.constant 52 : index
    %309 = memref.load %arg4[%308, %c52] : memref<4x80xf32, #tpu.memory_space<smem>>
    %310 = vector.broadcast %309 : f32 to vector<2x8x8xf32>
    %311 = arith.mulf %9, %310 : vector<2x8x8xf32>
    %312 = arith.index_cast %arg0 : i32 to index
    %c53 = arith.constant 53 : index
    %313 = memref.load %arg4[%312, %c53] : memref<4x80xf32, #tpu.memory_space<smem>>
    %314 = vector.broadcast %313 : f32 to vector<2x8x8xf32>
    %315 = arith.mulf %11, %314 : vector<2x8x8xf32>
    %316 = arith.addf %311, %315 : vector<2x8x8xf32>
    %317 = arith.index_cast %arg0 : i32 to index
    %c54 = arith.constant 54 : index
    %318 = memref.load %arg4[%317, %c54] : memref<4x80xf32, #tpu.memory_space<smem>>
    %319 = vector.broadcast %318 : f32 to vector<2x8x8xf32>
    %320 = arith.mulf %13, %319 : vector<2x8x8xf32>
    %321 = arith.addf %316, %320 : vector<2x8x8xf32>
    %322 = arith.index_cast %arg0 : i32 to index
    %c55 = arith.constant 55 : index
    %323 = memref.load %arg4[%322, %c55] : memref<4x80xf32, #tpu.memory_space<smem>>
    %324 = vector.broadcast %323 : f32 to vector<2x8x8xf32>
    %325 = arith.mulf %15, %324 : vector<2x8x8xf32>
    %326 = arith.addf %321, %325 : vector<2x8x8xf32>
    %327 = arith.index_cast %arg0 : i32 to index
    %c59 = arith.constant 59 : index
    %328 = memref.load %arg4[%327, %c59] : memref<4x80xf32, #tpu.memory_space<smem>>
    %329 = vector.broadcast %328 : f32 to vector<2x8x8xf32>
    %330 = arith.addf %326, %329 : vector<2x8x8xf32>
    %cst_47 = arith.constant 0.000000e+00 : f32
    %331 = vector.broadcast %cst_47 : f32 to vector<2x8x8xf32>
    %332 = arith.cmpf ogt, %261, %331 : vector<2x8x8xf32>
    %cst_48 = arith.constant 1.000000e-01 : f32
    %333 = vector.broadcast %cst_48 : f32 to vector<2x8x8xf32>
    %334 = arith.mulf %333, %261 : vector<2x8x8xf32>
    %335 = arith.select %332, %261, %334 : vector<2x8x8xi1>, vector<2x8x8xf32>
    %cst_49 = arith.constant 0.000000e+00 : f32
    %336 = vector.broadcast %cst_49 : f32 to vector<2x8x8xf32>
    %337 = arith.cmpf ogt, %284, %336 : vector<2x8x8xf32>
    %cst_50 = arith.constant 1.000000e-01 : f32
    %338 = vector.broadcast %cst_50 : f32 to vector<2x8x8xf32>
    %339 = arith.mulf %338, %284 : vector<2x8x8xf32>
    %340 = arith.select %337, %284, %339 : vector<2x8x8xi1>, vector<2x8x8xf32>
    %cst_51 = arith.constant 0.000000e+00 : f32
    %341 = vector.broadcast %cst_51 : f32 to vector<2x8x8xf32>
    %342 = arith.cmpf ogt, %307, %341 : vector<2x8x8xf32>
    %cst_52 = arith.constant 1.000000e-01 : f32
    %343 = vector.broadcast %cst_52 : f32 to vector<2x8x8xf32>
    %344 = arith.mulf %343, %307 : vector<2x8x8xf32>
    %345 = arith.select %342, %307, %344 : vector<2x8x8xi1>, vector<2x8x8xf32>
    %cst_53 = arith.constant 0.000000e+00 : f32
    %346 = vector.broadcast %cst_53 : f32 to vector<2x8x8xf32>
    %347 = arith.cmpf ogt, %330, %346 : vector<2x8x8xf32>
    %cst_54 = arith.constant 1.000000e-01 : f32
    %348 = vector.broadcast %cst_54 : f32 to vector<2x8x8xf32>
    %349 = arith.mulf %348, %330 : vector<2x8x8xf32>
    %350 = arith.select %347, %330, %349 : vector<2x8x8xi1>, vector<2x8x8xf32>
    %351 = arith.index_cast %arg0 : i32 to index
    %c60 = arith.constant 60 : index
    %352 = memref.load %arg4[%351, %c60] : memref<4x80xf32, #tpu.memory_space<smem>>
    %353 = vector.broadcast %352 : f32 to vector<2x8x8xf32>
    %354 = arith.mulf %335, %353 : vector<2x8x8xf32>
    %355 = arith.index_cast %arg0 : i32 to index
    %c61 = arith.constant 61 : index
    %356 = memref.load %arg4[%355, %c61] : memref<4x80xf32, #tpu.memory_space<smem>>
    %357 = vector.broadcast %356 : f32 to vector<2x8x8xf32>
    %358 = arith.mulf %340, %357 : vector<2x8x8xf32>
    %359 = arith.addf %354, %358 : vector<2x8x8xf32>
    %360 = arith.index_cast %arg0 : i32 to index
    %c62 = arith.constant 62 : index
    %361 = memref.load %arg4[%360, %c62] : memref<4x80xf32, #tpu.memory_space<smem>>
    %362 = vector.broadcast %361 : f32 to vector<2x8x8xf32>
    %363 = arith.mulf %345, %362 : vector<2x8x8xf32>
    %364 = arith.addf %359, %363 : vector<2x8x8xf32>
    %365 = arith.index_cast %arg0 : i32 to index
    %c63 = arith.constant 63 : index
    %366 = memref.load %arg4[%365, %c63] : memref<4x80xf32, #tpu.memory_space<smem>>
    %367 = vector.broadcast %366 : f32 to vector<2x8x8xf32>
    %368 = arith.mulf %350, %367 : vector<2x8x8xf32>
    %369 = arith.addf %364, %368 : vector<2x8x8xf32>
    %370 = arith.index_cast %arg0 : i32 to index
    %c76 = arith.constant 76 : index
    %371 = memref.load %arg4[%370, %c76] : memref<4x80xf32, #tpu.memory_space<smem>>
    %372 = vector.broadcast %371 : f32 to vector<2x8x8xf32>
    %373 = arith.addf %369, %372 : vector<2x8x8xf32>
    %374 = arith.index_cast %arg0 : i32 to index
    %c64 = arith.constant 64 : index
    %375 = memref.load %arg4[%374, %c64] : memref<4x80xf32, #tpu.memory_space<smem>>
    %376 = vector.broadcast %375 : f32 to vector<2x8x8xf32>
    %377 = arith.mulf %335, %376 : vector<2x8x8xf32>
    %378 = arith.index_cast %arg0 : i32 to index
    %c65 = arith.constant 65 : index
    %379 = memref.load %arg4[%378, %c65] : memref<4x80xf32, #tpu.memory_space<smem>>
    %380 = vector.broadcast %379 : f32 to vector<2x8x8xf32>
    %381 = arith.mulf %340, %380 : vector<2x8x8xf32>
    %382 = arith.addf %377, %381 : vector<2x8x8xf32>
    %383 = arith.index_cast %arg0 : i32 to index
    %c66 = arith.constant 66 : index
    %384 = memref.load %arg4[%383, %c66] : memref<4x80xf32, #tpu.memory_space<smem>>
    %385 = vector.broadcast %384 : f32 to vector<2x8x8xf32>
    %386 = arith.mulf %345, %385 : vector<2x8x8xf32>
    %387 = arith.addf %382, %386 : vector<2x8x8xf32>
    %388 = arith.index_cast %arg0 : i32 to index
    %c67 = arith.constant 67 : index
    %389 = memref.load %arg4[%388, %c67] : memref<4x80xf32, #tpu.memory_space<smem>>
    %390 = vector.broadcast %389 : f32 to vector<2x8x8xf32>
    %391 = arith.mulf %350, %390 : vector<2x8x8xf32>
    %392 = arith.addf %387, %391 : vector<2x8x8xf32>
    %393 = arith.index_cast %arg0 : i32 to index
    %c77 = arith.constant 77 : index
    %394 = memref.load %arg4[%393, %c77] : memref<4x80xf32, #tpu.memory_space<smem>>
    %395 = vector.broadcast %394 : f32 to vector<2x8x8xf32>
    %396 = arith.addf %392, %395 : vector<2x8x8xf32>
    %397 = arith.index_cast %arg0 : i32 to index
    %c68 = arith.constant 68 : index
    %398 = memref.load %arg4[%397, %c68] : memref<4x80xf32, #tpu.memory_space<smem>>
    %399 = vector.broadcast %398 : f32 to vector<2x8x8xf32>
    %400 = arith.mulf %335, %399 : vector<2x8x8xf32>
    %401 = arith.index_cast %arg0 : i32 to index
    %c69 = arith.constant 69 : index
    %402 = memref.load %arg4[%401, %c69] : memref<4x80xf32, #tpu.memory_space<smem>>
    %403 = vector.broadcast %402 : f32 to vector<2x8x8xf32>
    %404 = arith.mulf %340, %403 : vector<2x8x8xf32>
    %405 = arith.addf %400, %404 : vector<2x8x8xf32>
    %406 = arith.index_cast %arg0 : i32 to index
    %c70 = arith.constant 70 : index
    %407 = memref.load %arg4[%406, %c70] : memref<4x80xf32, #tpu.memory_space<smem>>
    %408 = vector.broadcast %407 : f32 to vector<2x8x8xf32>
    %409 = arith.mulf %345, %408 : vector<2x8x8xf32>
    %410 = arith.addf %405, %409 : vector<2x8x8xf32>
    %411 = arith.index_cast %arg0 : i32 to index
    %c71 = arith.constant 71 : index
    %412 = memref.load %arg4[%411, %c71] : memref<4x80xf32, #tpu.memory_space<smem>>
    %413 = vector.broadcast %412 : f32 to vector<2x8x8xf32>
    %414 = arith.mulf %350, %413 : vector<2x8x8xf32>
    %415 = arith.addf %410, %414 : vector<2x8x8xf32>
    %416 = arith.index_cast %arg0 : i32 to index
    %c78 = arith.constant 78 : index
    %417 = memref.load %arg4[%416, %c78] : memref<4x80xf32, #tpu.memory_space<smem>>
    %418 = vector.broadcast %417 : f32 to vector<2x8x8xf32>
    %419 = arith.addf %415, %418 : vector<2x8x8xf32>
    %420 = arith.index_cast %arg0 : i32 to index
    %c72 = arith.constant 72 : index
    %421 = memref.load %arg4[%420, %c72] : memref<4x80xf32, #tpu.memory_space<smem>>
    %422 = vector.broadcast %421 : f32 to vector<2x8x8xf32>
    %423 = arith.mulf %335, %422 : vector<2x8x8xf32>
    %424 = arith.index_cast %arg0 : i32 to index
    %c73 = arith.constant 73 : index
    %425 = memref.load %arg4[%424, %c73] : memref<4x80xf32, #tpu.memory_space<smem>>
    %426 = vector.broadcast %425 : f32 to vector<2x8x8xf32>
    %427 = arith.mulf %340, %426 : vector<2x8x8xf32>
    %428 = arith.addf %423, %427 : vector<2x8x8xf32>
    %429 = arith.index_cast %arg0 : i32 to index
    %c74 = arith.constant 74 : index
    %430 = memref.load %arg4[%429, %c74] : memref<4x80xf32, #tpu.memory_space<smem>>
    %431 = vector.broadcast %430 : f32 to vector<2x8x8xf32>
    %432 = arith.mulf %345, %431 : vector<2x8x8xf32>
    %433 = arith.addf %428, %432 : vector<2x8x8xf32>
    %434 = arith.index_cast %arg0 : i32 to index
    %c75 = arith.constant 75 : index
    %435 = memref.load %arg4[%434, %c75] : memref<4x80xf32, #tpu.memory_space<smem>>
    %436 = vector.broadcast %435 : f32 to vector<2x8x8xf32>
    %437 = arith.mulf %350, %436 : vector<2x8x8xf32>
    %438 = arith.addf %433, %437 : vector<2x8x8xf32>
    %439 = arith.index_cast %arg0 : i32 to index
    %c79 = arith.constant 79 : index
    %440 = memref.load %arg4[%439, %c79] : memref<4x80xf32, #tpu.memory_space<smem>>
    %441 = vector.broadcast %440 : f32 to vector<2x8x8xf32>
    %442 = arith.addf %438, %441 : vector<2x8x8xf32>
    %443 = arith.maximumf %373, %396 : vector<2x8x8xf32>
    %444 = arith.maximumf %419, %442 : vector<2x8x8xf32>
    %445 = arith.maximumf %443, %444 : vector<2x8x8xf32>
    %446 = arith.subf %373, %445 : vector<2x8x8xf32>
    %447 = math.exp %446 : vector<2x8x8xf32>
    %448 = arith.subf %396, %445 : vector<2x8x8xf32>
    %449 = math.exp %448 : vector<2x8x8xf32>
    %450 = arith.subf %419, %445 : vector<2x8x8xf32>
    %451 = math.exp %450 : vector<2x8x8xf32>
    %452 = arith.subf %442, %445 : vector<2x8x8xf32>
    %453 = math.exp %452 : vector<2x8x8xf32>
    %454 = arith.addf %447, %449 : vector<2x8x8xf32>
    %455 = arith.addf %454, %451 : vector<2x8x8xf32>
    %456 = arith.addf %455, %453 : vector<2x8x8xf32>
    %457 = tpu.reciprocal %456 {approx = true} : vector<2x8x8xf32> -> vector<2x8x8xf32>
    %458 = arith.mulf %447, %457 : vector<2x8x8xf32>
    %459 = arith.mulf %449, %457 : vector<2x8x8xf32>
    %460 = arith.mulf %451, %457 : vector<2x8x8xf32>
    %461 = arith.mulf %453, %457 : vector<2x8x8xf32>
    %462 = arith.mulf %1, %235 : vector<2x8x8xf32>
    %463 = arith.mulf %9, %458 : vector<2x8x8xf32>
    %464 = arith.subf %462, %463 : vector<2x8x8xf32>
    %465 = arith.mulf %1, %458 : vector<2x8x8xf32>
    %466 = arith.mulf %9, %235 : vector<2x8x8xf32>
    %467 = arith.addf %465, %466 : vector<2x8x8xf32>
    %468 = arith.mulf %3, %236 : vector<2x8x8xf32>
    %469 = arith.addf %464, %468 : vector<2x8x8xf32>
    %470 = arith.mulf %11, %459 : vector<2x8x8xf32>
    %471 = arith.subf %469, %470 : vector<2x8x8xf32>
    %472 = arith.mulf %3, %459 : vector<2x8x8xf32>
    %473 = arith.addf %467, %472 : vector<2x8x8xf32>
    %474 = arith.mulf %11, %236 : vector<2x8x8xf32>
    %475 = arith.addf %473, %474 : vector<2x8x8xf32>
    %476 = arith.mulf %5, %237 : vector<2x8x8xf32>
    %477 = arith.addf %471, %476 : vector<2x8x8xf32>
    %478 = arith.mulf %13, %460 : vector<2x8x8xf32>
    %479 = arith.subf %477, %478 : vector<2x8x8xf32>
    %480 = arith.mulf %5, %460 : vector<2x8x8xf32>
    %481 = arith.addf %475, %480 : vector<2x8x8xf32>
    %482 = arith.mulf %13, %237 : vector<2x8x8xf32>
    %483 = arith.addf %481, %482 : vector<2x8x8xf32>
    %484 = arith.mulf %7, %238 : vector<2x8x8xf32>
    %485 = arith.addf %479, %484 : vector<2x8x8xf32>
    %486 = arith.mulf %15, %461 : vector<2x8x8xf32>
    %487 = arith.subf %485, %486 : vector<2x8x8xf32>
    %488 = arith.mulf %7, %461 : vector<2x8x8xf32>
    %489 = arith.addf %483, %488 : vector<2x8x8xf32>
    %490 = arith.mulf %15, %238 : vector<2x8x8xf32>
    %491 = arith.addf %489, %490 : vector<2x8x8xf32>
    %c0_55 = arith.constant 0 : index
    %c0_56 = arith.constant 0 : index
    %c0_57 = arith.constant 0 : index
    %c0_58 = arith.constant 0 : index
    %492 = vector.load %arg5[%c0_55, %c0_56, %c0_57, %c0_58] : memref<2x1x8x8xf32, #tpu.memory_space<vmem>>, vector<2x1x8x8xf32>
    %493 = vector.shape_cast %492 : vector<2x1x8x8xf32> to vector<2x8x8xf32>
    %494 = vector.shape_cast %487 : vector<2x8x8xf32> to vector<2x1x8x8xf32>
    tpu.vector_store %arg5[%c0_55, %c0_56, %c0_57, %c0_58], %494 {strides = array<i32>} : memref<2x1x8x8xf32, #tpu.memory_space<vmem>>, vector<2x1x8x8xf32>,
    %c0_59 = arith.constant 0 : index
    %c0_60 = arith.constant 0 : index
    %c0_61 = arith.constant 0 : index
    %c0_62 = arith.constant 0 : index
    %495 = vector.load %arg6[%c0_59, %c0_60, %c0_61, %c0_62] : memref<2x1x8x8xf32, #tpu.memory_space<vmem>>, vector<2x1x8x8xf32>
    %496 = vector.shape_cast %495 : vector<2x1x8x8xf32> to vector<2x8x8xf32>
    %497 = vector.shape_cast %491 : vector<2x8x8xf32> to vector<2x1x8x8xf32>
    tpu.vector_store %arg6[%c0_59, %c0_60, %c0_61, %c0_62], %497 {strides = array<i32>} : memref<2x1x8x8xf32, #tpu.memory_space<vmem>>, vector<2x1x8x8xf32>,
    return
  }
  func.func @transform_0(%arg0: i32, %arg1: i32) -> (i32, i32, i32, i32, i32) {
    %c0_i32 = arith.constant 0 : i32
    %c0_i32_0 = arith.constant 0 : i32
    %c0_i32_1 = arith.constant 0 : i32
    %c0_i32_2 = arith.constant 0 : i32
    return %c0_i32, %arg0, %c0_i32_0, %arg1, %c0_i32_1 : i32, i32, i32, i32, i32
  }
  func.func @transform_1(%arg0: i32, %arg1: i32) -> (i32, i32, i32, i32, i32) {
    %c0_i32 = arith.constant 0 : i32
    %c0_i32_0 = arith.constant 0 : i32
    %c0_i32_1 = arith.constant 0 : i32
    %c0_i32_2 = arith.constant 0 : i32
    return %c0_i32, %arg0, %c0_i32_0, %arg1, %c0_i32_1 : i32, i32, i32, i32, i32
  }
  func.func @transform_2(%arg0: i32, %arg1: i32) -> (i32, i32) {
    %c0_i32 = arith.constant 0 : i32
    %c0_i32_0 = arith.constant 0 : i32
    %c0_i32_1 = arith.constant 0 : i32
    return %c0_i32, %c0_i32_0 : i32, i32
  }
  func.func @transform_3(%arg0: i32, %arg1: i32) -> (i32, i32, i32, i32) {
    %c0_i32 = arith.constant 0 : i32
    %c0_i32_0 = arith.constant 0 : i32
    %c0_i32_1 = arith.constant 0 : i32
    return %c0_i32, %arg0, %arg1, %c0_i32_0 : i32, i32, i32, i32
  }
  func.func @transform_4(%arg0: i32, %arg1: i32) -> (i32, i32, i32, i32) {
    %c0_i32 = arith.constant 0 : i32
    %c0_i32_0 = arith.constant 0 : i32
    %c0_i32_1 = arith.constant 0 : i32
    return %c0_i32, %arg0, %arg1, %c0_i32_0 : i32, i32, i32, i32
  }
}

module attributes {stable_mosaic.version = 11 : i64} {
  func.func @head_kernel(%arg0: i32, %arg1: i32, %arg2: memref<1x4x8x8xf32, #tpu.memory_space<vmem>>, %arg3: memref<1x4x8x32xf32, #tpu.memory_space<vmem>>, %arg4: memref<16x8xf32, #tpu.memory_space<vmem>>, %arg5: memref<8x4xf32, #tpu.memory_space<smem>>, %arg6: memref<8xf32, #tpu.memory_space<smem>>, %arg7: memref<1x8x8x8xf32, #tpu.memory_space<vmem>>) attributes {dimension_semantics = [#tpu.dimension_semantics<parallel>, #tpu.dimension_semantics<parallel>], iteration_bounds = array<i64: 2, 1>, scalar_prefetch = 0 : i64, scratch_operands = 0 : i64, tpu.core_type = #tpu.core_type<tc>, window_params = [{transform_indices = @transform_0, window_bounds = array<i64: 1, 4, 8, 8>}, {transform_indices = @transform_1, window_bounds = array<i64: 1, 4, 8, 32>}, {pipeline_mode = #tpu.pipeline_mode<synchronous>, transform_indices = @transform_2, window_bounds = array<i64: 16, 8>}, {transform_indices = @transform_3, window_bounds = array<i64: 8, 4>}, {transform_indices = @transform_4, window_bounds = array<i64: 8>}, {transform_indices = @transform_5, window_bounds = array<i64: 1, 8, 8, 8>}]} {
    %c0 = arith.constant 0 : index
    %c0_0 = arith.constant 0 : index
    %c0_1 = arith.constant 0 : index
    %c0_2 = arith.constant 0 : index
    %0 = vector.load %arg3[%c0, %c0_0, %c0_1, %c0_2] : memref<1x4x8x32xf32, #tpu.memory_space<vmem>>, vector<1x4x8x16xf32>
    %1 = vector.shape_cast %0 : vector<1x4x8x16xf32> to vector<4x8x16xf32>
    %c0_3 = arith.constant 0 : index
    %c0_4 = arith.constant 0 : index
    %c0_5 = arith.constant 0 : index
    %c16 = arith.constant 16 : index
    %2 = vector.load %arg3[%c0_3, %c0_4, %c0_5, %c16] : memref<1x4x8x32xf32, #tpu.memory_space<vmem>>, vector<1x4x8x16xf32>
    %3 = vector.shape_cast %2 : vector<1x4x8x16xf32> to vector<4x8x16xf32>
    %4 = arith.addf %1, %3 : vector<4x8x16xf32>
    %5 = vector.shape_cast %4 : vector<4x8x16xf32> to vector<32x16xf32>
    %c0_6 = arith.constant 0 : index
    %c0_7 = arith.constant 0 : index
    %6 = vector.load %arg4[%c0_6, %c0_7] : memref<16x8xf32, #tpu.memory_space<vmem>>, vector<16x8xf32>
    %cst = arith.constant dense<0.000000e+00> : vector<32x8xf32>
    %7 = tpu.matmul %5, %6, %cst {dimension_numbers = #tpu.dot_dimension_numbers<[1], [0], [0], [1], [0, 0, 1, 1], [], []>, precision = #tpu.contract_precision<fp32>} : vector<32x16xf32>, vector<16x8xf32>, vector<32x8xf32> -> vector<32x8xf32>
    %8 = vector.shape_cast %7 : vector<32x8xf32> to vector<4x8x8xf32>
    %c0_8 = arith.constant 0 : index
    %c0_9 = arith.constant 0 : index
    %c0_10 = arith.constant 0 : index
    %c0_11 = arith.constant 0 : index
    %9 = vector.load %arg2[%c0_8, %c0_9, %c0_10, %c0_11] : memref<1x4x8x8xf32, #tpu.memory_space<vmem>>, vector<1x4x8x8xf32>
    %10 = vector.shape_cast %9 : vector<1x4x8x8xf32> to vector<4x8x8xf32>
    %11 = arith.addf %10, %8 : vector<4x8x8xf32>
    %12 = vector.extract_strided_slice %11 {offsets = [0, 0, 0], sizes = [1, 8, 8], strides = [1, 1, 1]} : vector<4x8x8xf32> to vector<1x8x8xf32>
    %13 = vector.shape_cast %12 : vector<1x8x8xf32> to vector<8x8xf32>
    %c0_12 = arith.constant 0 : index
    %c0_13 = arith.constant 0 : index
    %14 = memref.load %arg5[%c0_12, %c0_13] : memref<8x4xf32, #tpu.memory_space<smem>>
    %15 = vector.broadcast %14 : f32 to vector<8x8xf32>
    %16 = arith.mulf %13, %15 : vector<8x8xf32>
    %17 = vector.extract_strided_slice %11 {offsets = [1, 0, 0], sizes = [1, 8, 8], strides = [1, 1, 1]} : vector<4x8x8xf32> to vector<1x8x8xf32>
    %18 = vector.shape_cast %17 : vector<1x8x8xf32> to vector<8x8xf32>
    %c0_14 = arith.constant 0 : index
    %c1 = arith.constant 1 : index
    %19 = memref.load %arg5[%c0_14, %c1] : memref<8x4xf32, #tpu.memory_space<smem>>
    %20 = vector.broadcast %19 : f32 to vector<8x8xf32>
    %21 = arith.mulf %18, %20 : vector<8x8xf32>
    %22 = arith.addf %16, %21 : vector<8x8xf32>
    %23 = vector.extract_strided_slice %11 {offsets = [2, 0, 0], sizes = [1, 8, 8], strides = [1, 1, 1]} : vector<4x8x8xf32> to vector<1x8x8xf32>
    %24 = vector.shape_cast %23 : vector<1x8x8xf32> to vector<8x8xf32>
    %c0_15 = arith.constant 0 : index
    %c2 = arith.constant 2 : index
    %25 = memref.load %arg5[%c0_15, %c2] : memref<8x4xf32, #tpu.memory_space<smem>>
    %26 = vector.broadcast %25 : f32 to vector<8x8xf32>
    %27 = arith.mulf %24, %26 : vector<8x8xf32>
    %28 = arith.addf %22, %27 : vector<8x8xf32>
    %29 = vector.extract_strided_slice %11 {offsets = [3, 0, 0], sizes = [1, 8, 8], strides = [1, 1, 1]} : vector<4x8x8xf32> to vector<1x8x8xf32>
    %30 = vector.shape_cast %29 : vector<1x8x8xf32> to vector<8x8xf32>
    %c0_16 = arith.constant 0 : index
    %c3 = arith.constant 3 : index
    %31 = memref.load %arg5[%c0_16, %c3] : memref<8x4xf32, #tpu.memory_space<smem>>
    %32 = vector.broadcast %31 : f32 to vector<8x8xf32>
    %33 = arith.mulf %30, %32 : vector<8x8xf32>
    %34 = arith.addf %28, %33 : vector<8x8xf32>
    %c0_17 = arith.constant 0 : index
    %35 = memref.load %arg6[%c0_17] : memref<8xf32, #tpu.memory_space<smem>>
    %36 = vector.broadcast %35 : f32 to vector<8x8xf32>
    %37 = arith.addf %34, %36 : vector<8x8xf32>
    %cst_18 = arith.constant 0.000000e+00 : f32
    %38 = vector.broadcast %cst_18 : f32 to vector<8x8xf32>
    %39 = arith.cmpf ogt, %37, %38 : vector<8x8xf32>
    %cst_19 = arith.constant 1.000000e-01 : f32
    %40 = vector.broadcast %cst_19 : f32 to vector<8x8xf32>
    %41 = arith.mulf %40, %37 : vector<8x8xf32>
    %42 = arith.select %39, %37, %41 : vector<8x8xi1>, vector<8x8xf32>
    %c0_20 = arith.constant 0 : index
    %c0_21 = arith.constant 0 : index
    %c0_22 = arith.constant 0 : index
    %c0_23 = arith.constant 0 : index
    %43 = vector.load %arg7[%c0_20, %c0_21, %c0_22, %c0_23] : memref<1x8x8x8xf32, #tpu.memory_space<vmem>>, vector<1x1x8x8xf32>
    %44 = vector.shape_cast %43 : vector<1x1x8x8xf32> to vector<8x8xf32>
    %45 = vector.shape_cast %42 : vector<8x8xf32> to vector<1x1x8x8xf32>
    tpu.vector_store %arg7[%c0_20, %c0_21, %c0_22, %c0_23], %45 {strides = array<i32>} : memref<1x8x8x8xf32, #tpu.memory_space<vmem>>, vector<1x1x8x8xf32>,
    %46 = vector.extract_strided_slice %11 {offsets = [0, 0, 0], sizes = [1, 8, 8], strides = [1, 1, 1]} : vector<4x8x8xf32> to vector<1x8x8xf32>
    %47 = vector.shape_cast %46 : vector<1x8x8xf32> to vector<8x8xf32>
    %c1_24 = arith.constant 1 : index
    %c0_25 = arith.constant 0 : index
    %48 = memref.load %arg5[%c1_24, %c0_25] : memref<8x4xf32, #tpu.memory_space<smem>>
    %49 = vector.broadcast %48 : f32 to vector<8x8xf32>
    %50 = arith.mulf %47, %49 : vector<8x8xf32>
    %51 = vector.extract_strided_slice %11 {offsets = [1, 0, 0], sizes = [1, 8, 8], strides = [1, 1, 1]} : vector<4x8x8xf32> to vector<1x8x8xf32>
    %52 = vector.shape_cast %51 : vector<1x8x8xf32> to vector<8x8xf32>
    %c1_26 = arith.constant 1 : index
    %c1_27 = arith.constant 1 : index
    %53 = memref.load %arg5[%c1_26, %c1_27] : memref<8x4xf32, #tpu.memory_space<smem>>
    %54 = vector.broadcast %53 : f32 to vector<8x8xf32>
    %55 = arith.mulf %52, %54 : vector<8x8xf32>
    %56 = arith.addf %50, %55 : vector<8x8xf32>
    %57 = vector.extract_strided_slice %11 {offsets = [2, 0, 0], sizes = [1, 8, 8], strides = [1, 1, 1]} : vector<4x8x8xf32> to vector<1x8x8xf32>
    %58 = vector.shape_cast %57 : vector<1x8x8xf32> to vector<8x8xf32>
    %c1_28 = arith.constant 1 : index
    %c2_29 = arith.constant 2 : index
    %59 = memref.load %arg5[%c1_28, %c2_29] : memref<8x4xf32, #tpu.memory_space<smem>>
    %60 = vector.broadcast %59 : f32 to vector<8x8xf32>
    %61 = arith.mulf %58, %60 : vector<8x8xf32>
    %62 = arith.addf %56, %61 : vector<8x8xf32>
    %63 = vector.extract_strided_slice %11 {offsets = [3, 0, 0], sizes = [1, 8, 8], strides = [1, 1, 1]} : vector<4x8x8xf32> to vector<1x8x8xf32>
    %64 = vector.shape_cast %63 : vector<1x8x8xf32> to vector<8x8xf32>
    %c1_30 = arith.constant 1 : index
    %c3_31 = arith.constant 3 : index
    %65 = memref.load %arg5[%c1_30, %c3_31] : memref<8x4xf32, #tpu.memory_space<smem>>
    %66 = vector.broadcast %65 : f32 to vector<8x8xf32>
    %67 = arith.mulf %64, %66 : vector<8x8xf32>
    %68 = arith.addf %62, %67 : vector<8x8xf32>
    %c1_32 = arith.constant 1 : index
    %69 = memref.load %arg6[%c1_32] : memref<8xf32, #tpu.memory_space<smem>>
    %70 = vector.broadcast %69 : f32 to vector<8x8xf32>
    %71 = arith.addf %68, %70 : vector<8x8xf32>
    %cst_33 = arith.constant 0.000000e+00 : f32
    %72 = vector.broadcast %cst_33 : f32 to vector<8x8xf32>
    %73 = arith.cmpf ogt, %71, %72 : vector<8x8xf32>
    %cst_34 = arith.constant 1.000000e-01 : f32
    %74 = vector.broadcast %cst_34 : f32 to vector<8x8xf32>
    %75 = arith.mulf %74, %71 : vector<8x8xf32>
    %76 = arith.select %73, %71, %75 : vector<8x8xi1>, vector<8x8xf32>
    %c0_35 = arith.constant 0 : index
    %c1_36 = arith.constant 1 : index
    %c0_37 = arith.constant 0 : index
    %c0_38 = arith.constant 0 : index
    %77 = vector.load %arg7[%c0_35, %c1_36, %c0_37, %c0_38] : memref<1x8x8x8xf32, #tpu.memory_space<vmem>>, vector<1x1x8x8xf32>
    %78 = vector.shape_cast %77 : vector<1x1x8x8xf32> to vector<8x8xf32>
    %79 = vector.shape_cast %76 : vector<8x8xf32> to vector<1x1x8x8xf32>
    tpu.vector_store %arg7[%c0_35, %c1_36, %c0_37, %c0_38], %79 {strides = array<i32>} : memref<1x8x8x8xf32, #tpu.memory_space<vmem>>, vector<1x1x8x8xf32>,
    %80 = vector.extract_strided_slice %11 {offsets = [0, 0, 0], sizes = [1, 8, 8], strides = [1, 1, 1]} : vector<4x8x8xf32> to vector<1x8x8xf32>
    %81 = vector.shape_cast %80 : vector<1x8x8xf32> to vector<8x8xf32>
    %c2_39 = arith.constant 2 : index
    %c0_40 = arith.constant 0 : index
    %82 = memref.load %arg5[%c2_39, %c0_40] : memref<8x4xf32, #tpu.memory_space<smem>>
    %83 = vector.broadcast %82 : f32 to vector<8x8xf32>
    %84 = arith.mulf %81, %83 : vector<8x8xf32>
    %85 = vector.extract_strided_slice %11 {offsets = [1, 0, 0], sizes = [1, 8, 8], strides = [1, 1, 1]} : vector<4x8x8xf32> to vector<1x8x8xf32>
    %86 = vector.shape_cast %85 : vector<1x8x8xf32> to vector<8x8xf32>
    %c2_41 = arith.constant 2 : index
    %c1_42 = arith.constant 1 : index
    %87 = memref.load %arg5[%c2_41, %c1_42] : memref<8x4xf32, #tpu.memory_space<smem>>
    %88 = vector.broadcast %87 : f32 to vector<8x8xf32>
    %89 = arith.mulf %86, %88 : vector<8x8xf32>
    %90 = arith.addf %84, %89 : vector<8x8xf32>
    %91 = vector.extract_strided_slice %11 {offsets = [2, 0, 0], sizes = [1, 8, 8], strides = [1, 1, 1]} : vector<4x8x8xf32> to vector<1x8x8xf32>
    %92 = vector.shape_cast %91 : vector<1x8x8xf32> to vector<8x8xf32>
    %c2_43 = arith.constant 2 : index
    %c2_44 = arith.constant 2 : index
    %93 = memref.load %arg5[%c2_43, %c2_44] : memref<8x4xf32, #tpu.memory_space<smem>>
    %94 = vector.broadcast %93 : f32 to vector<8x8xf32>
    %95 = arith.mulf %92, %94 : vector<8x8xf32>
    %96 = arith.addf %90, %95 : vector<8x8xf32>
    %97 = vector.extract_strided_slice %11 {offsets = [3, 0, 0], sizes = [1, 8, 8], strides = [1, 1, 1]} : vector<4x8x8xf32> to vector<1x8x8xf32>
    %98 = vector.shape_cast %97 : vector<1x8x8xf32> to vector<8x8xf32>
    %c2_45 = arith.constant 2 : index
    %c3_46 = arith.constant 3 : index
    %99 = memref.load %arg5[%c2_45, %c3_46] : memref<8x4xf32, #tpu.memory_space<smem>>
    %100 = vector.broadcast %99 : f32 to vector<8x8xf32>
    %101 = arith.mulf %98, %100 : vector<8x8xf32>
    %102 = arith.addf %96, %101 : vector<8x8xf32>
    %c2_47 = arith.constant 2 : index
    %103 = memref.load %arg6[%c2_47] : memref<8xf32, #tpu.memory_space<smem>>
    %104 = vector.broadcast %103 : f32 to vector<8x8xf32>
    %105 = arith.addf %102, %104 : vector<8x8xf32>
    %cst_48 = arith.constant 0.000000e+00 : f32
    %106 = vector.broadcast %cst_48 : f32 to vector<8x8xf32>
    %107 = arith.cmpf ogt, %105, %106 : vector<8x8xf32>
    %cst_49 = arith.constant 1.000000e-01 : f32
    %108 = vector.broadcast %cst_49 : f32 to vector<8x8xf32>
    %109 = arith.mulf %108, %105 : vector<8x8xf32>
    %110 = arith.select %107, %105, %109 : vector<8x8xi1>, vector<8x8xf32>
    %c0_50 = arith.constant 0 : index
    %c2_51 = arith.constant 2 : index
    %c0_52 = arith.constant 0 : index
    %c0_53 = arith.constant 0 : index
    %111 = vector.load %arg7[%c0_50, %c2_51, %c0_52, %c0_53] : memref<1x8x8x8xf32, #tpu.memory_space<vmem>>, vector<1x1x8x8xf32>
    %112 = vector.shape_cast %111 : vector<1x1x8x8xf32> to vector<8x8xf32>
    %113 = vector.shape_cast %110 : vector<8x8xf32> to vector<1x1x8x8xf32>
    tpu.vector_store %arg7[%c0_50, %c2_51, %c0_52, %c0_53], %113 {strides = array<i32>} : memref<1x8x8x8xf32, #tpu.memory_space<vmem>>, vector<1x1x8x8xf32>,
    %114 = vector.extract_strided_slice %11 {offsets = [0, 0, 0], sizes = [1, 8, 8], strides = [1, 1, 1]} : vector<4x8x8xf32> to vector<1x8x8xf32>
    %115 = vector.shape_cast %114 : vector<1x8x8xf32> to vector<8x8xf32>
    %c3_54 = arith.constant 3 : index
    %c0_55 = arith.constant 0 : index
    %116 = memref.load %arg5[%c3_54, %c0_55] : memref<8x4xf32, #tpu.memory_space<smem>>
    %117 = vector.broadcast %116 : f32 to vector<8x8xf32>
    %118 = arith.mulf %115, %117 : vector<8x8xf32>
    %119 = vector.extract_strided_slice %11 {offsets = [1, 0, 0], sizes = [1, 8, 8], strides = [1, 1, 1]} : vector<4x8x8xf32> to vector<1x8x8xf32>
    %120 = vector.shape_cast %119 : vector<1x8x8xf32> to vector<8x8xf32>
    %c3_56 = arith.constant 3 : index
    %c1_57 = arith.constant 1 : index
    %121 = memref.load %arg5[%c3_56, %c1_57] : memref<8x4xf32, #tpu.memory_space<smem>>
    %122 = vector.broadcast %121 : f32 to vector<8x8xf32>
    %123 = arith.mulf %120, %122 : vector<8x8xf32>
    %124 = arith.addf %118, %123 : vector<8x8xf32>
    %125 = vector.extract_strided_slice %11 {offsets = [2, 0, 0], sizes = [1, 8, 8], strides = [1, 1, 1]} : vector<4x8x8xf32> to vector<1x8x8xf32>
    %126 = vector.shape_cast %125 : vector<1x8x8xf32> to vector<8x8xf32>
    %c3_58 = arith.constant 3 : index
    %c2_59 = arith.constant 2 : index
    %127 = memref.load %arg5[%c3_58, %c2_59] : memref<8x4xf32, #tpu.memory_space<smem>>
    %128 = vector.broadcast %127 : f32 to vector<8x8xf32>
    %129 = arith.mulf %126, %128 : vector<8x8xf32>
    %130 = arith.addf %124, %129 : vector<8x8xf32>
    %131 = vector.extract_strided_slice %11 {offsets = [3, 0, 0], sizes = [1, 8, 8], strides = [1, 1, 1]} : vector<4x8x8xf32> to vector<1x8x8xf32>
    %132 = vector.shape_cast %131 : vector<1x8x8xf32> to vector<8x8xf32>
    %c3_60 = arith.constant 3 : index
    %c3_61 = arith.constant 3 : index
    %133 = memref.load %arg5[%c3_60, %c3_61] : memref<8x4xf32, #tpu.memory_space<smem>>
    %134 = vector.broadcast %133 : f32 to vector<8x8xf32>
    %135 = arith.mulf %132, %134 : vector<8x8xf32>
    %136 = arith.addf %130, %135 : vector<8x8xf32>
    %c3_62 = arith.constant 3 : index
    %137 = memref.load %arg6[%c3_62] : memref<8xf32, #tpu.memory_space<smem>>
    %138 = vector.broadcast %137 : f32 to vector<8x8xf32>
    %139 = arith.addf %136, %138 : vector<8x8xf32>
    %cst_63 = arith.constant 0.000000e+00 : f32
    %140 = vector.broadcast %cst_63 : f32 to vector<8x8xf32>
    %141 = arith.cmpf ogt, %139, %140 : vector<8x8xf32>
    %cst_64 = arith.constant 1.000000e-01 : f32
    %142 = vector.broadcast %cst_64 : f32 to vector<8x8xf32>
    %143 = arith.mulf %142, %139 : vector<8x8xf32>
    %144 = arith.select %141, %139, %143 : vector<8x8xi1>, vector<8x8xf32>
    %c0_65 = arith.constant 0 : index
    %c3_66 = arith.constant 3 : index
    %c0_67 = arith.constant 0 : index
    %c0_68 = arith.constant 0 : index
    %145 = vector.load %arg7[%c0_65, %c3_66, %c0_67, %c0_68] : memref<1x8x8x8xf32, #tpu.memory_space<vmem>>, vector<1x1x8x8xf32>
    %146 = vector.shape_cast %145 : vector<1x1x8x8xf32> to vector<8x8xf32>
    %147 = vector.shape_cast %144 : vector<8x8xf32> to vector<1x1x8x8xf32>
    tpu.vector_store %arg7[%c0_65, %c3_66, %c0_67, %c0_68], %147 {strides = array<i32>} : memref<1x8x8x8xf32, #tpu.memory_space<vmem>>, vector<1x1x8x8xf32>,
    %148 = vector.extract_strided_slice %11 {offsets = [0, 0, 0], sizes = [1, 8, 8], strides = [1, 1, 1]} : vector<4x8x8xf32> to vector<1x8x8xf32>
    %149 = vector.shape_cast %148 : vector<1x8x8xf32> to vector<8x8xf32>
    %c4 = arith.constant 4 : index
    %c0_69 = arith.constant 0 : index
    %150 = memref.load %arg5[%c4, %c0_69] : memref<8x4xf32, #tpu.memory_space<smem>>
    %151 = vector.broadcast %150 : f32 to vector<8x8xf32>
    %152 = arith.mulf %149, %151 : vector<8x8xf32>
    %153 = vector.extract_strided_slice %11 {offsets = [1, 0, 0], sizes = [1, 8, 8], strides = [1, 1, 1]} : vector<4x8x8xf32> to vector<1x8x8xf32>
    %154 = vector.shape_cast %153 : vector<1x8x8xf32> to vector<8x8xf32>
    %c4_70 = arith.constant 4 : index
    %c1_71 = arith.constant 1 : index
    %155 = memref.load %arg5[%c4_70, %c1_71] : memref<8x4xf32, #tpu.memory_space<smem>>
    %156 = vector.broadcast %155 : f32 to vector<8x8xf32>
    %157 = arith.mulf %154, %156 : vector<8x8xf32>
    %158 = arith.addf %152, %157 : vector<8x8xf32>
    %159 = vector.extract_strided_slice %11 {offsets = [2, 0, 0], sizes = [1, 8, 8], strides = [1, 1, 1]} : vector<4x8x8xf32> to vector<1x8x8xf32>
    %160 = vector.shape_cast %159 : vector<1x8x8xf32> to vector<8x8xf32>
    %c4_72 = arith.constant 4 : index
    %c2_73 = arith.constant 2 : index
    %161 = memref.load %arg5[%c4_72, %c2_73] : memref<8x4xf32, #tpu.memory_space<smem>>
    %162 = vector.broadcast %161 : f32 to vector<8x8xf32>
    %163 = arith.mulf %160, %162 : vector<8x8xf32>
    %164 = arith.addf %158, %163 : vector<8x8xf32>
    %165 = vector.extract_strided_slice %11 {offsets = [3, 0, 0], sizes = [1, 8, 8], strides = [1, 1, 1]} : vector<4x8x8xf32> to vector<1x8x8xf32>
    %166 = vector.shape_cast %165 : vector<1x8x8xf32> to vector<8x8xf32>
    %c4_74 = arith.constant 4 : index
    %c3_75 = arith.constant 3 : index
    %167 = memref.load %arg5[%c4_74, %c3_75] : memref<8x4xf32, #tpu.memory_space<smem>>
    %168 = vector.broadcast %167 : f32 to vector<8x8xf32>
    %169 = arith.mulf %166, %168 : vector<8x8xf32>
    %170 = arith.addf %164, %169 : vector<8x8xf32>
    %c4_76 = arith.constant 4 : index
    %171 = memref.load %arg6[%c4_76] : memref<8xf32, #tpu.memory_space<smem>>
    %172 = vector.broadcast %171 : f32 to vector<8x8xf32>
    %173 = arith.addf %170, %172 : vector<8x8xf32>
    %cst_77 = arith.constant 0.000000e+00 : f32
    %174 = vector.broadcast %cst_77 : f32 to vector<8x8xf32>
    %175 = arith.cmpf ogt, %173, %174 : vector<8x8xf32>
    %cst_78 = arith.constant 1.000000e-01 : f32
    %176 = vector.broadcast %cst_78 : f32 to vector<8x8xf32>
    %177 = arith.mulf %176, %173 : vector<8x8xf32>
    %178 = arith.select %175, %173, %177 : vector<8x8xi1>, vector<8x8xf32>
    %c0_79 = arith.constant 0 : index
    %c4_80 = arith.constant 4 : index
    %c0_81 = arith.constant 0 : index
    %c0_82 = arith.constant 0 : index
    %179 = vector.load %arg7[%c0_79, %c4_80, %c0_81, %c0_82] : memref<1x8x8x8xf32, #tpu.memory_space<vmem>>, vector<1x1x8x8xf32>
    %180 = vector.shape_cast %179 : vector<1x1x8x8xf32> to vector<8x8xf32>
    %181 = vector.shape_cast %178 : vector<8x8xf32> to vector<1x1x8x8xf32>
    tpu.vector_store %arg7[%c0_79, %c4_80, %c0_81, %c0_82], %181 {strides = array<i32>} : memref<1x8x8x8xf32, #tpu.memory_space<vmem>>, vector<1x1x8x8xf32>,
    %182 = vector.extract_strided_slice %11 {offsets = [0, 0, 0], sizes = [1, 8, 8], strides = [1, 1, 1]} : vector<4x8x8xf32> to vector<1x8x8xf32>
    %183 = vector.shape_cast %182 : vector<1x8x8xf32> to vector<8x8xf32>
    %c5 = arith.constant 5 : index
    %c0_83 = arith.constant 0 : index
    %184 = memref.load %arg5[%c5, %c0_83] : memref<8x4xf32, #tpu.memory_space<smem>>
    %185 = vector.broadcast %184 : f32 to vector<8x8xf32>
    %186 = arith.mulf %183, %185 : vector<8x8xf32>
    %187 = vector.extract_strided_slice %11 {offsets = [1, 0, 0], sizes = [1, 8, 8], strides = [1, 1, 1]} : vector<4x8x8xf32> to vector<1x8x8xf32>
    %188 = vector.shape_cast %187 : vector<1x8x8xf32> to vector<8x8xf32>
    %c5_84 = arith.constant 5 : index
    %c1_85 = arith.constant 1 : index
    %189 = memref.load %arg5[%c5_84, %c1_85] : memref<8x4xf32, #tpu.memory_space<smem>>
    %190 = vector.broadcast %189 : f32 to vector<8x8xf32>
    %191 = arith.mulf %188, %190 : vector<8x8xf32>
    %192 = arith.addf %186, %191 : vector<8x8xf32>
    %193 = vector.extract_strided_slice %11 {offsets = [2, 0, 0], sizes = [1, 8, 8], strides = [1, 1, 1]} : vector<4x8x8xf32> to vector<1x8x8xf32>
    %194 = vector.shape_cast %193 : vector<1x8x8xf32> to vector<8x8xf32>
    %c5_86 = arith.constant 5 : index
    %c2_87 = arith.constant 2 : index
    %195 = memref.load %arg5[%c5_86, %c2_87] : memref<8x4xf32, #tpu.memory_space<smem>>
    %196 = vector.broadcast %195 : f32 to vector<8x8xf32>
    %197 = arith.mulf %194, %196 : vector<8x8xf32>
    %198 = arith.addf %192, %197 : vector<8x8xf32>
    %199 = vector.extract_strided_slice %11 {offsets = [3, 0, 0], sizes = [1, 8, 8], strides = [1, 1, 1]} : vector<4x8x8xf32> to vector<1x8x8xf32>
    %200 = vector.shape_cast %199 : vector<1x8x8xf32> to vector<8x8xf32>
    %c5_88 = arith.constant 5 : index
    %c3_89 = arith.constant 3 : index
    %201 = memref.load %arg5[%c5_88, %c3_89] : memref<8x4xf32, #tpu.memory_space<smem>>
    %202 = vector.broadcast %201 : f32 to vector<8x8xf32>
    %203 = arith.mulf %200, %202 : vector<8x8xf32>
    %204 = arith.addf %198, %203 : vector<8x8xf32>
    %c5_90 = arith.constant 5 : index
    %205 = memref.load %arg6[%c5_90] : memref<8xf32, #tpu.memory_space<smem>>
    %206 = vector.broadcast %205 : f32 to vector<8x8xf32>
    %207 = arith.addf %204, %206 : vector<8x8xf32>
    %cst_91 = arith.constant 0.000000e+00 : f32
    %208 = vector.broadcast %cst_91 : f32 to vector<8x8xf32>
    %209 = arith.cmpf ogt, %207, %208 : vector<8x8xf32>
    %cst_92 = arith.constant 1.000000e-01 : f32
    %210 = vector.broadcast %cst_92 : f32 to vector<8x8xf32>
    %211 = arith.mulf %210, %207 : vector<8x8xf32>
    %212 = arith.select %209, %207, %211 : vector<8x8xi1>, vector<8x8xf32>
    %c0_93 = arith.constant 0 : index
    %c5_94 = arith.constant 5 : index
    %c0_95 = arith.constant 0 : index
    %c0_96 = arith.constant 0 : index
    %213 = vector.load %arg7[%c0_93, %c5_94, %c0_95, %c0_96] : memref<1x8x8x8xf32, #tpu.memory_space<vmem>>, vector<1x1x8x8xf32>
    %214 = vector.shape_cast %213 : vector<1x1x8x8xf32> to vector<8x8xf32>
    %215 = vector.shape_cast %212 : vector<8x8xf32> to vector<1x1x8x8xf32>
    tpu.vector_store %arg7[%c0_93, %c5_94, %c0_95, %c0_96], %215 {strides = array<i32>} : memref<1x8x8x8xf32, #tpu.memory_space<vmem>>, vector<1x1x8x8xf32>,
    %216 = vector.extract_strided_slice %11 {offsets = [0, 0, 0], sizes = [1, 8, 8], strides = [1, 1, 1]} : vector<4x8x8xf32> to vector<1x8x8xf32>
    %217 = vector.shape_cast %216 : vector<1x8x8xf32> to vector<8x8xf32>
    %c6 = arith.constant 6 : index
    %c0_97 = arith.constant 0 : index
    %218 = memref.load %arg5[%c6, %c0_97] : memref<8x4xf32, #tpu.memory_space<smem>>
    %219 = vector.broadcast %218 : f32 to vector<8x8xf32>
    %220 = arith.mulf %217, %219 : vector<8x8xf32>
    %221 = vector.extract_strided_slice %11 {offsets = [1, 0, 0], sizes = [1, 8, 8], strides = [1, 1, 1]} : vector<4x8x8xf32> to vector<1x8x8xf32>
    %222 = vector.shape_cast %221 : vector<1x8x8xf32> to vector<8x8xf32>
    %c6_98 = arith.constant 6 : index
    %c1_99 = arith.constant 1 : index
    %223 = memref.load %arg5[%c6_98, %c1_99] : memref<8x4xf32, #tpu.memory_space<smem>>
    %224 = vector.broadcast %223 : f32 to vector<8x8xf32>
    %225 = arith.mulf %222, %224 : vector<8x8xf32>
    %226 = arith.addf %220, %225 : vector<8x8xf32>
    %227 = vector.extract_strided_slice %11 {offsets = [2, 0, 0], sizes = [1, 8, 8], strides = [1, 1, 1]} : vector<4x8x8xf32> to vector<1x8x8xf32>
    %228 = vector.shape_cast %227 : vector<1x8x8xf32> to vector<8x8xf32>
    %c6_100 = arith.constant 6 : index
    %c2_101 = arith.constant 2 : index
    %229 = memref.load %arg5[%c6_100, %c2_101] : memref<8x4xf32, #tpu.memory_space<smem>>
    %230 = vector.broadcast %229 : f32 to vector<8x8xf32>
    %231 = arith.mulf %228, %230 : vector<8x8xf32>
    %232 = arith.addf %226, %231 : vector<8x8xf32>
    %233 = vector.extract_strided_slice %11 {offsets = [3, 0, 0], sizes = [1, 8, 8], strides = [1, 1, 1]} : vector<4x8x8xf32> to vector<1x8x8xf32>
    %234 = vector.shape_cast %233 : vector<1x8x8xf32> to vector<8x8xf32>
    %c6_102 = arith.constant 6 : index
    %c3_103 = arith.constant 3 : index
    %235 = memref.load %arg5[%c6_102, %c3_103] : memref<8x4xf32, #tpu.memory_space<smem>>
    %236 = vector.broadcast %235 : f32 to vector<8x8xf32>
    %237 = arith.mulf %234, %236 : vector<8x8xf32>
    %238 = arith.addf %232, %237 : vector<8x8xf32>
    %c6_104 = arith.constant 6 : index
    %239 = memref.load %arg6[%c6_104] : memref<8xf32, #tpu.memory_space<smem>>
    %240 = vector.broadcast %239 : f32 to vector<8x8xf32>
    %241 = arith.addf %238, %240 : vector<8x8xf32>
    %cst_105 = arith.constant 0.000000e+00 : f32
    %242 = vector.broadcast %cst_105 : f32 to vector<8x8xf32>
    %243 = arith.cmpf ogt, %241, %242 : vector<8x8xf32>
    %cst_106 = arith.constant 1.000000e-01 : f32
    %244 = vector.broadcast %cst_106 : f32 to vector<8x8xf32>
    %245 = arith.mulf %244, %241 : vector<8x8xf32>
    %246 = arith.select %243, %241, %245 : vector<8x8xi1>, vector<8x8xf32>
    %c0_107 = arith.constant 0 : index
    %c6_108 = arith.constant 6 : index
    %c0_109 = arith.constant 0 : index
    %c0_110 = arith.constant 0 : index
    %247 = vector.load %arg7[%c0_107, %c6_108, %c0_109, %c0_110] : memref<1x8x8x8xf32, #tpu.memory_space<vmem>>, vector<1x1x8x8xf32>
    %248 = vector.shape_cast %247 : vector<1x1x8x8xf32> to vector<8x8xf32>
    %249 = vector.shape_cast %246 : vector<8x8xf32> to vector<1x1x8x8xf32>
    tpu.vector_store %arg7[%c0_107, %c6_108, %c0_109, %c0_110], %249 {strides = array<i32>} : memref<1x8x8x8xf32, #tpu.memory_space<vmem>>, vector<1x1x8x8xf32>,
    %250 = vector.extract_strided_slice %11 {offsets = [0, 0, 0], sizes = [1, 8, 8], strides = [1, 1, 1]} : vector<4x8x8xf32> to vector<1x8x8xf32>
    %251 = vector.shape_cast %250 : vector<1x8x8xf32> to vector<8x8xf32>
    %c7 = arith.constant 7 : index
    %c0_111 = arith.constant 0 : index
    %252 = memref.load %arg5[%c7, %c0_111] : memref<8x4xf32, #tpu.memory_space<smem>>
    %253 = vector.broadcast %252 : f32 to vector<8x8xf32>
    %254 = arith.mulf %251, %253 : vector<8x8xf32>
    %255 = vector.extract_strided_slice %11 {offsets = [1, 0, 0], sizes = [1, 8, 8], strides = [1, 1, 1]} : vector<4x8x8xf32> to vector<1x8x8xf32>
    %256 = vector.shape_cast %255 : vector<1x8x8xf32> to vector<8x8xf32>
    %c7_112 = arith.constant 7 : index
    %c1_113 = arith.constant 1 : index
    %257 = memref.load %arg5[%c7_112, %c1_113] : memref<8x4xf32, #tpu.memory_space<smem>>
    %258 = vector.broadcast %257 : f32 to vector<8x8xf32>
    %259 = arith.mulf %256, %258 : vector<8x8xf32>
    %260 = arith.addf %254, %259 : vector<8x8xf32>
    %261 = vector.extract_strided_slice %11 {offsets = [2, 0, 0], sizes = [1, 8, 8], strides = [1, 1, 1]} : vector<4x8x8xf32> to vector<1x8x8xf32>
    %262 = vector.shape_cast %261 : vector<1x8x8xf32> to vector<8x8xf32>
    %c7_114 = arith.constant 7 : index
    %c2_115 = arith.constant 2 : index
    %263 = memref.load %arg5[%c7_114, %c2_115] : memref<8x4xf32, #tpu.memory_space<smem>>
    %264 = vector.broadcast %263 : f32 to vector<8x8xf32>
    %265 = arith.mulf %262, %264 : vector<8x8xf32>
    %266 = arith.addf %260, %265 : vector<8x8xf32>
    %267 = vector.extract_strided_slice %11 {offsets = [3, 0, 0], sizes = [1, 8, 8], strides = [1, 1, 1]} : vector<4x8x8xf32> to vector<1x8x8xf32>
    %268 = vector.shape_cast %267 : vector<1x8x8xf32> to vector<8x8xf32>
    %c7_116 = arith.constant 7 : index
    %c3_117 = arith.constant 3 : index
    %269 = memref.load %arg5[%c7_116, %c3_117] : memref<8x4xf32, #tpu.memory_space<smem>>
    %270 = vector.broadcast %269 : f32 to vector<8x8xf32>
    %271 = arith.mulf %268, %270 : vector<8x8xf32>
    %272 = arith.addf %266, %271 : vector<8x8xf32>
    %c7_118 = arith.constant 7 : index
    %273 = memref.load %arg6[%c7_118] : memref<8xf32, #tpu.memory_space<smem>>
    %274 = vector.broadcast %273 : f32 to vector<8x8xf32>
    %275 = arith.addf %272, %274 : vector<8x8xf32>
    %cst_119 = arith.constant 0.000000e+00 : f32
    %276 = vector.broadcast %cst_119 : f32 to vector<8x8xf32>
    %277 = arith.cmpf ogt, %275, %276 : vector<8x8xf32>
    %cst_120 = arith.constant 1.000000e-01 : f32
    %278 = vector.broadcast %cst_120 : f32 to vector<8x8xf32>
    %279 = arith.mulf %278, %275 : vector<8x8xf32>
    %280 = arith.select %277, %275, %279 : vector<8x8xi1>, vector<8x8xf32>
    %c0_121 = arith.constant 0 : index
    %c7_122 = arith.constant 7 : index
    %c0_123 = arith.constant 0 : index
    %c0_124 = arith.constant 0 : index
    %281 = vector.load %arg7[%c0_121, %c7_122, %c0_123, %c0_124] : memref<1x8x8x8xf32, #tpu.memory_space<vmem>>, vector<1x1x8x8xf32>
    %282 = vector.shape_cast %281 : vector<1x1x8x8xf32> to vector<8x8xf32>
    %283 = vector.shape_cast %280 : vector<8x8xf32> to vector<1x1x8x8xf32>
    tpu.vector_store %arg7[%c0_121, %c7_122, %c0_123, %c0_124], %283 {strides = array<i32>} : memref<1x8x8x8xf32, #tpu.memory_space<vmem>>, vector<1x1x8x8xf32>,
    return
  }
  func.func @transform_0(%arg0: i32, %arg1: i32) -> (i32, i32, i32, i32) {
    %c0_i32 = arith.constant 0 : i32
    %c0_i32_0 = arith.constant 0 : i32
    %c0_i32_1 = arith.constant 0 : i32
    return %arg0, %c0_i32, %arg1, %c0_i32_0 : i32, i32, i32, i32
  }
  func.func @transform_1(%arg0: i32, %arg1: i32) -> (i32, i32, i32, i32) {
    %c0_i32 = arith.constant 0 : i32
    %c0_i32_0 = arith.constant 0 : i32
    %c0_i32_1 = arith.constant 0 : i32
    return %arg0, %c0_i32, %arg1, %c0_i32_0 : i32, i32, i32, i32
  }
  func.func @transform_2(%arg0: i32, %arg1: i32) -> (i32, i32) {
    %c0_i32 = arith.constant 0 : i32
    %c0_i32_0 = arith.constant 0 : i32
    %c0_i32_1 = arith.constant 0 : i32
    return %c0_i32, %c0_i32_0 : i32, i32
  }
  func.func @transform_3(%arg0: i32, %arg1: i32) -> (i32, i32) {
    %c0_i32 = arith.constant 0 : i32
    %c0_i32_0 = arith.constant 0 : i32
    %c0_i32_1 = arith.constant 0 : i32
    return %c0_i32, %c0_i32_0 : i32, i32
  }
  func.func @transform_4(%arg0: i32, %arg1: i32) -> i32 {
    %c0_i32 = arith.constant 0 : i32
    %c0_i32_0 = arith.constant 0 : i32
    return %c0_i32 : i32
  }
  func.func @transform_5(%arg0: i32, %arg1: i32) -> (i32, i32, i32, i32) {
    %c0_i32 = arith.constant 0 : i32
    %c0_i32_0 = arith.constant 0 : i32
    %c0_i32_1 = arith.constant 0 : i32
    return %arg0, %c0_i32, %arg1, %c0_i32_0 : i32, i32, i32, i32
  }
}

</mosaic_0001>

<llo_original>
// kernel: fouri_down_forward.2
$region0: #{fouri_down_forward.2}
  #allocation0 [shape = 'u32[]', space=smem, size = 0x4, offset = 0x4, fixed_abs, tag = 'smem constant byte address 0x4 - core index']
  #allocation1 [shape = 'u32[72,128]{1,0:T(1,128)}', space=vmem, size = 0x9000, scoped, tag = 'internal scratch']
  %s0 = inlined_call_operand.vmem [shape: f32[2,4,4,8,8], index: 0, kind: input, shape index: {}]
  %s1 = inlined_call_operand.vmem [shape: f32[2,4,4,8,8], index: 1, kind: input, shape index: {}]
  %s2 = inlined_call_operand.vmem [shape: f32[4,80], index: 2, kind: input, shape index: {}]
  %s3 = inlined_call_operand.vmem [shape: f32[2,4,8,8], index: 3, kind: output, shape index: {0}]
  %s4 = inlined_call_operand.vmem [shape: f32[2,4,8,8], index: 4, kind: output, shape index: {1}]
  %5 = xla_tuple %s3, %s4
  %s6 = sld [smem:[#allocation0]]
  $region201: #{fouri_down_forward.2} parent=0
    _
  %s8 = ssub.s32 1, %s6
  %s9 = scalar_select 0, %s8, %s6
  $region1: #{fouri_down_forward.2} parent=0
    #allocation2 [shape = 'u8[65536]{0}', space=vmem, size = 0x10000, scoped, tag = 'input window, operand 0']
    #allocation3 [shape = 'u8[65536]{0}', space=vmem, size = 0x10000, scoped, tag = 'input window, operand 1']
    #allocation4 [shape = 'u8[2048]{0}', space=smem, size = 0x800, scoped, tag = 'input window, operand 2, single buffered']
    #allocation5 [shape = 's32[2]{0}', space=sflag, size = 0x8, scoped, tag = 'scoped memory for fouri_down_forward.2']
    #allocation6 [shape = 'u8[16384]{0}', space=vmem, size = 0x4000, scoped, tag = 'output window, operand 0']
    #allocation7 [shape = 'u8[16384]{0}', space=vmem, size = 0x4000, scoped, tag = 'output window, operand 1']
    %10 = vsyncpa [#allocation5], 0
    loop: start=0, step=1, limit=6
    $region2: #{fouri_down_forward.2} parent=1 // loop_pre_header
      _
    $region3: #{fouri_down_forward.2} parent=1 // loop_header
      %s12 = sphi 0, %s16
      %p13 = scmp.ge.s32.totalorder %s12, 6
      %s19 = sphi 0, %s31
      %s20 = sphi 0, %s27
      %s21 = sphi 0, %s19
      %s22 = sphi 0, %s20
      %s23 = sphi 0, %s21
      %s24 = sphi 0, %s22
      %s36 = sphi 0, %s38
      %s39 = sphi 0, %s36
      %s40 = sphi 0, %s39
      %s56 = sphi 0, %s40
      %s64 = sphi 0, %s66
      %s67 = sphi 0, %s64
      %s68 = sphi 0, %s67
      %s84 = sphi 0, %s68
      %s88 = sphi 0, %s88
      %s90 = sphi 0, %s88
      %s91 = sphi 0, %s90
      %s105 = sphi 0, %s91
      %s113 = sphi 0, %s115
      %s116 = sphi 0, %s113
      %s117 = sphi 0, %s116
      %s133 = sphi 0, %s117
      %s141 = sphi 0, %s143
      %s144 = sphi 0, %s141
      %s145 = sphi 0, %s144
      %s161 = sphi 0, %s145
    $region4: #{fouri_down_forward.2} parent=1 // loop_header_branch
      %15 = sbr.rel (%p13) target = $region8
    $region5: #{fouri_down_forward.2} parent=1 // loop_body
      %s17 = ssub.s32 %s12, 1
      %s18 = ssub.s32 %s12, 2
      %s25 = sadd.s32 1, %s20
      %p26 = scmp.ge.s32.totalorder %s25, 1
      %s27 = scalar_select %p26, 0, %s25
      %s28 = sadd.s32 1, %s19
      %s29 = scalar_select %p26, %s28, %s19
      %p30 = scmp.ge.s32.totalorder %s29, 4
      %s31 = scalar_select %p30, 0, %s29
      %s32 = ssub.s32 %s19, %s31
      %s33 = ssub.s32 %s20, %s27
      %s34 = sor.u32 %s32, %s33
      %p35 = scmp.eq.s32.totalorder %s34, 0
      %s37 = sadd.s32 %s36, 1
      %s38 = scalar_select %p35, %s36, %s37
      %p41 = pneg %p35
      %p42 = scmp.eq.s32.totalorder %s12, 3
      %p43 = por %p41, %p42
      %p44 = scmp.ne.s32.totalorder %s36, %s39
      %p45 = scmp.eq.s32.totalorder %s12, 0
      %p46 = por %p44, %p45
      %p47 = scmp.ne.s32.totalorder %s36, %s39
      %p48 = scmp.eq.s32.totalorder %s17, 3
      %p49 = por %p47, %p48
      %p50 = scmp.ne.s32.totalorder %s39, %s40
      %p51 = scmp.eq.s32.totalorder %s17, 0
      %p52 = por %p50, %p51
      %p53 = scmp.ne.s32.totalorder %s39, %s40
      %p54 = scmp.eq.s32.totalorder %s18, 3
      %p55 = por %p53, %p54
      %p57 = scmp.ne.s32.totalorder %s40, %s56
      %p58 = scmp.eq.s32.totalorder %s18, 0
      %p59 = por %p57, %p58
      %s60 = ssub.s32 %s19, %s31
      %s61 = ssub.s32 %s20, %s27
      %s62 = sor.u32 %s60, %s61
      %p63 = scmp.eq.s32.totalorder %s62, 0
      %s65 = sadd.s32 %s64, 1
      %s66 = scalar_select %p63, %s64, %s65
      %p69 = pneg %p63
      %p70 = scmp.eq.s32.totalorder %s12, 3
      %p71 = por %p69, %p70
      %p72 = scmp.ne.s32.totalorder %s64, %s67
      %p73 = scmp.eq.s32.totalorder %s12, 0
      %p74 = por %p72, %p73
      %p75 = scmp.ne.s32.totalorder %s64, %s67
      %p76 = scmp.eq.s32.totalorder %s17, 3
      %p77 = por %p75, %p76
      %p78 = scmp.ne.s32.totalorder %s67, %s68
      %p79 = scmp.eq.s32.totalorder %s17, 0
      %p80 = por %p78, %p79
      %p81 = scmp.ne.s32.totalorder %s67, %s68
      %p82 = scmp.eq.s32.totalorder %s18, 3
      %p83 = por %p81, %p82
      %p85 = scmp.ne.s32.totalorder %s68, %s84
      %p86 = scmp.eq.s32.totalorder %s18, 0
      %p87 = por %p85, %p86
      %s89 = sadd.s32 %s88, 1
      %p92 = scmp.eq.s32.totalorder %s12, 3
      %p93 = scmp.ne.s32.totalorder %s88, %s90
      %p94 = scmp.eq.s32.totalorder %s12, 0
      %p95 = por %p93, %p94
      %p96 = scmp.ne.s32.totalorder %s88, %s90
      %p97 = scmp.eq.s32.totalorder %s17, 3
      %p98 = por %p96, %p97
      %p99 = scmp.ne.s32.totalorder %s90, %s91
      %p100 = scmp.eq.s32.totalorder %s17, 0
      %p101 = por %p99, %p100
      %p102 = scmp.ne.s32.totalorder %s90, %s91
      %p103 = scmp.eq.s32.totalorder %s18, 3
      %p104 = por %p102, %p103
      %p106 = scmp.ne.s32.totalorder %s91, %s105
      %p107 = scmp.eq.s32.totalorder %s18, 0
      %p108 = por %p106, %p107
      %s109 = ssub.s32 %s19, %s31
      %s110 = ssub.s32 %s20, %s27
      %s111 = sor.u32 %s109, %s110
      %p112 = scmp.eq.s32.totalorder %s111, 0
      %s114 = sadd.s32 %s113, 1
      %s115 = scalar_select %p112, %s113, %s114
      %p118 = pneg %p112
      %p119 = scmp.eq.s32.totalorder %s12, 3
      %p120 = por %p118, %p119
      %p121 = scmp.ne.s32.totalorder %s113, %s116
      %p122 = scmp.eq.s32.totalorder %s12, 0
      %p123 = por %p121, %p122
      %p124 = scmp.ne.s32.totalorder %s113, %s116
      %p125 = scmp.eq.s32.totalorder %s17, 3
      %p126 = por %p124, %p125
      %p127 = scmp.ne.s32.totalorder %s116, %s117
      %p128 = scmp.eq.s32.totalorder %s17, 0
      %p129 = por %p127, %p128
      %p130 = scmp.ne.s32.totalorder %s116, %s117
      %p131 = scmp.eq.s32.totalorder %s18, 3
      %p132 = por %p130, %p131
      %p134 = scmp.ne.s32.totalorder %s117, %s133
      %p135 = scmp.eq.s32.totalorder %s18, 0
      %p136 = por %p134, %p135
      %s137 = ssub.s32 %s19, %s31
      %s138 = ssub.s32 %s20, %s27
      %s139 = sor.u32 %s137, %s138
      %p140 = scmp.eq.s32.totalorder %s139, 0
      %s142 = sadd.s32 %s141, 1
      %s143 = scalar_select %p140, %s141, %s142
      %p146 = pneg %p140
      %p147 = scmp.eq.s32.totalorder %s12, 3
      %p148 = por %p146, %p147
      %p149 = scmp.ne.s32.totalorder %s141, %s144
      %p150 = scmp.eq.s32.totalorder %s12, 0
      %p151 = por %p149, %p150
      %p152 = scmp.ne.s32.totalorder %s141, %s144
      %p153 = scmp.eq.s32.totalorder %s17, 3
      %p154 = por %p152, %p153
      %p155 = scmp.ne.s32.totalorder %s144, %s145
      %p156 = scmp.eq.s32.totalorder %s17, 0
      %p157 = por %p155, %p156
      %p158 = scmp.ne.s32.totalorder %s144, %s145
      %p159 = scmp.eq.s32.totalorder %s18, 3
      %p160 = por %p158, %p159
      %p162 = scmp.ne.s32.totalorder %s145, %s161
      %p163 = scmp.eq.s32.totalorder %s18, 0
      %p164 = por %p162, %p163
      %p165 = scmp.le.s32.totalorder 1, %s12
      %p166 = scmp.lt.s32.totalorder %s12, 5
      %p167 = pnand %p165, %p166
      %p168 = pneg %p167
      // Predicated region
      $region9: #{fouri_down_forward.2} parent=5 // pred_check
        _
      $region10: #{fouri_down_forward.2} parent=5 // pred_check_branch
        %170 = sbr.rel (%p167) target = $region12
      $region11: #{fouri_down_forward.2} parent=5 // pred_region
        %s171 = ssub.s32 %s12, 1
        // Predicated region
        $region13: #{fouri_down_forward.2} parent=11 // pred_check
          %p172 = pneg %p101
        $region14: #{fouri_down_forward.2} parent=11 // pred_check_branch
          %174 = sbr.rel (%p172) target = $region16
        $region15: #{fouri_down_forward.2} parent=11 // pred_region
          %176 = vsyncadd [#allocation5], 0
          %s178 = sshll.u32 %s2, 4
          %s179 = int_to_ptr.vmem [resolvable:$true] %s178
          %181 = dma.vmem_to_smem %s179, 64, [#allocation4], [#allocation5]
        $region16: #{fouri_down_forward.2} parent=11 // pred_fallthru
          _
      $region12: #{fouri_down_forward.2} parent=5 // pred_fallthru
        _
      %p182 = scmp.lt.s32.totalorder %s12, 4
      // Predicated region
      $region17: #{fouri_down_forward.2} parent=5 // pred_check
        %p183 = pneg %p182
      $region18: #{fouri_down_forward.2} parent=5 // pred_check_branch
        %185 = sbr.rel (%p183) target = $region20
      $region19: #{fouri_down_forward.2} parent=5 // pred_region
        // Predicated region
        $region21: #{fouri_down_forward.2} parent=19 // pred_check
          %p186 = pneg %p46
        $region22: #{fouri_down_forward.2} parent=19 // pred_check_branch
          %188 = sbr.rel (%p186) target = $region24
        $region23: #{fouri_down_forward.2} parent=19 // pred_region
          %s189 = sand.u32 %s36, 1
          %s190 = sand.u32 %s36, 1
          %s191 = smul.addr %s190, 64
          %s192 = scalar_lea.vmem [#allocation2], %s191
          %s193 = smul.addr %s19, 4
          %s194 = sadd.s32 %s20, %s193
          %s195 = smul.addr %s194, 8
          %s196 = scalar_lea.vmem %s0, %s195
          // Predicated region
          $region25: #{fouri_down_forward.2} parent=23 // pred_check
            _
          $region26: #{fouri_down_forward.2} parent=23 // pred_check_branch
            %198 = sbr.rel (0) target = $region28
          $region27: #{fouri_down_forward.2} parent=23 // pred_region
            // Predicated region
            $region29: #{fouri_down_forward.2} parent=27 // pred_check
              _
            $region30: #{fouri_down_forward.2} parent=27 // pred_check_branch
              %200 = sbr.rel (0) target = $region32
            $region31: #{fouri_down_forward.2} parent=27 // pred_region
              // Predicated region
              $region44: #{fouri_down_forward.2} parent=31 // pred_check
                _
              $region45: #{fouri_down_forward.2} parent=31 // pred_check_branch
                %230 = sbr.rel (0) target = $region47
              $region46: #{fouri_down_forward.2} parent=31 // pred_region
                loop: start=0, step=1, limit=1
                $region48: #{fouri_down_forward.2} parent=46 // loop_pre_header
                  _
                $region49: #{fouri_down_forward.2} parent=46 // loop_header
                  %s232 = sphi 0, %s236
                  %p233 = scmp.ge.s32.totalorder %s232, 1
                  %s237 = sphi %s196, %s196
                  %s238 = sphi %s192, %s192
                $region50: #{fouri_down_forward.2} parent=46 // loop_header_branch
                  %235 = sbr.rel (%p233) target = $region54
                $region51: #{fouri_down_forward.2} parent=46 // loop_body
                  %v239 = vld [vmem:[%s237] sm:$0xff]
                  %240 = vst [vmem:[%s238] sm:$0xff] %v239
                  %v241 = vld [vmem:[%s237 + $0x8] sm:$0xff]
                  %242 = vst [vmem:[%s238 + $0x8] sm:$0xff] %v241
                  %v243 = vld [vmem:[%s237 + $0x10] sm:$0xff]
                  %244 = vst [vmem:[%s238 + $0x10] sm:$0xff] %v243
                  %v245 = vld [vmem:[%s237 + $0x18] sm:$0xff]
                  %246 = vst [vmem:[%s238 + $0x18] sm:$0xff] %v245
                  %v247 = vld [vmem:[%s237 + $0x80] sm:$0xff]
                  %248 = vst [vmem:[%s238 + $0x20] sm:$0xff] %v247
                  %v249 = vld [vmem:[%s237 + $0x88] sm:$0xff]
                  %250 = vst [vmem:[%s238 + $0x28] sm:$0xff] %v249
                  %v251 = vld [vmem:[%s237 + $0x90] sm:$0xff]
                  %252 = vst [vmem:[%s238 + $0x30] sm:$0xff] %v251
                  %v253 = vld [vmem:[%s237 + $0x98] sm:$0xff]
                  %254 = vst [vmem:[%s238 + $0x38] sm:$0xff] %v253
                $region52: #{fouri_down_forward.2} parent=46 // loop_footer
                  %s236 = sadd.s32 1, %s232
                $region53: #{fouri_down_forward.2} parent=46 // loop_footer_branch
                  %231 = sbr.rel target = $region49
                $region54: #{fouri_down_forward.2} parent=46 // loop_exit
                  _
              $region47: #{fouri_down_forward.2} parent=31 // pred_fallthru
                _
              // Predicated region
              $region55: #{fouri_down_forward.2} parent=31 // pred_check
                _
              $region56: #{fouri_down_forward.2} parent=31 // pred_check_branch
                %256 = sbr.rel target = $region58
              $region57: #{fouri_down_forward.2} parent=31 // pred_region
                _
              $region58: #{fouri_down_forward.2} parent=31 // pred_fallthru
                _
            $region32: #{fouri_down_forward.2} parent=27 // pred_fallthru
              _
            // Predicated region
            $region33: #{fouri_down_forward.2} parent=27 // pred_check
              _
            $region34: #{fouri_down_forward.2} parent=27 // pred_check_branch
              %202 = sbr.rel target = $region36
            $region35: #{fouri_down_forward.2} parent=27 // pred_region
              %s204 = ssub.s32 256, 1
              loop: start=0, step=1, limit=1
              $region37: #{fouri_down_forward.2} parent=35 // loop_pre_header
                _
              $region38: #{fouri_down_forward.2} parent=35 // loop_header
                %s206 = sphi 0, %s210
                %p207 = scmp.ge.s32.totalorder %s206, 1
                %s211 = sphi %s196, %s196
                %s212 = sphi %s192, %s192
              $region39: #{fouri_down_forward.2} parent=35 // loop_header_branch
                %209 = sbr.rel (%p207) target = $region43
              $region40: #{fouri_down_forward.2} parent=35 // loop_body
                %v213 = vld [vmem:[%s211] sm:%s204]
                %214 = vst [vmem:[%s212] sm:%s204] %v213
                %v215 = vld [vmem:[%s211 + $0x8] sm:%s204]
                %216 = vst [vmem:[%s212 + $0x8] sm:%s204] %v215
                %v217 = vld [vmem:[%s211 + $0x10] sm:%s204]
                %218 = vst [vmem:[%s212 + $0x10] sm:%s204] %v217
                %v219 = vld [vmem:[%s211 + $0x18] sm:%s204]
                %220 = vst [vmem:[%s212 + $0x18] sm:%s204] %v219
                %v221 = vld [vmem:[%s211 + $0x80] sm:%s204]
                %222 = vst [vmem:[%s212 + $0x20] sm:%s204] %v221
                %v223 = vld [vmem:[%s211 + $0x88] sm:%s204]
                %224 = vst [vmem:[%s212 + $0x28] sm:%s204] %v223
                %v225 = vld [vmem:[%s211 + $0x90] sm:%s204]
                %226 = vst [vmem:[%s212 + $0x30] sm:%s204] %v225
                %v227 = vld [vmem:[%s211 + $0x98] sm:%s204]
                %228 = vst [vmem:[%s212 + $0x38] sm:%s204] %v227
              $region41: #{fouri_down_forward.2} parent=35 // loop_footer
                %s210 = sadd.s32 1, %s206
              $region42: #{fouri_down_forward.2} parent=35 // loop_footer_branch
                %205 = sbr.rel target = $region38
              $region43: #{fouri_down_forward.2} parent=35 // loop_exit
                _
            $region36: #{fouri_down_forward.2} parent=27 // pred_fallthru
              _
          $region28: #{fouri_down_forward.2} parent=23 // pred_fallthru
            _
          %257 = vnop
        $region24: #{fouri_down_forward.2} parent=19 // pred_fallthru
          _
        // Predicated region
        $region59: #{fouri_down_forward.2} parent=19 // pred_check
          %p258 = pneg %p74
        $region60: #{fouri_down_forward.2} parent=19 // pred_check_branch
          %260 = sbr.rel (%p258) target = $region62
        $region61: #{fouri_down_forward.2} parent=19 // pred_region
          %s261 = sand.u32 %s64, 1
          %s262 = sand.u32 %s64, 1
          %s263 = smul.addr %s262, 64
          %s264 = scalar_lea.vmem [#allocation3], %s263
          %s265 = smul.addr %s19, 4
          %s266 = sadd.s32 %s20, %s265
          %s267 = smul.addr %s266, 8
          %s268 = scalar_lea.vmem %s1, %s267
          // Predicated region
          $region63: #{fouri_down_forward.2} parent=61 // pred_check
            _
          $region64: #{fouri_down_forward.2} parent=61 // pred_check_branch
            %270 = sbr.rel (0) target = $region66
          $region65: #{fouri_down_forward.2} parent=61 // pred_region
            // Predicated region
            $region67: #{fouri_down_forward.2} parent=65 // pred_check
              _
            $region68: #{fouri_down_forward.2} parent=65 // pred_check_branch
              %272 = sbr.rel (0) target = $region70
            $region69: #{fouri_down_forward.2} parent=65 // pred_region
              // Predicated region
              $region82: #{fouri_down_forward.2} parent=69 // pred_check
                _
              $region83: #{fouri_down_forward.2} parent=69 // pred_check_branch
                %302 = sbr.rel (0) target = $region85
              $region84: #{fouri_down_forward.2} parent=69 // pred_region
                loop: start=0, step=1, limit=1
                $region86: #{fouri_down_forward.2} parent=84 // loop_pre_header
                  _
                $region87: #{fouri_down_forward.2} parent=84 // loop_header
                  %s304 = sphi 0, %s308
                  %p305 = scmp.ge.s32.totalorder %s304, 1
                  %s309 = sphi %s268, %s268
                  %s310 = sphi %s264, %s264
                $region88: #{fouri_down_forward.2} parent=84 // loop_header_branch
                  %307 = sbr.rel (%p305) target = $region92
                $region89: #{fouri_down_forward.2} parent=84 // loop_body
                  %v311 = vld [vmem:[%s309] sm:$0xff]
                  %312 = vst [vmem:[%s310] sm:$0xff] %v311
                  %v313 = vld [vmem:[%s309 + $0x8] sm:$0xff]
                  %314 = vst [vmem:[%s310 + $0x8] sm:$0xff] %v313
                  %v315 = vld [vmem:[%s309 + $0x10] sm:$0xff]
                  %316 = vst [vmem:[%s310 + $0x10] sm:$0xff] %v315
                  %v317 = vld [vmem:[%s309 + $0x18] sm:$0xff]
                  %318 = vst [vmem:[%s310 + $0x18] sm:$0xff] %v317
                  %v319 = vld [vmem:[%s309 + $0x80] sm:$0xff]
                  %320 = vst [vmem:[%s310 + $0x20] sm:$0xff] %v319
                  %v321 = vld [vmem:[%s309 + $0x88] sm:$0xff]
                  %322 = vst [vmem:[%s310 + $0x28] sm:$0xff] %v321
                  %v323 = vld [vmem:[%s309 + $0x90] sm:$0xff]
                  %324 = vst [vmem:[%s310 + $0x30] sm:$0xff] %v323
                  %v325 = vld [vmem:[%s309 + $0x98] sm:$0xff]
                  %326 = vst [vmem:[%s310 + $0x38] sm:$0xff] %v325
                $region90: #{fouri_down_forward.2} parent=84 // loop_footer
                  %s308 = sadd.s32 1, %s304
                $region91: #{fouri_down_forward.2} parent=84 // loop_footer_branch
                  %303 = sbr.rel target = $region87
                $region92: #{fouri_down_forward.2} parent=84 // loop_exit
                  _
              $region85: #{fouri_down_forward.2} parent=69 // pred_fallthru
                _
              // Predicated region
              $region93: #{fouri_down_forward.2} parent=69 // pred_check
                _
              $region94: #{fouri_down_forward.2} parent=69 // pred_check_branch
                %328 = sbr.rel target = $region96
              $region95: #{fouri_down_forward.2} parent=69 // pred_region
                _
              $region96: #{fouri_down_forward.2} parent=69 // pred_fallthru
                _
            $region70: #{fouri_down_forward.2} parent=65 // pred_fallthru
              _
            // Predicated region
            $region71: #{fouri_down_forward.2} parent=65 // pred_check
              _
            $region72: #{fouri_down_forward.2} parent=65 // pred_check_branch
              %274 = sbr.rel target = $region74
            $region73: #{fouri_down_forward.2} parent=65 // pred_region
              %s276 = ssub.s32 256, 1
              loop: start=0, step=1, limit=1
              $region75: #{fouri_down_forward.2} parent=73 // loop_pre_header
                _
              $region76: #{fouri_down_forward.2} parent=73 // loop_header
                %s278 = sphi 0, %s282
                %p279 = scmp.ge.s32.totalorder %s278, 1
                %s283 = sphi %s268, %s268
                %s284 = sphi %s264, %s264
              $region77: #{fouri_down_forward.2} parent=73 // loop_header_branch
                %281 = sbr.rel (%p279) target = $region81
              $region78: #{fouri_down_forward.2} parent=73 // loop_body
                %v285 = vld [vmem:[%s283] sm:%s276]
                %286 = vst [vmem:[%s284] sm:%s276] %v285
                %v287 = vld [vmem:[%s283 + $0x8] sm:%s276]
                %288 = vst [vmem:[%s284 + $0x8] sm:%s276] %v287
                %v289 = vld [vmem:[%s283 + $0x10] sm:%s276]
                %290 = vst [vmem:[%s284 + $0x10] sm:%s276] %v289
                %v291 = vld [vmem:[%s283 + $0x18] sm:%s276]
                %292 = vst [vmem:[%s284 + $0x18] sm:%s276] %v291
                %v293 = vld [vmem:[%s283 + $0x80] sm:%s276]
                %294 = vst [vmem:[%s284 + $0x20] sm:%s276] %v293
                %v295 = vld [vmem:[%s283 + $0x88] sm:%s276]
                %296 = vst [vmem:[%s284 + $0x28] sm:%s276] %v295
                %v297 = vld [vmem:[%s283 + $0x90] sm:%s276]
                %298 = vst [vmem:[%s284 + $0x30] sm:%s276] %v297
                %v299 = vld [vmem:[%s283 + $0x98] sm:%s276]
                %300 = vst [vmem:[%s284 + $0x38] sm:%s276] %v299
              $region79: #{fouri_down_forward.2} parent=73 // loop_footer
                %s282 = sadd.s32 1, %s278
              $region80: #{fouri_down_forward.2} parent=73 // loop_footer_branch
                %277 = sbr.rel target = $region76
              $region81: #{fouri_down_forward.2} parent=73 // loop_exit
                _
            $region74: #{fouri_down_forward.2} parent=65 // pred_fallthru
              _
          $region66: #{fouri_down_forward.2} parent=61 // pred_fallthru
            _
          %329 = vnop
        $region62: #{fouri_down_forward.2} parent=19 // pred_fallthru
          _
      $region20: #{fouri_down_forward.2} parent=5 // pred_fallthru
        _
      %p330 = scmp.le.s32.totalorder 1, %s12
      %p331 = scmp.lt.s32.totalorder %s12, 5
      %p332 = pnand %p330, %p331
      %p333 = pneg %p332
      // Predicated region
      $region97: #{fouri_down_forward.2} parent=5 // pred_check
        _
      $region98: #{fouri_down_forward.2} parent=5 // pred_check_branch
        %335 = sbr.rel (%p332) target = $region100
      $region99: #{fouri_down_forward.2} parent=5 // pred_region
        %s336 = ssub.s32 %s12, 1
        %s337 = sand.u32 %s39, 1
        %s338 = sand.u32 %s39, 1
        %s339 = smul.addr %s338, 64
        %s340 = scalar_lea.vmem [#allocation2], %s339
        // Predicated region
        $region101: #{fouri_down_forward.2} parent=99 // pred_check
          %p341 = pneg %p52
        $region102: #{fouri_down_forward.2} parent=99 // pred_check_branch
          %343 = sbr.rel (%p341) target = $region104
        $region103: #{fouri_down_forward.2} parent=99 // pred_region
          _
        $region104: #{fouri_down_forward.2} parent=99 // pred_fallthru
          _
        %s344 = sand.u32 %s67, 1
        %s345 = sand.u32 %s67, 1
        %s346 = smul.addr %s345, 64
        %s347 = scalar_lea.vmem [#allocation3], %s346
        // Predicated region
        $region105: #{fouri_down_forward.2} parent=99 // pred_check
          %p348 = pneg %p80
        $region106: #{fouri_down_forward.2} parent=99 // pred_check_branch
          %350 = sbr.rel (%p348) target = $region108
        $region107: #{fouri_down_forward.2} parent=99 // pred_region
          _
        $region108: #{fouri_down_forward.2} parent=99 // pred_fallthru
          _
        // Predicated region
        $region109: #{fouri_down_forward.2} parent=99 // pred_check
          %p351 = pneg %p101
        $region110: #{fouri_down_forward.2} parent=99 // pred_check_branch
          %353 = sbr.rel (%p351) target = $region112
        $region111: #{fouri_down_forward.2} parent=99 // pred_region
          %355 = dma.done [#allocation5], 64
        $region112: #{fouri_down_forward.2} parent=99 // pred_fallthru
          _
        %356 = sfence
        %s357 = sand.u32 %s39, 1
        %s358 = sand.u32 %s39, 1
        %s359 = smul.addr %s358, 64
        %s360 = scalar_lea.vmem [#allocation2], %s359
        %p361 = pneg %p52
        %p362 = pneg %p49
        %s363 = sand.u32 %s67, 1
        %s364 = sand.u32 %s67, 1
        %s365 = smul.addr %s364, 64
        %s366 = scalar_lea.vmem [#allocation3], %s365
        %p367 = pneg %p80
        %p368 = pneg %p77
        %p369 = pneg %p101
        %p370 = pneg %p98
        %p371 = pneg %p129
        %p372 = pneg %p126
        %s373 = sand.u32 %s116, 1
        %s374 = sand.u32 %s116, 1
        %s375 = smul.addr %s374, 16
        %s376 = scalar_lea.vmem [#allocation6], %s375
        %p377 = pneg %p157
        %p378 = pneg %p154
        %s379 = sand.u32 %s144, 1
        %s380 = sand.u32 %s144, 1
        %s381 = smul.addr %s380, 16
        %s382 = scalar_lea.vmem [#allocation7], %s381
        %v383 = vld [vmem:[%s340] sm:$0xff]
        %v384 = vld [vmem:[%s340 + $0x20] sm:$0xff]
        %s385 = scalar_lea.vmem %s340, 8 [#allocation2]
        %v386 = vld [vmem:[%s385] sm:$0xff]
        %v387 = vld [vmem:[%s385 + $0x20] sm:$0xff]
        %s388 = scalar_lea.vmem %s340, 16 [#allocation2]
        %v389 = vld [vmem:[%s388] sm:$0xff]
        %v390 = vld [vmem:[%s388 + $0x20] sm:$0xff]
        %s391 = scalar_lea.vmem %s340, 24 [#allocation2]
        %v392 = vld [vmem:[%s391] sm:$0xff]
        %v393 = vld [vmem:[%s391 + $0x20] sm:$0xff]
        %v394 = vld [vmem:[%s347] sm:$0xff]
        %v395 = vld [vmem:[%s347 + $0x20] sm:$0xff]
        %s396 = scalar_lea.vmem %s347, 8 [#allocation3]
        %v397 = vld [vmem:[%s396] sm:$0xff]
        %v398 = vld [vmem:[%s396 + $0x20] sm:$0xff]
        %s399 = scalar_lea.vmem %s347, 16 [#allocation3]
        %v400 = vld [vmem:[%s399] sm:$0xff]
        %v401 = vld [vmem:[%s399 + $0x20] sm:$0xff]
        %s402 = scalar_lea.vmem %s347, 24 [#allocation3]
        %v403 = vld [vmem:[%s402] sm:$0xff]
        %v404 = vld [vmem:[%s402 + $0x20] sm:$0xff]
        %s405 = smul.u32 %s21, 128
        %s406 = sld [smem:[#allocation4 + %s405]]
        %v407 = vstv %s406
        %v408 = vmul.f32 %v383, %v407
        %v409 = vmul.f32 %v384, %v407
        %s410 = sadd.s32 %s405, 1
        %s411 = sld [smem:[#allocation4 + %s410]]
        %v412 = vstv %s411
        %v413 = vmul.f32 %v386, %v412
        %v414 = vmul.f32 %v387, %v412
        %v415 = vadd.f32 %v408, %v413
        %v416 = vadd.f32 %v409, %v414
        %s417 = sadd.s32 %s405, 2
        %s418 = sld [smem:[#allocation4 + %s417]]
        %v419 = vstv %s418
        %v420 = vmul.f32 %v389, %v419
        %v421 = vmul.f32 %v390, %v419
        %v422 = vadd.f32 %v415, %v420
        %v423 = vadd.f32 %v416, %v421
        %s424 = sadd.s32 %s405, 3
        %s425 = sld [smem:[#allocation4 + %s424]]
        %v426 = vstv %s425
        %v427 = vmul.f32 %v392, %v426
        %v428 = vmul.f32 %v393, %v426
        %v429 = vadd.f32 %v422, %v427
        %v430 = vadd.f32 %v423, %v428
        %s431 = sadd.s32 %s405, 16
        %s432 = sld [smem:[#allocation4 + %s431]]
        %v433 = vstv %s432
        %v434 = vadd.f32 %v429, %v433
        %v435 = vadd.f32 %v430, %v433
        %s436 = sadd.s32 %s405, 4
        %s437 = sld [smem:[#allocation4 + %s436]]
        %v438 = vstv %s437
        %v439 = vmul.f32 %v383, %v438
        %v440 = vmul.f32 %v384, %v438
        %s441 = sadd.s32 %s405, 5
        %s442 = sld [smem:[#allocation4 + %s441]]
        %v443 = vstv %s442
        %v444 = vmul.f32 %v386, %v443
        %v445 = vmul.f32 %v387, %v443
        %v446 = vadd.f32 %v439, %v444
        %v447 = vadd.f32 %v440, %v445
        %s448 = sadd.s32 %s405, 6
        %s449 = sld [smem:[#allocation4 + %s448]]
        %v450 = vstv %s449
        %v451 = vmul.f32 %v389, %v450
        %v452 = vmul.f32 %v390, %v450
        %v453 = vadd.f32 %v446, %v451
        %v454 = vadd.f32 %v447, %v452
        %s455 = sadd.s32 %s405, 7
        %s456 = sld [smem:[#allocation4 + %s455]]
        %v457 = vstv %s456
        %v458 = vmul.f32 %v392, %v457
        %v459 = vmul.f32 %v393, %v457
        %v460 = vadd.f32 %v453, %v458
        %v461 = vadd.f32 %v454, %v459
        %s462 = sadd.s32 %s405, 17
        %s463 = sld [smem:[#allocation4 + %s462]]
        %v464 = vstv %s463
        %v465 = vadd.f32 %v460, %v464
        %v466 = vadd.f32 %v461, %v464
        %s467 = sadd.s32 %s405, 8
        %s468 = sld [smem:[#allocation4 + %s467]]
        %v469 = vstv %s468
        %v470 = vmul.f32 %v383, %v469
        %v471 = vmul.f32 %v384, %v469
        %s472 = sadd.s32 %s405, 9
        %s473 = sld [smem:[#allocation4 + %s472]]
        %v474 = vstv %s473
        %v475 = vmul.f32 %v386, %v474
        %v476 = vmul.f32 %v387, %v474
        %v477 = vadd.f32 %v470, %v475
        %v478 = vadd.f32 %v471, %v476
        %s479 = sadd.s32 %s405, 10
        %s480 = sld [smem:[#allocation4 + %s479]]
        %v481 = vstv %s480
        %v482 = vmul.f32 %v389, %v481
        %v483 = vmul.f32 %v390, %v481
        %v484 = vadd.f32 %v477, %v482
        %v485 = vadd.f32 %v478, %v483
        %s486 = sadd.s32 %s405, 11
        %s487 = sld [smem:[#allocation4 + %s486]]
        %v488 = vstv %s487
        %v489 = vmul.f32 %v392, %v488
        %v490 = vmul.f32 %v393, %v488
        %v491 = vadd.f32 %v484, %v489
        %v492 = vadd.f32 %v485, %v490
        %s493 = sadd.s32 %s405, 18
        %s494 = sld [smem:[#allocation4 + %s493]]
        %v495 = vstv %s494
        %v496 = vadd.f32 %v491, %v495
        %v497 = vadd.f32 %v492, %v495
        %s498 = sadd.s32 %s405, 12
        %s499 = sld [smem:[#allocation4 + %s498]]
        %v500 = vstv %s499
        %v501 = vmul.f32 %v383, %v500
        %v502 = vmul.f32 %v384, %v500
        %s503 = sadd.s32 %s405, 13
        %s504 = sld [smem:[#allocation4 + %s503]]
        %v505 = vstv %s504
        %v506 = vmul.f32 %v386, %v505
        %v507 = vmul.f32 %v387, %v505
        %v508 = vadd.f32 %v501, %v506
        %v509 = vadd.f32 %v502, %v507
        %s510 = sadd.s32 %s405, 14
        %s511 = sld [smem:[#allocation4 + %s510]]
        %v512 = vstv %s511
        %v513 = vmul.f32 %v389, %v512
        %v514 = vmul.f32 %v390, %v512
        %v515 = vadd.f32 %v508, %v513
        %v516 = vadd.f32 %v509, %v514
        %s517 = sadd.s32 %s405, 15
        %s518 = sld [smem:[#allocation4 + %s517]]
        %v519 = vstv %s518
        %v520 = vmul.f32 %v392, %v519
        %v521 = vmul.f32 %v393, %v519
        %v522 = vadd.f32 %v515, %v520
        %v523 = vadd.f32 %v516, %v521
        %s524 = sadd.s32 %s405, 19
        %s525 = sld [smem:[#allocation4 + %s524]]
        %v526 = vstv %s525
        %v527 = vadd.f32 %v522, %v526
        %v528 = vadd.f32 %v523, %v526
        %vm529 = vcmp.gt.f32.partialorder %v434, 0.0
        %vm530 = vcmp.gt.f32.partialorder %v435, 0.0
        %v531 = vmul.f32 %v434, 0.1
        %v532 = vmul.f32 %v435, 0.1
        %v533 = vsel %vm529, %v434, %v531
        %v534 = vsel %vm530, %v435, %v532
        %vm535 = vcmp.gt.f32.partialorder %v465, 0.0
        %vm536 = vcmp.gt.f32.partialorder %v466, 0.0
        %v537 = vmul.f32 %v465, 0.1
        %v538 = vmul.f32 %v466, 0.1
        %v539 = vsel %vm535, %v465, %v537
        %v540 = vsel %vm536, %v466, %v538
        %vm541 = vcmp.gt.f32.partialorder %v496, 0.0
        %vm542 = vcmp.gt.f32.partialorder %v497, 0.0
        %v543 = vmul.f32 %v496, 0.1
        %v544 = vmul.f32 %v497, 0.1
        %v545 = vsel %vm541, %v496, %v543
        %v546 = vsel %vm542, %v497, %v544
        %vm547 = vcmp.gt.f32.partialorder %v527, 0.0
        %vm548 = vcmp.gt.f32.partialorder %v528, 0.0
        %v549 = vmul.f32 %v527, 0.1
        %v550 = vmul.f32 %v528, 0.1
        %v551 = vsel %vm547, %v527, %v549
        %v552 = vsel %vm548, %v528, %v550
        %s553 = sadd.s32 %s405, 20
        %s554 = sld [smem:[#allocation4 + %s553]]
        %v555 = vstv %s554
        %v556 = vmul.f32 %v533, %v555
        %v557 = vmul.f32 %v534, %v555
        %s558 = sadd.s32 %s405, 21
        %s559 = sld [smem:[#allocation4 + %s558]]
        %v560 = vstv %s559
        %v561 = vmul.f32 %v539, %v560
        %v562 = vmul.f32 %v540, %v560
        %v563 = vadd.f32 %v556, %v561
        %v564 = vadd.f32 %v557, %v562
        %s565 = sadd.s32 %s405, 22
        %s566 = sld [smem:[#allocation4 + %s565]]
        %v567 = vstv %s566
        %v568 = vmul.f32 %v545, %v567
        %v569 = vmul.f32 %v546, %v567
        %v570 = vadd.f32 %v563, %v568
        %v571 = vadd.f32 %v564, %v569
        %s572 = sadd.s32 %s405, 23
        %s573 = sld [smem:[#allocation4 + %s572]]
        %v574 = vstv %s573
        %v575 = vmul.f32 %v551, %v574
        %v576 = vmul.f32 %v552, %v574
        %v577 = vadd.f32 %v570, %v575
        %v578 = vadd.f32 %v571, %v576
        %s579 = sadd.s32 %s405, 36
        %s580 = sld [smem:[#allocation4 + %s579]]
        %v581 = vstv %s580
        %v582 = vadd.f32 %v577, %v581
        %v583 = vadd.f32 %v578, %v581
        %s584 = sadd.s32 %s405, 24
        %s585 = sld [smem:[#allocation4 + %s584]]
        %v586 = vstv %s585
        %v587 = vmul.f32 %v533, %v586
        %v588 = vmul.f32 %v534, %v586
        %s589 = sadd.s32 %s405, 25
        %s590 = sld [smem:[#allocation4 + %s589]]
        %v591 = vstv %s590
        %v592 = vmul.f32 %v539, %v591
        %v593 = vmul.f32 %v540, %v591
        %v594 = vadd.f32 %v587, %v592
        %v595 = vadd.f32 %v588, %v593
        %s596 = sadd.s32 %s405, 26
        %s597 = sld [smem:[#allocation4 + %s596]]
        %v598 = vstv %s597
        %v599 = vmul.f32 %v545, %v598
        %v600 = vmul.f32 %v546, %v598
        %v601 = vadd.f32 %v594, %v599
        %v602 = vadd.f32 %v595, %v600
        %s603 = sadd.s32 %s405, 27
        %s604 = sld [smem:[#allocation4 + %s603]]
        %v605 = vstv %s604
        %v606 = vmul.f32 %v551, %v605
        %v607 = vmul.f32 %v552, %v605
        %v608 = vadd.f32 %v601, %v606
        %v609 = vadd.f32 %v602, %v607
        %s610 = sadd.s32 %s405, 37
        %s611 = sld [smem:[#allocation4 + %s610]]
        %v612 = vstv %s611
        %v613 = vadd.f32 %v608, %v612
        %v614 = vadd.f32 %v609, %v612
        %s615 = sadd.s32 %s405, 28
        %s616 = sld [smem:[#allocation4 + %s615]]
        %v617 = vstv %s616
        %v618 = vmul.f32 %v533, %v617
        %v619 = vmul.f32 %v534, %v617
        %s620 = sadd.s32 %s405, 29
        %s621 = sld [smem:[#allocation4 + %s620]]
        %v622 = vstv %s621
        %v623 = vmul.f32 %v539, %v622
        %v624 = vmul.f32 %v540, %v622
        %v625 = vadd.f32 %v618, %v623
        %v626 = vadd.f32 %v619, %v624
        %s627 = sadd.s32 %s405, 30
        %s628 = sld [smem:[#allocation4 + %s627]]
        %v629 = vstv %s628
        %v630 = vmul.f32 %v545, %v629
        %v631 = vmul.f32 %v546, %v629
        %v632 = vadd.f32 %v625, %v630
        %v633 = vadd.f32 %v626, %v631
        %s634 = sadd.s32 %s405, 31
        %s635 = sld [smem:[#allocation4 + %s634]]
        %v636 = vstv %s635
        %v637 = vmul.f32 %v551, %v636
        %v638 = vmul.f32 %v552, %v636
        %v639 = vadd.f32 %v632, %v637
        %v640 = vadd.f32 %v633, %v638
        %s641 = sadd.s32 %s405, 38
        %s642 = sld [smem:[#allocation4 + %s641]]
        %v643 = vstv %s642
        %v644 = vadd.f32 %v639, %v643
        %v645 = vadd.f32 %v640, %v643
        %s646 = sadd.s32 %s405, 32
        %s647 = sld [smem:[#allocation4 + %s646]]
        %v648 = vstv %s647
        %v649 = vmul.f32 %v533, %v648
        %v650 = vmul.f32 %v534, %v648
        %s651 = sadd.s32 %s405, 33
        %s652 = sld [smem:[#allocation4 + %s651]]
        %v653 = vstv %s652
        %v654 = vmul.f32 %v539, %v653
        %v655 = vmul.f32 %v540, %v653
        %v656 = vadd.f32 %v649, %v654
        %v657 = vadd.f32 %v650, %v655
        %s658 = sadd.s32 %s405, 34
        %s659 = sld [smem:[#allocation4 + %s658]]
        %v660 = vstv %s659
        %v661 = vmul.f32 %v545, %v660
        %v662 = vmul.f32 %v546, %v660
        %v663 = vadd.f32 %v656, %v661
        %v664 = vadd.f32 %v657, %v662
        %s665 = sadd.s32 %s405, 35
        %s666 = sld [smem:[#allocation4 + %s665]]
        %v667 = vstv %s666
        %v668 = vmul.f32 %v551, %v667
        %v669 = vmul.f32 %v552, %v667
        %v670 = vadd.f32 %v663, %v668
        %v671 = vadd.f32 %v664, %v669
        %s672 = sadd.s32 %s405, 39
        %s673 = sld [smem:[#allocation4 + %s672]]
        %v674 = vstv %s673
        %v675 = vadd.f32 %v670, %v674
        %v676 = vadd.f32 %v671, %v674
        %v677 = vmax.f32 %v582, %v613
        %v678 = vmax.f32 %v583, %v614
        %v679 = vmax.f32 %v644, %v675
        %v680 = vmax.f32 %v645, %v676
        %v681 = vmax.f32 %v677, %v679
        %v682 = vmax.f32 %v678, %v680
        %v683 = vsub.f32 %v582, %v681
        %v684 = vsub.f32 %v583, %v682
        %v685 = vmul.f32 %v683, 1.442695
        %v686 = vpow.pop %v685
        %v687 = vmul.f32 %v684, 1.442695
        %v688 = vpow.pop %v687
        %v689 = vsub.f32 %v613, %v681
        %v690 = vsub.f32 %v614, %v682
        %v691 = vmul.f32 %v689, 1.442695
        %v692 = vpow.pop %v691
        %v693 = vmul.f32 %v690, 1.442695
        %v694 = vpow.pop %v693
        %v695 = vsub.f32 %v644, %v681
        %v696 = vsub.f32 %v645, %v682
        %v697 = vmul.f32 %v695, 1.442695
        %v698 = vpow.pop %v697
        %v699 = vmul.f32 %v696, 1.442695
        %v700 = vpow.pop %v699
        %v701 = vsub.f32 %v675, %v681
        %v702 = vsub.f32 %v676, %v682
        %v703 = vmul.f32 %v701, 1.442695
        %v704 = vpow.pop %v703
        %v705 = vmul.f32 %v702, 1.442695
        %v706 = vpow.pop %v705
        %v707 = vadd.f32 %v686, %v692
        %v708 = vadd.f32 %v688, %v694
        %v709 = vadd.f32 %v707, %v698
        %v710 = vadd.f32 %v708, %v700
        %v711 = vadd.f32 %v709, %v704
        %v712 = vadd.f32 %v710, %v706
        %v713 = vrcp.pop %v711
        %v714 = vrcp.pop %v712
        %v715 = vmul.f32 %v686, %v713
        %v716 = vmul.f32 %v688, %v714
        %v717 = vmul.f32 %v692, %v713
        %v718 = vmul.f32 %v694, %v714
        %v719 = vmul.f32 %v698, %v713
        %v720 = vmul.f32 %v700, %v714
        %v721 = vmul.f32 %v704, %v713
        %v722 = vmul.f32 %v706, %v714
        %s723 = sadd.s32 %s405, 40
        %s724 = sld [smem:[#allocation4 + %s723]]
        %v725 = vstv %s724
        %v726 = vmul.f32 %v394, %v725
        %v727 = vmul.f32 %v395, %v725
        %s728 = sadd.s32 %s405, 41
        %s729 = sld [smem:[#allocation4 + %s728]]
        %v730 = vstv %s729
        %v731 = vmul.f32 %v397, %v730
        %v732 = vmul.f32 %v398, %v730
        %v733 = vadd.f32 %v726, %v731
        %v734 = vadd.f32 %v727, %v732
        %s735 = sadd.s32 %s405, 42
        %s736 = sld [smem:[#allocation4 + %s735]]
        %v737 = vstv %s736
        %v738 = vmul.f32 %v400, %v737
        %v739 = vmul.f32 %v401, %v737
        %v740 = vadd.f32 %v733, %v738
        %v741 = vadd.f32 %v734, %v739
        %s742 = sadd.s32 %s405, 43
        %s743 = sld [smem:[#allocation4 + %s742]]
        %v744 = vstv %s743
        %v745 = vmul.f32 %v403, %v744
        %v746 = vmul.f32 %v404, %v744
        %v747 = vadd.f32 %v740, %v745
        %v748 = vadd.f32 %v741, %v746
        %s749 = sadd.s32 %s405, 56
        %s750 = sld [smem:[#allocation4 + %s749]]
        %v751 = vstv %s750
        %v752 = vadd.f32 %v747, %v751
        %v753 = vadd.f32 %v748, %v751
        %s754 = sadd.s32 %s405, 44
        %s755 = sld [smem:[#allocation4 + %s754]]
        %v756 = vstv %s755
        %v757 = vmul.f32 %v394, %v756
        %v758 = vmul.f32 %v395, %v756
        %s759 = sadd.s32 %s405, 45
        %s760 = sld [smem:[#allocation4 + %s759]]
        %v761 = vstv %s760
        %v762 = vmul.f32 %v397, %v761
        %v763 = vmul.f32 %v398, %v761
        %v764 = vadd.f32 %v757, %v762
        %v765 = vadd.f32 %v758, %v763
        %s766 = sadd.s32 %s405, 46
        %s767 = sld [smem:[#allocation4 + %s766]]
        %v768 = vstv %s767
        %v769 = vmul.f32 %v400, %v768
        %v770 = vmul.f32 %v401, %v768
        %v771 = vadd.f32 %v764, %v769
        %v772 = vadd.f32 %v765, %v770
        %s773 = sadd.s32 %s405, 47
        %s774 = sld [smem:[#allocation4 + %s773]]
        %v775 = vstv %s774
        %v776 = vmul.f32 %v403, %v775
        %v777 = vmul.f32 %v404, %v775
        %v778 = vadd.f32 %v771, %v776
        %v779 = vadd.f32 %v772, %v777
        %s780 = sadd.s32 %s405, 57
        %s781 = sld [smem:[#allocation4 + %s780]]
        %v782 = vstv %s781
        %v783 = vadd.f32 %v778, %v782
        %v784 = vadd.f32 %v779, %v782
        %s785 = sadd.s32 %s405, 48
        %s786 = sld [smem:[#allocation4 + %s785]]
        %v787 = vstv %s786
        %v788 = vmul.f32 %v394, %v787
        %v789 = vmul.f32 %v395, %v787
        %s790 = sadd.s32 %s405, 49
        %s791 = sld [smem:[#allocation4 + %s790]]
        %v792 = vstv %s791
        %v793 = vmul.f32 %v397, %v792
        %v794 = vmul.f32 %v398, %v792
        %v795 = vadd.f32 %v788, %v793
        %v796 = vadd.f32 %v789, %v794
        %s797 = sadd.s32 %s405, 50
        %s798 = sld [smem:[#allocation4 + %s797]]
        %v799 = vstv %s798
        %v800 = vmul.f32 %v400, %v799
        %v801 = vmul.f32 %v401, %v799
        %v802 = vadd.f32 %v795, %v800
        %v803 = vadd.f32 %v796, %v801
        %s804 = sadd.s32 %s405, 51
        %s805 = sld [smem:[#allocation4 + %s804]]
        %v806 = vstv %s805
        %v807 = vmul.f32 %v403, %v806
        %v808 = vmul.f32 %v404, %v806
        %v809 = vadd.f32 %v802, %v807
        %v810 = vadd.f32 %v803, %v808
        %s811 = sadd.s32 %s405, 58
        %s812 = sld [smem:[#allocation4 + %s811]]
        %v813 = vstv %s812
        %v814 = vadd.f32 %v809, %v813
        %v815 = vadd.f32 %v810, %v813
        %s816 = sadd.s32 %s405, 52
        %s817 = sld [smem:[#allocation4 + %s816]]
        %v818 = vstv %s817
        %v819 = vmul.f32 %v394, %v818
        %v820 = vmul.f32 %v395, %v818
        %s821 = sadd.s32 %s405, 53
        %s822 = sld [smem:[#allocation4 + %s821]]
        %v823 = vstv %s822
        %v824 = vmul.f32 %v397, %v823
        %v825 = vmul.f32 %v398, %v823
        %v826 = vadd.f32 %v819, %v824
        %v827 = vadd.f32 %v820, %v825
        %s828 = sadd.s32 %s405, 54
        %s829 = sld [smem:[#allocation4 + %s828]]
        %v830 = vstv %s829
        %v831 = vmul.f32 %v400, %v830
        %v832 = vmul.f32 %v401, %v830
        %v833 = vadd.f32 %v826, %v831
        %v834 = vadd.f32 %v827, %v832
        %s835 = sadd.s32 %s405, 55
        %s836 = sld [smem:[#allocation4 + %s835]]
        %v837 = vstv %s836
        %v838 = vmul.f32 %v403, %v837
        %v839 = vmul.f32 %v404, %v837
        %v840 = vadd.f32 %v833, %v838
        %v841 = vadd.f32 %v834, %v839
        %s842 = sadd.s32 %s405, 59
        %s843 = sld [smem:[#allocation4 + %s842]]
        %v844 = vstv %s843
        %v845 = vadd.f32 %v840, %v844
        %v846 = vadd.f32 %v841, %v844
        %vm847 = vcmp.gt.f32.partialorder %v752, 0.0
        %vm848 = vcmp.gt.f32.partialorder %v753, 0.0
        %v849 = vmul.f32 %v752, 0.1
        %v850 = vmul.f32 %v753, 0.1
        %v851 = vsel %vm847, %v752, %v849
        %v852 = vsel %vm848, %v753, %v850
        %vm853 = vcmp.gt.f32.partialorder %v783, 0.0
        %vm854 = vcmp.gt.f32.partialorder %v784, 0.0
        %v855 = vmul.f32 %v783, 0.1
        %v856 = vmul.f32 %v784, 0.1
        %v857 = vsel %vm853, %v783, %v855
        %v858 = vsel %vm854, %v784, %v856
        %vm859 = vcmp.gt.f32.partialorder %v814, 0.0
        %vm860 = vcmp.gt.f32.partialorder %v815, 0.0
        %v861 = vmul.f32 %v814, 0.1
        %v862 = vmul.f32 %v815, 0.1
        %v863 = vsel %vm859, %v814, %v861
        %v864 = vsel %vm860, %v815, %v862
        %vm865 = vcmp.gt.f32.partialorder %v845, 0.0
        %vm866 = vcmp.gt.f32.partialorder %v846, 0.0
        %v867 = vmul.f32 %v845, 0.1
        %v868 = vmul.f32 %v846, 0.1
        %v869 = vsel %vm865, %v845, %v867
        %v870 = vsel %vm866, %v846, %v868
        %s871 = sadd.s32 %s405, 60
        %s872 = sld [smem:[#allocation4 + %s871]]
        %v873 = vstv %s872
        %v874 = vmul.f32 %v851, %v873
        %v875 = vmul.f32 %v852, %v873
        %s876 = sadd.s32 %s405, 61
        %s877 = sld [smem:[#allocation4 + %s876]]
        %v878 = vstv %s877
        %v879 = vmul.f32 %v857, %v878
        %v880 = vmul.f32 %v858, %v878
        %v881 = vadd.f32 %v874, %v879
        %v882 = vadd.f32 %v875, %v880
        %s883 = sadd.s32 %s405, 62
        %s884 = sld [smem:[#allocation4 + %s883]]
        %v885 = vstv %s884
        %v886 = vmul.f32 %v863, %v885
        %v887 = vmul.f32 %v864, %v885
        %v888 = vadd.f32 %v881, %v886
        %v889 = vadd.f32 %v882, %v887
        %s890 = sadd.s32 %s405, 63
        %s891 = sld [smem:[#allocation4 + %s890]]
        %v892 = vstv %s891
        %v893 = vmul.f32 %v869, %v892
        %v894 = vmul.f32 %v870, %v892
        %v895 = vadd.f32 %v888, %v893
        %v896 = vadd.f32 %v889, %v894
        %s897 = sadd.s32 %s405, 76
        %s898 = sld [smem:[#allocation4 + %s897]]
        %v899 = vstv %s898
        %v900 = vadd.f32 %v895, %v899
        %v901 = vadd.f32 %v896, %v899
        %s902 = sadd.s32 %s405, 64
        %s903 = sld [smem:[#allocation4 + %s902]]
        %v904 = vstv %s903
        %v905 = vmul.f32 %v851, %v904
        %v906 = vmul.f32 %v852, %v904
        %s907 = sadd.s32 %s405, 65
        %s908 = sld [smem:[#allocation4 + %s907]]
        %v909 = vstv %s908
        %v910 = vmul.f32 %v857, %v909
        %v911 = vmul.f32 %v858, %v909
        %v912 = vadd.f32 %v905, %v910
        %v913 = vadd.f32 %v906, %v911
        %s914 = sadd.s32 %s405, 66
        %s915 = sld [smem:[#allocation4 + %s914]]
        %v916 = vstv %s915
        %v917 = vmul.f32 %v863, %v916
        %v918 = vmul.f32 %v864, %v916
        %v919 = vadd.f32 %v912, %v917
        %v920 = vadd.f32 %v913, %v918
        %s921 = sadd.s32 %s405, 67
        %s922 = sld [smem:[#allocation4 + %s921]]
        %v923 = vstv %s922
        %v924 = vmul.f32 %v869, %v923
        %v925 = vmul.f32 %v870, %v923
        %v926 = vadd.f32 %v919, %v924
        %v927 = vadd.f32 %v920, %v925
        %s928 = sadd.s32 %s405, 77
        %s929 = sld [smem:[#allocation4 + %s928]]
        %v930 = vstv %s929
        %v931 = vadd.f32 %v926, %v930
        %v932 = vadd.f32 %v927, %v930
        %s933 = sadd.s32 %s405, 68
        %s934 = sld [smem:[#allocation4 + %s933]]
        %v935 = vstv %s934
        %v936 = vmul.f32 %v851, %v935
        %v937 = vmul.f32 %v852, %v935
        %s938 = sadd.s32 %s405, 69
        %s939 = sld [smem:[#allocation4 + %s938]]
        %v940 = vstv %s939
        %v941 = vmul.f32 %v857, %v940
        %v942 = vmul.f32 %v858, %v940
        %v943 = vadd.f32 %v936, %v941
        %v944 = vadd.f32 %v937, %v942
        %s945 = sadd.s32 %s405, 70
        %s946 = sld [smem:[#allocation4 + %s945]]
        %v947 = vstv %s946
        %v948 = vmul.f32 %v863, %v947
        %v949 = vmul.f32 %v864, %v947
        %v950 = vadd.f32 %v943, %v948
        %v951 = vadd.f32 %v944, %v949
        %s952 = sadd.s32 %s405, 71
        %s953 = sld [smem:[#allocation4 + %s952]]
        %v954 = vstv %s953
        %v955 = vmul.f32 %v869, %v954
        %v956 = vmul.f32 %v870, %v954
        %v957 = vadd.f32 %v950, %v955
        %v958 = vadd.f32 %v951, %v956
        %s959 = sadd.s32 %s405, 78
        %s960 = sld [smem:[#allocation4 + %s959]]
        %v961 = vstv %s960
        %v962 = vadd.f32 %v957, %v961
        %v963 = vadd.f32 %v958, %v961
        %s964 = sadd.s32 %s405, 72
        %s965 = sld [smem:[#allocation4 + %s964]]
        %v966 = vstv %s965
        %v967 = vmul.f32 %v851, %v966
        %v968 = vmul.f32 %v852, %v966
        %s969 = sadd.s32 %s405, 73
        %s970 = sld [smem:[#allocation4 + %s969]]
        %v971 = vstv %s970
        %v972 = vmul.f32 %v857, %v971
        %v973 = vmul.f32 %v858, %v971
        %v974 = vadd.f32 %v967, %v972
        %v975 = vadd.f32 %v968, %v973
        %s976 = sadd.s32 %s405, 74
        %s977 = sld [smem:[#allocation4 + %s976]]
        %v978 = vstv %s977
        %v979 = vmul.f32 %v863, %v978
        %v980 = vmul.f32 %v864, %v978
        %v981 = vadd.f32 %v974, %v979
        %v982 = vadd.f32 %v975, %v980
        %s983 = sadd.s32 %s405, 75
        %s984 = sld [smem:[#allocation4 + %s983]]
        %v985 = vstv %s984
        %v986 = vmul.f32 %v869, %v985
        %v987 = vmul.f32 %v870, %v985
        %v988 = vadd.f32 %v981, %v986
        %v989 = vadd.f32 %v982, %v987
        %s990 = sadd.s32 %s405, 79
        %s991 = sld [smem:[#allocation4 + %s990]]
        %v992 = vstv %s991
        %v993 = vadd.f32 %v988, %v992
        %v994 = vadd.f32 %v989, %v992
        %v995 = vmax.f32 %v900, %v931
        %v996 = vmax.f32 %v901, %v932
        %v997 = vmax.f32 %v962, %v993
        %v998 = vmax.f32 %v963, %v994
        %v999 = vmax.f32 %v995, %v997
        %v1000 = vmax.f32 %v996, %v998
        %v1001 = vsub.f32 %v900, %v999
        %v1002 = vsub.f32 %v901, %v1000
        %v1003 = vmul.f32 %v1001, 1.442695
        %v1004 = vpow.pop %v1003
        %v1005 = vmul.f32 %v1002, 1.442695
        %v1006 = vpow.pop %v1005
        %v1007 = vsub.f32 %v931, %v999
        %v1008 = vsub.f32 %v932, %v1000
        %v1009 = vmul.f32 %v1007, 1.442695
        %v1010 = vpow.pop %v1009
        %v1011 = vmul.f32 %v1008, 1.442695
        %v1012 = vpow.pop %v1011
        %v1013 = vsub.f32 %v962, %v999
        %v1014 = vsub.f32 %v963, %v1000
        %v1015 = vmul.f32 %v1013, 1.442695
        %v1016 = vpow.pop %v1015
        %v1017 = vmul.f32 %v1014, 1.442695
        %v1018 = vpow.pop %v1017
        %v1019 = vsub.f32 %v993, %v999
        %v1020 = vsub.f32 %v994, %v1000
        %v1021 = vmul.f32 %v1019, 1.442695
        %v1022 = vpow.pop %v1021
        %v1023 = vmul.f32 %v1020, 1.442695
        %v1024 = vpow.pop %v1023
        %v1025 = vadd.f32 %v1004, %v1010
        %v1026 = vadd.f32 %v1006, %v1012
        %v1027 = vadd.f32 %v1025, %v1016
        %v1028 = vadd.f32 %v1026, %v1018
        %v1029 = vadd.f32 %v1027, %v1022
        %v1030 = vadd.f32 %v1028, %v1024
        %v1031 = vrcp.pop %v1029
        %v1032 = vrcp.pop %v1030
        %v1033 = vmul.f32 %v1004, %v1031
        %v1034 = vmul.f32 %v1006, %v1032
        %v1035 = vmul.f32 %v1010, %v1031
        %v1036 = vmul.f32 %v1012, %v1032
        %v1037 = vmul.f32 %v1016, %v1031
        %v1038 = vmul.f32 %v1018, %v1032
        %v1039 = vmul.f32 %v1022, %v1031
        %v1040 = vmul.f32 %v1024, %v1032
        %v1041 = vmul.f32 %v383, %v715
        %v1042 = vmul.f32 %v384, %v716
        %v1043 = vmul.f32 %v394, %v1033
        %v1044 = vmul.f32 %v395, %v1034
        %v1045 = vsub.f32 %v1041, %v1043
        %v1046 = vsub.f32 %v1042, %v1044
        %v1047 = vmul.f32 %v383, %v1033
        %v1048 = vmul.f32 %v384, %v1034
        %v1049 = vmul.f32 %v394, %v715
        %v1050 = vmul.f32 %v395, %v716
        %v1051 = vadd.f32 %v1047, %v1049
        %v1052 = vadd.f32 %v1048, %v1050
        %v1053 = vmul.f32 %v386, %v717
        %v1054 = vmul.f32 %v387, %v718
        %v1055 = vadd.f32 %v1045, %v1053
        %v1056 = vadd.f32 %v1046, %v1054
        %v1057 = vmul.f32 %v397, %v1035
        %v1058 = vmul.f32 %v398, %v1036
        %v1059 = vsub.f32 %v1055, %v1057
        %v1060 = vsub.f32 %v1056, %v1058
        %v1061 = vmul.f32 %v386, %v1035
        %v1062 = vmul.f32 %v387, %v1036
        %v1063 = vadd.f32 %v1051, %v1061
        %v1064 = vadd.f32 %v1052, %v1062
        %v1065 = vmul.f32 %v397, %v717
        %v1066 = vmul.f32 %v398, %v718
        %v1067 = vadd.f32 %v1063, %v1065
        %v1068 = vadd.f32 %v1064, %v1066
        %v1069 = vmul.f32 %v389, %v719
        %v1070 = vmul.f32 %v390, %v720
        %v1071 = vadd.f32 %v1059, %v1069
        %v1072 = vadd.f32 %v1060, %v1070
        %v1073 = vmul.f32 %v400, %v1037
        %v1074 = vmul.f32 %v401, %v1038
        %v1075 = vsub.f32 %v1071, %v1073
        %v1076 = vsub.f32 %v1072, %v1074
        %v1077 = vmul.f32 %v389, %v1037
        %v1078 = vmul.f32 %v390, %v1038
        %v1079 = vadd.f32 %v1067, %v1077
        %v1080 = vadd.f32 %v1068, %v1078
        %v1081 = vmul.f32 %v400, %v719
        %v1082 = vmul.f32 %v401, %v720
        %v1083 = vadd.f32 %v1079, %v1081
        %v1084 = vadd.f32 %v1080, %v1082
        %v1085 = vmul.f32 %v392, %v721
        %v1086 = vmul.f32 %v393, %v722
        %v1087 = vadd.f32 %v1075, %v1085
        %v1088 = vadd.f32 %v1076, %v1086
        %v1089 = vmul.f32 %v403, %v1039
        %v1090 = vmul.f32 %v404, %v1040
        %v1091 = vsub.f32 %v1087, %v1089
        %v1092 = vsub.f32 %v1088, %v1090
        %v1093 = vmul.f32 %v392, %v1039
        %v1094 = vmul.f32 %v393, %v1040
        %v1095 = vadd.f32 %v1083, %v1093
        %v1096 = vadd.f32 %v1084, %v1094
        %v1097 = vmul.f32 %v403, %v721
        %v1098 = vmul.f32 %v404, %v722
        %v1099 = vadd.f32 %v1095, %v1097
        %v1100 = vadd.f32 %v1096, %v1098
        %vm1101 = vcmask 64512
        %1102 = vst.msk [vmem:[%s376] sm:$0xff] %vm1101, %v1091
        %1103 = vst.msk [vmem:[%s376 + $0x8] sm:$0xff] %vm1101, %v1092
        %1104 = vst.msk [vmem:[%s382] sm:$0xff] %vm1101, %v1099
        %1105 = vst.msk [vmem:[%s382 + $0x8] sm:$0xff] %vm1101, %v1100
        %s1106 = sand.u32 %s116, 1
        %s1107 = sand.u32 %s116, 1
        %s1108 = smul.addr %s1107, 16
        %s1109 = scalar_lea.vmem [#allocation6], %s1108
        %s1110 = sand.u32 %s144, 1
        %s1111 = sand.u32 %s144, 1
        %s1112 = smul.addr %s1111, 16
        %s1113 = scalar_lea.vmem [#allocation7], %s1112
        // Predicated region
        $region113: #{fouri_down_forward.2} parent=99 // pred_check
          %p1114 = pneg %p126
        $region114: #{fouri_down_forward.2} parent=99 // pred_check_branch
          %1116 = sbr.rel (%p1114) target = $region116
        $region115: #{fouri_down_forward.2} parent=99 // pred_region
          %s1117 = sadd.s32 %s22, %s21
          %s1118 = smul.addr %s1117, 8
          %s1119 = scalar_lea.vmem %s3, %s1118
          // Predicated region
          $region117: #{fouri_down_forward.2} parent=115 // pred_check
            _
          $region118: #{fouri_down_forward.2} parent=115 // pred_check_branch
            %1121 = sbr.rel (0) target = $region120
          $region119: #{fouri_down_forward.2} parent=115 // pred_region
            // Predicated region
            $region121: #{fouri_down_forward.2} parent=119 // pred_check
              _
            $region122: #{fouri_down_forward.2} parent=119 // pred_check_branch
              %1123 = sbr.rel (0) target = $region124
            $region123: #{fouri_down_forward.2} parent=119 // pred_region
              // Predicated region
              $region136: #{fouri_down_forward.2} parent=123 // pred_check
                _
              $region137: #{fouri_down_forward.2} parent=123 // pred_check_branch
                %1141 = sbr.rel (0) target = $region139
              $region138: #{fouri_down_forward.2} parent=123 // pred_region
                loop: start=0, step=1, limit=1
                $region140: #{fouri_down_forward.2} parent=138 // loop_pre_header
                  _
                $region141: #{fouri_down_forward.2} parent=138 // loop_header
                  %s1143 = sphi 0, %s1147
                  %p1144 = scmp.ge.s32.totalorder %s1143, 1
                  %s1148 = sphi %s1109, %s1109
                  %s1149 = sphi %s1119, %s1119
                $region142: #{fouri_down_forward.2} parent=138 // loop_header_branch
                  %1146 = sbr.rel (%p1144) target = $region146
                $region143: #{fouri_down_forward.2} parent=138 // loop_body
                  %v1150 = vld [vmem:[%s1148] sm:$0xff]
                  %1151 = vst [vmem:[%s1149] sm:$0xff] %v1150
                  %v1152 = vld [vmem:[%s1148 + $0x8] sm:$0xff]
                  %1153 = vst [vmem:[%s1149 + $0x20] sm:$0xff] %v1152
                $region144: #{fouri_down_forward.2} parent=138 // loop_footer
                  %s1147 = sadd.s32 1, %s1143
                $region145: #{fouri_down_forward.2} parent=138 // loop_footer_branch
                  %1142 = sbr.rel target = $region141
                $region146: #{fouri_down_forward.2} parent=138 // loop_exit
                  _
              $region139: #{fouri_down_forward.2} parent=123 // pred_fallthru
                _
              // Predicated region
              $region147: #{fouri_down_forward.2} parent=123 // pred_check
                _
              $region148: #{fouri_down_forward.2} parent=123 // pred_check_branch
                %1155 = sbr.rel target = $region150
              $region149: #{fouri_down_forward.2} parent=123 // pred_region
                _
              $region150: #{fouri_down_forward.2} parent=123 // pred_fallthru
                _
            $region124: #{fouri_down_forward.2} parent=119 // pred_fallthru
              _
            // Predicated region
            $region125: #{fouri_down_forward.2} parent=119 // pred_check
              _
            $region126: #{fouri_down_forward.2} parent=119 // pred_check_branch
              %1125 = sbr.rel target = $region128
            $region127: #{fouri_down_forward.2} parent=119 // pred_region
              %s1127 = ssub.s32 256, 1
              loop: start=0, step=1, limit=1
              $region129: #{fouri_down_forward.2} parent=127 // loop_pre_header
                _
              $region130: #{fouri_down_forward.2} parent=127 // loop_header
                %s1129 = sphi 0, %s1133
                %p1130 = scmp.ge.s32.totalorder %s1129, 1
                %s1134 = sphi %s1109, %s1109
                %s1135 = sphi %s1119, %s1119
              $region131: #{fouri_down_forward.2} parent=127 // loop_header_branch
                %1132 = sbr.rel (%p1130) target = $region135
              $region132: #{fouri_down_forward.2} parent=127 // loop_body
                %v1136 = vld [vmem:[%s1134] sm:%s1127]
                %1137 = vst [vmem:[%s1135] sm:%s1127] %v1136
                %v1138 = vld [vmem:[%s1134 + $0x8] sm:%s1127]
                %1139 = vst [vmem:[%s1135 + $0x20] sm:%s1127] %v1138
              $region133: #{fouri_down_forward.2} parent=127 // loop_footer
                %s1133 = sadd.s32 1, %s1129
              $region134: #{fouri_down_forward.2} parent=127 // loop_footer_branch
                %1128 = sbr.rel target = $region130
              $region135: #{fouri_down_forward.2} parent=127 // loop_exit
                _
            $region128: #{fouri_down_forward.2} parent=119 // pred_fallthru
              _
          $region120: #{fouri_down_forward.2} parent=115 // pred_fallthru
            _
          %1156 = vnop
        $region116: #{fouri_down_forward.2} parent=99 // pred_fallthru
          _
        // Predicated region
        $region151: #{fouri_down_forward.2} parent=99 // pred_check
          %p1157 = pneg %p154
        $region152: #{fouri_down_forward.2} parent=99 // pred_check_branch
          %1159 = sbr.rel (%p1157) target = $region154
        $region153: #{fouri_down_forward.2} parent=99 // pred_region
          %s1160 = sadd.s32 %s22, %s21
          %s1161 = smul.addr %s1160, 8
          %s1162 = scalar_lea.vmem %s4, %s1161
          // Predicated region
          $region155: #{fouri_down_forward.2} parent=153 // pred_check
            _
          $region156: #{fouri_down_forward.2} parent=153 // pred_check_branch
            %1164 = sbr.rel (0) target = $region158
          $region157: #{fouri_down_forward.2} parent=153 // pred_region
            // Predicated region
            $region159: #{fouri_down_forward.2} parent=157 // pred_check
              _
            $region160: #{fouri_down_forward.2} parent=157 // pred_check_branch
              %1166 = sbr.rel (0) target = $region162
            $region161: #{fouri_down_forward.2} parent=157 // pred_region
              // Predicated region
              $region174: #{fouri_down_forward.2} parent=161 // pred_check
                _
              $region175: #{fouri_down_forward.2} parent=161 // pred_check_branch
                %1184 = sbr.rel (0) target = $region177
              $region176: #{fouri_down_forward.2} parent=161 // pred_region
                loop: start=0, step=1, limit=1
                $region178: #{fouri_down_forward.2} parent=176 // loop_pre_header
                  _
                $region179: #{fouri_down_forward.2} parent=176 // loop_header
                  %s1186 = sphi 0, %s1190
                  %p1187 = scmp.ge.s32.totalorder %s1186, 1
                  %s1191 = sphi %s1113, %s1113
                  %s1192 = sphi %s1162, %s1162
                $region180: #{fouri_down_forward.2} parent=176 // loop_header_branch
                  %1189 = sbr.rel (%p1187) target = $region184
                $region181: #{fouri_down_forward.2} parent=176 // loop_body
                  %v1193 = vld [vmem:[%s1191] sm:$0xff]
                  %1194 = vst [vmem:[%s1192] sm:$0xff] %v1193
                  %v1195 = vld [vmem:[%s1191 + $0x8] sm:$0xff]
                  %1196 = vst [vmem:[%s1192 + $0x20] sm:$0xff] %v1195
                $region182: #{fouri_down_forward.2} parent=176 // loop_footer
                  %s1190 = sadd.s32 1, %s1186
                $region183: #{fouri_down_forward.2} parent=176 // loop_footer_branch
                  %1185 = sbr.rel target = $region179
                $region184: #{fouri_down_forward.2} parent=176 // loop_exit
                  _
              $region177: #{fouri_down_forward.2} parent=161 // pred_fallthru
                _
              // Predicated region
              $region185: #{fouri_down_forward.2} parent=161 // pred_check
                _
              $region186: #{fouri_down_forward.2} parent=161 // pred_check_branch
                %1198 = sbr.rel target = $region188
              $region187: #{fouri_down_forward.2} parent=161 // pred_region
                _
              $region188: #{fouri_down_forward.2} parent=161 // pred_fallthru
                _
            $region162: #{fouri_down_forward.2} parent=157 // pred_fallthru
              _
            // Predicated region
            $region163: #{fouri_down_forward.2} parent=157 // pred_check
              _
            $region164: #{fouri_down_forward.2} parent=157 // pred_check_branch
              %1168 = sbr.rel target = $region166
            $region165: #{fouri_down_forward.2} parent=157 // pred_region
              %s1170 = ssub.s32 256, 1
              loop: start=0, step=1, limit=1
              $region167: #{fouri_down_forward.2} parent=165 // loop_pre_header
                _
              $region168: #{fouri_down_forward.2} parent=165 // loop_header
                %s1172 = sphi 0, %s1176
                %p1173 = scmp.ge.s32.totalorder %s1172, 1
                %s1177 = sphi %s1113, %s1113
                %s1178 = sphi %s1162, %s1162
              $region169: #{fouri_down_forward.2} parent=165 // loop_header_branch
                %1175 = sbr.rel (%p1173) target = $region173
              $region170: #{fouri_down_forward.2} parent=165 // loop_body
                %v1179 = vld [vmem:[%s1177] sm:%s1170]
                %1180 = vst [vmem:[%s1178] sm:%s1170] %v1179
                %v1181 = vld [vmem:[%s1177 + $0x8] sm:%s1170]
                %1182 = vst [vmem:[%s1178 + $0x20] sm:%s1170] %v1181
              $region171: #{fouri_down_forward.2} parent=165 // loop_footer
                %s1176 = sadd.s32 1, %s1172
              $region172: #{fouri_down_forward.2} parent=165 // loop_footer_branch
                %1171 = sbr.rel target = $region168
              $region173: #{fouri_down_forward.2} parent=165 // loop_exit
                _
            $region166: #{fouri_down_forward.2} parent=157 // pred_fallthru
              _
          $region158: #{fouri_down_forward.2} parent=153 // pred_fallthru
            _
          %1199 = vnop
        $region154: #{fouri_down_forward.2} parent=99 // pred_fallthru
          _
      $region100: #{fouri_down_forward.2} parent=5 // pred_fallthru
        _
      %p1200 = scmp.le.s32.totalorder 2, %s12
      // Predicated region
      $region189: #{fouri_down_forward.2} parent=5 // pred_check
        %p1201 = pneg %p1200
      $region190: #{fouri_down_forward.2} parent=5 // pred_check_branch
        %1203 = sbr.rel (%p1201) target = $region192
      $region191: #{fouri_down_forward.2} parent=5 // pred_region
        %s1204 = ssub.s32 %s12, 2
        // Predicated region
        $region193: #{fouri_down_forward.2} parent=191 // pred_check
          %p1205 = pneg %p132
        $region194: #{fouri_down_forward.2} parent=191 // pred_check_branch
          %1207 = sbr.rel (%p1205) target = $region196
        $region195: #{fouri_down_forward.2} parent=191 // pred_region
          %s1208 = sand.u32 %s117, 1
          %s1209 = sand.u32 %s117, 1
          %s1210 = smul.addr %s1209, 16
          %s1211 = scalar_lea.vmem [#allocation6], %s1210
        $region196: #{fouri_down_forward.2} parent=191 // pred_fallthru
          _
        // Predicated region
        $region197: #{fouri_down_forward.2} parent=191 // pred_check
          %p1212 = pneg %p160
        $region198: #{fouri_down_forward.2} parent=191 // pred_check_branch
          %1214 = sbr.rel (%p1212) target = $region200
        $region199: #{fouri_down_forward.2} parent=191 // pred_region
          %s1215 = sand.u32 %s145, 1
          %s1216 = sand.u32 %s145, 1
          %s1217 = smul.addr %s1216, 16
          %s1218 = scalar_lea.vmem [#allocation7], %s1217
        $region200: #{fouri_down_forward.2} parent=191 // pred_fallthru
          _
      $region192: #{fouri_down_forward.2} parent=5 // pred_fallthru
        _
    $region6: #{fouri_down_forward.2} parent=1 // loop_footer
      %s16 = sadd.s32 1, %s12
    $region7: #{fouri_down_forward.2} parent=1 // loop_footer_branch
      %11 = sbr.rel target = $region3
    $region8: #{fouri_down_forward.2} parent=1 // loop_exit
      _
    %1219 = vsyncpa [#allocation5], 1
    %s1220 = scalar_lea.sflag [#allocation5], 1
    %1221 = vsyncpa %s1220, 1

// kernel: fouri_down_forward.3
$region0: #{fouri_down_forward.3}
  #allocation0 [shape = 'u32[]', space=smem, size = 0x4, offset = 0x4, fixed_abs, tag = 'smem constant byte address 0x4 - core index']
  #allocation1 [shape = 'u32[72,128]{1,0:T(1,128)}', space=vmem, size = 0x9000, scoped, tag = 'internal scratch']
  %s0 = inlined_call_operand.vmem [shape: f32[2,4,8,8], index: 0, kind: input, shape index: {}]
  %s1 = inlined_call_operand.vmem [shape: f32[2,4,8,32], index: 1, kind: input, shape index: {}]
  %s2 = inlined_call_operand.vmem [shape: f32[16,8], index: 2, kind: input, shape index: {}]
  %s3 = inlined_call_operand.vmem [shape: f32[8,4], index: 3, kind: input, shape index: {}]
  %s4 = inlined_call_operand.vmem [shape: f32[8], index: 4, kind: input, shape index: {}]
  %s5 = inlined_call_operand.hbm [shape: f32[2,8,8,8], index: 5, kind: output, shape index: {}]
  %s6 = sld [smem:[#allocation0]]
  $region61: #{fouri_down_forward.3} parent=0
    _
  %s8 = ssub.s32 1, %s6
  %s9 = scalar_select 0, %s8, %s6
  $region1: #{fouri_down_forward.3} parent=0
    #allocation2 [shape = 'u8[4096]{0}', space=smem, size = 0x1000, scoped, tag = 'input window, operand 3, single buffered']
    #allocation3 [shape = 's32[2]{0}', space=sflag, size = 0x8, scoped, tag = 'scoped memory for fouri_down_forward.3']
    #allocation4 [shape = 's32[2]{0}', space=sflag, size = 0x8, scoped, tag = 'scoped memory for fouri_down_forward.3']
    #allocation5 [shape = 'u8[512]{0}', space=smem, size = 0x200, scoped, tag = 'input window, operand 4, single buffered']
    #allocation6 [shape = 's32[1]{0}', space=sflag, size = 0x4, scoped, tag = 'scoped memory for fouri_down_forward.3']
    #allocation7 [shape = 'u8[65536]{0}', space=vmem, size = 0x10000, scoped, tag = 'output window, operand 0']
    %10 = vsyncpa [#allocation4], 0
    %11 = vsyncpa [#allocation6], 0
    %12 = vsyncpa [#allocation3], 0
    %s13 = scalar_lea.sflag [#allocation3], 1
    %14 = vsyncpa %s13, 0
    loop: start=0, step=1, limit=4
    $region2: #{fouri_down_forward.3} parent=1 // loop_pre_header
      _
    $region3: #{fouri_down_forward.3} parent=1 // loop_header
      %s16 = sphi 0, %s20
      %p17 = scmp.ge.s32.totalorder %s16, 4
      %s23 = sphi 0, %s35
      %s24 = sphi 0, %s31
      %s25 = sphi 0, %s23
      %s26 = sphi 0, %s24
      %s27 = sphi 0, %s25
      %s28 = sphi 0, %s26
      %s40 = sphi 0, %s42
      %s43 = sphi 0, %s40
      %s44 = sphi 0, %s43
      %s60 = sphi 0, %s44
      %s68 = sphi 0, %s70
      %s71 = sphi 0, %s68
      %s72 = sphi 0, %s71
      %s88 = sphi 0, %s72
      %s92 = sphi 0, %s92
      %s94 = sphi 0, %s92
      %s95 = sphi 0, %s94
      %s109 = sphi 0, %s95
      %s113 = sphi 0, %s113
      %s115 = sphi 0, %s113
      %s116 = sphi 0, %s115
      %s130 = sphi 0, %s116
      %s134 = sphi 0, %s134
      %s136 = sphi 0, %s134
      %s137 = sphi 0, %s136
      %s151 = sphi 0, %s137
      %s159 = sphi 0, %s161
      %s162 = sphi 0, %s159
      %s163 = sphi 0, %s162
      %s179 = sphi 0, %s163
    $region4: #{fouri_down_forward.3} parent=1 // loop_header_branch
      %19 = sbr.rel (%p17) target = $region8
    $region5: #{fouri_down_forward.3} parent=1 // loop_body
      %s21 = ssub.s32 %s16, 1
      %s22 = ssub.s32 %s16, 2
      %s29 = sadd.s32 1, %s24
      %p30 = scmp.ge.s32.totalorder %s29, 1
      %s31 = scalar_select %p30, 0, %s29
      %s32 = sadd.s32 1, %s23
      %s33 = scalar_select %p30, %s32, %s23
      %p34 = scmp.ge.s32.totalorder %s33, 2
      %s35 = scalar_select %p34, 0, %s33
      %s36 = ssub.s32 %s23, %s35
      %s37 = ssub.s32 %s24, %s31
      %s38 = sor.u32 %s36, %s37
      %p39 = scmp.eq.s32.totalorder %s38, 0
      %s41 = sadd.s32 %s40, 1
      %s42 = scalar_select %p39, %s40, %s41
      %p45 = pneg %p39
      %p46 = scmp.eq.s32.totalorder %s16, 1
      %p47 = por %p45, %p46
      %p48 = scmp.ne.s32.totalorder %s40, %s43
      %p49 = scmp.eq.s32.totalorder %s16, 0
      %p50 = por %p48, %p49
      %p51 = scmp.ne.s32.totalorder %s40, %s43
      %p52 = scmp.eq.s32.totalorder %s21, 1
      %p53 = por %p51, %p52
      %p54 = scmp.ne.s32.totalorder %s43, %s44
      %p55 = scmp.eq.s32.totalorder %s21, 0
      %p56 = por %p54, %p55
      %p57 = scmp.ne.s32.totalorder %s43, %s44
      %p58 = scmp.eq.s32.totalorder %s22, 1
      %p59 = por %p57, %p58
      %p61 = scmp.ne.s32.totalorder %s44, %s60
      %p62 = scmp.eq.s32.totalorder %s22, 0
      %p63 = por %p61, %p62
      %s64 = ssub.s32 %s23, %s35
      %s65 = ssub.s32 %s24, %s31
      %s66 = sor.u32 %s64, %s65
      %p67 = scmp.eq.s32.totalorder %s66, 0
      %s69 = sadd.s32 %s68, 1
      %s70 = scalar_select %p67, %s68, %s69
      %p73 = pneg %p67
      %p74 = scmp.eq.s32.totalorder %s16, 1
      %p75 = por %p73, %p74
      %p76 = scmp.ne.s32.totalorder %s68, %s71
      %p77 = scmp.eq.s32.totalorder %s16, 0
      %p78 = por %p76, %p77
      %p79 = scmp.ne.s32.totalorder %s68, %s71
      %p80 = scmp.eq.s32.totalorder %s21, 1
      %p81 = por %p79, %p80
      %p82 = scmp.ne.s32.totalorder %s71, %s72
      %p83 = scmp.eq.s32.totalorder %s21, 0
      %p84 = por %p82, %p83
      %p85 = scmp.ne.s32.totalorder %s71, %s72
      %p86 = scmp.eq.s32.totalorder %s22, 1
      %p87 = por %p85, %p86
      %p89 = scmp.ne.s32.totalorder %s72, %s88
      %p90 = scmp.eq.s32.totalorder %s22, 0
      %p91 = por %p89, %p90
      %s93 = sadd.s32 %s92, 1
      %p96 = scmp.eq.s32.totalorder %s16, 1
      %p97 = scmp.ne.s32.totalorder %s92, %s94
      %p98 = scmp.eq.s32.totalorder %s16, 0
      %p99 = por %p97, %p98
      %p100 = scmp.ne.s32.totalorder %s92, %s94
      %p101 = scmp.eq.s32.totalorder %s21, 1
      %p102 = por %p100, %p101
      %p103 = scmp.ne.s32.totalorder %s94, %s95
      %p104 = scmp.eq.s32.totalorder %s21, 0
      %p105 = por %p103, %p104
      %p106 = scmp.ne.s32.totalorder %s94, %s95
      %p107 = scmp.eq.s32.totalorder %s22, 1
      %p108 = por %p106, %p107
      %p110 = scmp.ne.s32.totalorder %s95, %s109
      %p111 = scmp.eq.s32.totalorder %s22, 0
      %p112 = por %p110, %p111
      %s114 = sadd.s32 %s113, 1
      %p117 = scmp.eq.s32.totalorder %s16, 1
      %p118 = scmp.ne.s32.totalorder %s113, %s115
      %p119 = scmp.eq.s32.totalorder %s16, 0
      %p120 = por %p118, %p119
      %p121 = scmp.ne.s32.totalorder %s113, %s115
      %p122 = scmp.eq.s32.totalorder %s21, 1
      %p123 = por %p121, %p122
      %p124 = scmp.ne.s32.totalorder %s115, %s116
      %p125 = scmp.eq.s32.totalorder %s21, 0
      %p126 = por %p124, %p125
      %p127 = scmp.ne.s32.totalorder %s115, %s116
      %p128 = scmp.eq.s32.totalorder %s22, 1
      %p129 = por %p127, %p128
      %p131 = scmp.ne.s32.totalorder %s116, %s130
      %p132 = scmp.eq.s32.totalorder %s22, 0
      %p133 = por %p131, %p132
      %s135 = sadd.s32 %s134, 1
      %p138 = scmp.eq.s32.totalorder %s16, 1
      %p139 = scmp.ne.s32.totalorder %s134, %s136
      %p140 = scmp.eq.s32.totalorder %s16, 0
      %p141 = por %p139, %p140
      %p142 = scmp.ne.s32.totalorder %s134, %s136
      %p143 = scmp.eq.s32.totalorder %s21, 1
      %p144 = por %p142, %p143
      %p145 = scmp.ne.s32.totalorder %s136, %s137
      %p146 = scmp.eq.s32.totalorder %s21, 0
      %p147 = por %p145, %p146
      %p148 = scmp.ne.s32.totalorder %s136, %s137
      %p149 = scmp.eq.s32.totalorder %s22, 1
      %p150 = por %p148, %p149
      %p152 = scmp.ne.s32.totalorder %s137, %s151
      %p153 = scmp.eq.s32.totalorder %s22, 0
      %p154 = por %p152, %p153
      %s155 = ssub.s32 %s23, %s35
      %s156 = ssub.s32 %s24, %s31
      %s157 = sor.u32 %s155, %s156
      %p158 = scmp.eq.s32.totalorder %s157, 0
      %s160 = sadd.s32 %s159, 1
      %s161 = scalar_select %p158, %s159, %s160
      %p164 = pneg %p158
      %p165 = scmp.eq.s32.totalorder %s16, 1
      %p166 = por %p164, %p165
      %p167 = scmp.ne.s32.totalorder %s159, %s162
      %p168 = scmp.eq.s32.totalorder %s16, 0
      %p169 = por %p167, %p168
      %p170 = scmp.ne.s32.totalorder %s159, %s162
      %p171 = scmp.eq.s32.totalorder %s21, 1
      %p172 = por %p170, %p171
      %p173 = scmp.ne.s32.totalorder %s162, %s163
      %p174 = scmp.eq.s32.totalorder %s21, 0
      %p175 = por %p173, %p174
      %p176 = scmp.ne.s32.totalorder %s162, %s163
      %p177 = scmp.eq.s32.totalorder %s22, 1
      %p178 = por %p176, %p177
      %p180 = scmp.ne.s32.totalorder %s163, %s179
      %p181 = scmp.eq.s32.totalorder %s22, 0
      %p182 = por %p180, %p181
      %p183 = scmp.le.s32.totalorder 1, %s16
      %p184 = scmp.lt.s32.totalorder %s16, 3
      %p185 = pnand %p183, %p184
      %p186 = pneg %p185
      // Predicated region
      $region9: #{fouri_down_forward.3} parent=5 // pred_check
        _
      $region10: #{fouri_down_forward.3} parent=5 // pred_check_branch
        %188 = sbr.rel (%p185) target = $region12
      $region11: #{fouri_down_forward.3} parent=5 // pred_region
        %s189 = ssub.s32 %s16, 1
        // Predicated region
        $region13: #{fouri_down_forward.3} parent=11 // pred_check
          %p190 = pneg %p105
        $region14: #{fouri_down_forward.3} parent=11 // pred_check_branch
          %192 = sbr.rel (%p190) target = $region16
        $region15: #{fouri_down_forward.3} parent=11 // pred_region
          _
        $region16: #{fouri_down_forward.3} parent=11 // pred_fallthru
          _
        // Predicated region
        $region17: #{fouri_down_forward.3} parent=11 // pred_check
          %p193 = pneg %p126
        $region18: #{fouri_down_forward.3} parent=11 // pred_check_branch
          %195 = sbr.rel (%p193) target = $region20
        $region19: #{fouri_down_forward.3} parent=11 // pred_region
          %197 = vsyncadd [#allocation4], 0
          %s199 = sshll.u32 %s3, 4
          %s200 = int_to_ptr.vmem [resolvable:$true] %s199
          %202 = dma.vmem_to_smem %s200, 128, [#allocation2], [#allocation4]
        $region20: #{fouri_down_forward.3} parent=11 // pred_fallthru
          _
        // Predicated region
        $region21: #{fouri_down_forward.3} parent=11 // pred_check
          %p203 = pneg %p147
        $region22: #{fouri_down_forward.3} parent=11 // pred_check_branch
          %205 = sbr.rel (%p203) target = $region24
        $region23: #{fouri_down_forward.3} parent=11 // pred_region
          %207 = vsyncadd [#allocation6], 0
          %s209 = sshll.u32 %s4, 4
          %s210 = int_to_ptr.vmem [resolvable:$true] %s209
          %212 = dma.vmem_to_smem %s210, 16, [#allocation5], [#allocation6]
        $region24: #{fouri_down_forward.3} parent=11 // pred_fallthru
          _
      $region12: #{fouri_down_forward.3} parent=5 // pred_fallthru
        _
      %p213 = scmp.lt.s32.totalorder %s16, 2
      // Predicated region
      $region25: #{fouri_down_forward.3} parent=5 // pred_check
        %p214 = pneg %p213
      $region26: #{fouri_down_forward.3} parent=5 // pred_check_branch
        %216 = sbr.rel (%p214) target = $region28
      $region27: #{fouri_down_forward.3} parent=5 // pred_region
        // Predicated region
        $region29: #{fouri_down_forward.3} parent=27 // pred_check
          %p217 = pneg %p50
        $region30: #{fouri_down_forward.3} parent=27 // pred_check_branch
          %219 = sbr.rel (%p217) target = $region32
        $region31: #{fouri_down_forward.3} parent=27 // pred_region
          %p220 = scmp.lt.s32.totalorder %s23, 1
          %s221 = scalar_select %p220, %s23, 1
          %p222 = scmp.lt.s32.totalorder %s24, 0
          %s223 = scalar_select %p222, %s24, 0
          %s224 = smul.addr %s221, 4
          %s225 = sadd.s32 %s223, %s224
          %s226 = smul.addr %s225, 8
          %s227 = scalar_lea.vmem %s0, %s226
        $region32: #{fouri_down_forward.3} parent=27 // pred_fallthru
          _
        // Predicated region
        $region33: #{fouri_down_forward.3} parent=27 // pred_check
          %p228 = pneg %p78
        $region34: #{fouri_down_forward.3} parent=27 // pred_check_branch
          %230 = sbr.rel (%p228) target = $region36
        $region35: #{fouri_down_forward.3} parent=27 // pred_region
          %p231 = scmp.lt.s32.totalorder %s23, 1
          %s232 = scalar_select %p231, %s23, 1
          %p233 = scmp.lt.s32.totalorder %s24, 0
          %s234 = scalar_select %p233, %s24, 0
          %s235 = smul.addr %s232, 4
          %s236 = sadd.s32 %s234, %s235
          %s237 = smul.addr %s236, 8
          %s238 = scalar_lea.vmem %s1, %s237
        $region36: #{fouri_down_forward.3} parent=27 // pred_fallthru
          _
      $region28: #{fouri_down_forward.3} parent=5 // pred_fallthru
        _
      %p239 = scmp.le.s32.totalorder 1, %s16
      %p240 = scmp.lt.s32.totalorder %s16, 3
      %p241 = pnand %p239, %p240
      %p242 = pneg %p241
      // Predicated region
      $region37: #{fouri_down_forward.3} parent=5 // pred_check
        _
      $region38: #{fouri_down_forward.3} parent=5 // pred_check_branch
        %244 = sbr.rel (%p241) target = $region40
      $region39: #{fouri_down_forward.3} parent=5 // pred_region
        %s245 = ssub.s32 %s16, 1
        // Predicated region
        $region41: #{fouri_down_forward.3} parent=39 // pred_check
          %p246 = pneg %p126
        $region42: #{fouri_down_forward.3} parent=39 // pred_check_branch
          %248 = sbr.rel (%p246) target = $region44
        $region43: #{fouri_down_forward.3} parent=39 // pred_region
          %250 = dma.done [#allocation4], 128
        $region44: #{fouri_down_forward.3} parent=39 // pred_fallthru
          _
        // Predicated region
        $region45: #{fouri_down_forward.3} parent=39 // pred_check
          %p251 = pneg %p147
        $region46: #{fouri_down_forward.3} parent=39 // pred_check_branch
          %253 = sbr.rel (%p251) target = $region48
        $region47: #{fouri_down_forward.3} parent=39 // pred_region
          %255 = dma.done [#allocation6], 16
        $region48: #{fouri_down_forward.3} parent=39 // pred_fallthru
          _
        %256 = sfence
        %p257 = scmp.lt.s32.totalorder %s25, 1
        %s258 = scalar_select %p257, %s25, 1
        %p259 = scmp.lt.s32.totalorder %s26, 0
        %s260 = scalar_select %p259, %s26, 0
        %s261 = smul.addr %s258, 4
        %s262 = sadd.s32 %s260, %s261
        %s263 = smul.addr %s262, 8
        %s264 = scalar_lea.vmem %s0, %s263
        %p265 = pneg %p56
        %p266 = pneg %p53
        %p267 = scmp.lt.s32.totalorder %s25, 1
        %s268 = scalar_select %p267, %s25, 1
        %p269 = scmp.lt.s32.totalorder %s26, 0
        %s270 = scalar_select %p269, %s26, 0
        %s271 = smul.addr %s268, 4
        %s272 = sadd.s32 %s270, %s271
        %s273 = smul.addr %s272, 8
        %s274 = scalar_lea.vmem %s1, %s273
        %p275 = pneg %p84
        %p276 = pneg %p81
        %p277 = pneg %p105
        %p278 = pneg %p102
        %p279 = pneg %p126
        %p280 = pneg %p123
        %p281 = pneg %p147
        %p282 = pneg %p144
        %p283 = pneg %p175
        %p284 = pneg %p172
        %s285 = sand.u32 %s162, 1
        %s286 = scalar_lea.sflag [#allocation3], %s285
        %s287 = sand.u32 %s162, 1
        %s288 = smul.addr %s287, 64
        %s289 = scalar_lea.vmem [#allocation7], %s288
        %p290 = scmp.lt.s32.totalorder %s25, 1
        %s291 = scalar_select %p290, %s25, 1
        %p292 = scmp.lt.s32.totalorder %s26, 0
        %s293 = scalar_select %p292, %s26, 0
        %s294 = smul.addr %s291, 4
        %s295 = sadd.s32 %s293, %s294
        %s296 = smul.addr %s295, 8
        %s297 = scalar_lea.vmem %s0, %s296
        %p298 = scmp.lt.s32.totalorder %s25, 1
        %s299 = scalar_select %p298, %s25, 1
        %p300 = scmp.lt.s32.totalorder %s26, 0
        %s301 = scalar_select %p300, %s26, 0
        %s302 = smul.addr %s299, 4
        %s303 = sadd.s32 %s301, %s302
        %s304 = smul.addr %s303, 8
        %s305 = scalar_lea.vmem %s1, %s304
        %v306 = vld [vmem:[%s305] sm:$0xff]
        %v307 = vld [vmem:[%s305 + $0x8] sm:$0xff]
        %v308 = vld [vmem:[%s305 + $0x10] sm:$0xff]
        %v309 = vld [vmem:[%s305 + $0x18] sm:$0xff]
        %314 = vrot.lane.b32.xlu0 %v306, 112
        %v315 = vpop.permute.xlu0 %314
        %316 = vrot.lane.b32.xlu0 %v307, 112
        %v317 = vpop.permute.xlu0 %316
        %318 = vrot.lane.b32.xlu0 %v308, 112
        %v319 = vpop.permute.xlu0 %318
        %320 = vrot.lane.b32.xlu0 %v309, 112
        %v321 = vpop.permute.xlu0 %320
        %v326 = vadd.f32 %v306, %v315
        %v327 = vadd.f32 %v307, %v317
        %v328 = vadd.f32 %v308, %v319
        %v329 = vadd.f32 %v309, %v321
        %v330 = vld [vmem:[%s2] sm:$0xff]
        %v331 = vld [vmem:[%s2 + $0x8] sm:$0xff]
        %vm332 = vcmask 130048
        %v334 = vsel %vm332, %v326, 0
        %v337 = vsel %vm332, %v327, 0
        %v340 = vsel %vm332, %v328, 0
        %v343 = vsel %vm332, %v329, 0
        %345 = vmatpush.msra.mxu0 0.0
        %346 = vmatpush.msra.mxu0 0.0
        %347 = vmatpush.msra.mxu0 0.0
        %348 = vmatpush.msra.mxu0 0.0
        %349 = vmatpush.msra.mxu0 0.0
        %350 = vmatpush.msra.mxu0 0.0
        %351 = vmatpush.msra.mxu0 0.0
        %352 = vmatpush.msra.mxu0 0.0
        %353 = vmatpush.msra.mxu0 0.0
        %354 = vmatpush.msra.mxu0 0.0
        %355 = vmatpush.msra.mxu0 0.0
        %356 = vmatpush.msra.mxu0 0.0
        %357 = vmatpush.msra.mxu0 0.0
        %358 = vmatpush.msra.mxu0 0.0
        %v359 = vand.u32 %v331, 4294901760
        %360 = vmatpush.msra.mxu0 %v359
        %v361 = vand.u32 %v330, 4294901760
        %362 = vmatpush.msra.mxu0 %v361
        %v363 = vand.u32 %v334, 4294901760
        %v364 = vsub.f32 %v334, %v363
        %v365 = vand.u32 %v364, 4294901760
        %v366 = vsub.f32 %v364, %v365
        %v367 = vand.u32 %v366, 4294901760
        %368 = vmatmul.f32.gmra.mxu0 %v367
        %v369 = vpop.f32.mrf.mxu0
        %v370 = vadd.f32 0.0, %v369
        %v371 = vand.u32 %v337, 4294901760
        %v372 = vsub.f32 %v337, %v371
        %v373 = vand.u32 %v372, 4294901760
        %v374 = vsub.f32 %v372, %v373
        %v375 = vand.u32 %v374, 4294901760
        %376 = vmatmul.f32.gmra.mxu0 %v375
        %v377 = vpop.f32.mrf.mxu0
        %v378 = vadd.f32 0.0, %v377
        %v379 = vand.u32 %v340, 4294901760
        %v380 = vsub.f32 %v340, %v379
        %v381 = vand.u32 %v380, 4294901760
        %v382 = vsub.f32 %v380, %v381
        %v383 = vand.u32 %v382, 4294901760
        %384 = vmatmul.f32.gmra.mxu0 %v383
        %v385 = vpop.f32.mrf.mxu0
        %v386 = vadd.f32 0.0, %v385
        %v387 = vand.u32 %v343, 4294901760
        %v388 = vsub.f32 %v343, %v387
        %v389 = vand.u32 %v388, 4294901760
        %v390 = vsub.f32 %v388, %v389
        %v391 = vand.u32 %v390, 4294901760
        %392 = vmatmul.f32.gmra.mxu0 %v391
        %v393 = vpop.f32.mrf.mxu0
        %v394 = vadd.f32 0.0, %v393
        %395 = vdwg.mxu0
        %396 = vmatpush.msra.mxu0 0.0
        %397 = vmatpush.msra.mxu0 0.0
        %398 = vmatpush.msra.mxu0 0.0
        %399 = vmatpush.msra.mxu0 0.0
        %400 = vmatpush.msra.mxu0 0.0
        %401 = vmatpush.msra.mxu0 0.0
        %402 = vmatpush.msra.mxu0 0.0
        %403 = vmatpush.msra.mxu0 0.0
        %404 = vmatpush.msra.mxu0 0.0
        %405 = vmatpush.msra.mxu0 0.0
        %406 = vmatpush.msra.mxu0 0.0
        %407 = vmatpush.msra.mxu0 0.0
        %408 = vmatpush.msra.mxu0 0.0
        %409 = vmatpush.msra.mxu0 0.0
        %v410 = vand.u32 %v331, 4294901760
        %v411 = vsub.f32 %v331, %v410
        %v412 = vand.u32 %v411, 4294901760
        %v413 = vsub.f32 %v411, %v412
        %v414 = vand.u32 %v413, 4294901760
        %415 = vmatpush.msra.mxu0 %v414
        %v416 = vand.u32 %v330, 4294901760
        %v417 = vsub.f32 %v330, %v416
        %v418 = vand.u32 %v417, 4294901760
        %v419 = vsub.f32 %v417, %v418
        %v420 = vand.u32 %v419, 4294901760
        %421 = vmatpush.msra.mxu0 %v420
        %v422 = vand.u32 %v334, 4294901760
        %423 = vmatmul.f32.gmra.mxu0 %v422
        %v424 = vpop.f32.mrf.mxu0
        %v425 = vadd.f32 %v370, %v424
        %v426 = vand.u32 %v337, 4294901760
        %427 = vmatmul.f32.gmra.mxu0 %v426
        %v428 = vpop.f32.mrf.mxu0
        %v429 = vadd.f32 %v378, %v428
        %v430 = vand.u32 %v340, 4294901760
        %431 = vmatmul.f32.gmra.mxu0 %v430
        %v432 = vpop.f32.mrf.mxu0
        %v433 = vadd.f32 %v386, %v432
        %v434 = vand.u32 %v343, 4294901760
        %435 = vmatmul.f32.gmra.mxu0 %v434
        %v436 = vpop.f32.mrf.mxu0
        %v437 = vadd.f32 %v394, %v436
        %438 = vdwg.mxu0
        %439 = vmatpush.msra.mxu0 0.0
        %440 = vmatpush.msra.mxu0 0.0
        %441 = vmatpush.msra.mxu0 0.0
        %442 = vmatpush.msra.mxu0 0.0
        %443 = vmatpush.msra.mxu0 0.0
        %444 = vmatpush.msra.mxu0 0.0
        %445 = vmatpush.msra.mxu0 0.0
        %446 = vmatpush.msra.mxu0 0.0
        %447 = vmatpush.msra.mxu0 0.0
        %448 = vmatpush.msra.mxu0 0.0
        %449 = vmatpush.msra.mxu0 0.0
        %450 = vmatpush.msra.mxu0 0.0
        %451 = vmatpush.msra.mxu0 0.0
        %452 = vmatpush.msra.mxu0 0.0
        %v453 = vand.u32 %v331, 4294901760
        %v454 = vsub.f32 %v331, %v453
        %455 = vmatpush.msra.mxu0 %v454
        %v456 = vand.u32 %v330, 4294901760
        %v457 = vsub.f32 %v330, %v456
        %458 = vmatpush.msra.mxu0 %v457
        %v459 = vand.u32 %v334, 4294901760
        %v460 = vsub.f32 %v334, %v459
        %461 = vmatmul.f32.gmra.mxu0 %v460
        %v462 = vpop.f32.mrf.mxu0
        %v463 = vadd.f32 %v425, %v462
        %v464 = vand.u32 %v337, 4294901760
        %v465 = vsub.f32 %v337, %v464
        %466 = vmatmul.f32.gmra.mxu0 %v465
        %v467 = vpop.f32.mrf.mxu0
        %v468 = vadd.f32 %v429, %v467
        %v469 = vand.u32 %v340, 4294901760
        %v470 = vsub.f32 %v340, %v469
        %471 = vmatmul.f32.gmra.mxu0 %v470
        %v472 = vpop.f32.mrf.mxu0
        %v473 = vadd.f32 %v433, %v472
        %v474 = vand.u32 %v343, 4294901760
        %v475 = vsub.f32 %v343, %v474
        %476 = vmatmul.f32.gmra.mxu0 %v475
        %v477 = vpop.f32.mrf.mxu0
        %v478 = vadd.f32 %v437, %v477
        %479 = vdwg.mxu0
        %480 = vmatpush.msra.mxu0 0.0
        %481 = vmatpush.msra.mxu0 0.0
        %482 = vmatpush.msra.mxu0 0.0
        %483 = vmatpush.msra.mxu0 0.0
        %484 = vmatpush.msra.mxu0 0.0
        %485 = vmatpush.msra.mxu0 0.0
        %486 = vmatpush.msra.mxu0 0.0
        %487 = vmatpush.msra.mxu0 0.0
        %488 = vmatpush.msra.mxu0 0.0
        %489 = vmatpush.msra.mxu0 0.0
        %490 = vmatpush.msra.mxu0 0.0
        %491 = vmatpush.msra.mxu0 0.0
        %492 = vmatpush.msra.mxu0 0.0
        %493 = vmatpush.msra.mxu0 0.0
        %v494 = vand.u32 %v331, 4294901760
        %495 = vmatpush.msra.mxu0 %v494
        %v496 = vand.u32 %v330, 4294901760
        %497 = vmatpush.msra.mxu0 %v496
        %v498 = vand.u32 %v334, 4294901760
        %v499 = vsub.f32 %v334, %v498
        %v500 = vand.u32 %v499, 4294901760
        %501 = vmatmul.f32.gmra.mxu0 %v500
        %v502 = vpop.f32.mrf.mxu0
        %v503 = vadd.f32 %v463, %v502
        %v504 = vand.u32 %v337, 4294901760
        %v505 = vsub.f32 %v337, %v504
        %v506 = vand.u32 %v505, 4294901760
        %507 = vmatmul.f32.gmra.mxu0 %v506
        %v508 = vpop.f32.mrf.mxu0
        %v509 = vadd.f32 %v468, %v508
        %v510 = vand.u32 %v340, 4294901760
        %v511 = vsub.f32 %v340, %v510
        %v512 = vand.u32 %v511, 4294901760
        %513 = vmatmul.f32.gmra.mxu0 %v512
        %v514 = vpop.f32.mrf.mxu0
        %v515 = vadd.f32 %v473, %v514
        %v516 = vand.u32 %v343, 4294901760
        %v517 = vsub.f32 %v343, %v516
        %v518 = vand.u32 %v517, 4294901760
        %519 = vmatmul.f32.gmra.mxu0 %v518
        %v520 = vpop.f32.mrf.mxu0
        %v521 = vadd.f32 %v478, %v520
        %522 = vdwg.mxu0
        %523 = vmatpush.msra.mxu0 0.0
        %524 = vmatpush.msra.mxu0 0.0
        %525 = vmatpush.msra.mxu0 0.0
        %526 = vmatpush.msra.mxu0 0.0
        %527 = vmatpush.msra.mxu0 0.0
        %528 = vmatpush.msra.mxu0 0.0
        %529 = vmatpush.msra.mxu0 0.0
        %530 = vmatpush.msra.mxu0 0.0
        %531 = vmatpush.msra.mxu0 0.0
        %532 = vmatpush.msra.mxu0 0.0
        %533 = vmatpush.msra.mxu0 0.0
        %534 = vmatpush.msra.mxu0 0.0
        %535 = vmatpush.msra.mxu0 0.0
        %536 = vmatpush.msra.mxu0 0.0
        %v537 = vand.u32 %v331, 4294901760
        %v538 = vsub.f32 %v331, %v537
        %v539 = vand.u32 %v538, 4294901760
        %540 = vmatpush.msra.mxu0 %v539
        %v541 = vand.u32 %v330, 4294901760
        %v542 = vsub.f32 %v330, %v541
        %v543 = vand.u32 %v542, 4294901760
        %544 = vmatpush.msra.mxu0 %v543
        %v545 = vand.u32 %v334, 4294901760
        %546 = vmatmul.f32.gmra.mxu0 %v545
        %v547 = vpop.f32.mrf.mxu0
        %v548 = vadd.f32 %v503, %v547
        %v549 = vand.u32 %v337, 4294901760
        %550 = vmatmul.f32.gmra.mxu0 %v549
        %v551 = vpop.f32.mrf.mxu0
        %v552 = vadd.f32 %v509, %v551
        %v553 = vand.u32 %v340, 4294901760
        %554 = vmatmul.f32.gmra.mxu0 %v553
        %v555 = vpop.f32.mrf.mxu0
        %v556 = vadd.f32 %v515, %v555
        %v557 = vand.u32 %v343, 4294901760
        %558 = vmatmul.f32.gmra.mxu0 %v557
        %v559 = vpop.f32.mrf.mxu0
        %v560 = vadd.f32 %v521, %v559
        %561 = vdwg.mxu0
        %562 = vmatpush.msra.mxu0 0.0
        %563 = vmatpush.msra.mxu0 0.0
        %564 = vmatpush.msra.mxu0 0.0
        %565 = vmatpush.msra.mxu0 0.0
        %566 = vmatpush.msra.mxu0 0.0
        %567 = vmatpush.msra.mxu0 0.0
        %568 = vmatpush.msra.mxu0 0.0
        %569 = vmatpush.msra.mxu0 0.0
        %570 = vmatpush.msra.mxu0 0.0
        %571 = vmatpush.msra.mxu0 0.0
        %572 = vmatpush.msra.mxu0 0.0
        %573 = vmatpush.msra.mxu0 0.0
        %574 = vmatpush.msra.mxu0 0.0
        %575 = vmatpush.msra.mxu0 0.0
        %v576 = vand.u32 %v331, 4294901760
        %577 = vmatpush.msra.mxu0 %v576
        %v578 = vand.u32 %v330, 4294901760
        %579 = vmatpush.msra.mxu0 %v578
        %v580 = vand.u32 %v334, 4294901760
        %581 = vmatmul.f32.gmra.mxu0 %v580
        %v582 = vpop.f32.mrf.mxu0
        %v583 = vadd.f32 %v548, %v582
        %v584 = vand.u32 %v337, 4294901760
        %585 = vmatmul.f32.gmra.mxu0 %v584
        %v586 = vpop.f32.mrf.mxu0
        %v587 = vadd.f32 %v552, %v586
        %v588 = vand.u32 %v340, 4294901760
        %589 = vmatmul.f32.gmra.mxu0 %v588
        %v590 = vpop.f32.mrf.mxu0
        %v591 = vadd.f32 %v556, %v590
        %v592 = vand.u32 %v343, 4294901760
        %593 = vmatmul.f32.gmra.mxu0 %v592
        %v594 = vpop.f32.mrf.mxu0
        %v595 = vadd.f32 %v560, %v594
        %596 = vdwg.mxu0
        %v597 = vld [vmem:[%s297] sm:$0xff]
        %v598 = vld [vmem:[%s297 + $0x8] sm:$0xff]
        %v599 = vld [vmem:[%s297 + $0x10] sm:$0xff]
        %v600 = vld [vmem:[%s297 + $0x18] sm:$0xff]
        %v601 = vadd.f32 %v597, %v583
        %v602 = vadd.f32 %v598, %v587
        %v603 = vadd.f32 %v599, %v591
        %v604 = vadd.f32 %v600, %v595
        %s605 = sld [smem:[#allocation2]]
        %v606 = vstv %s605
        %v607 = vmul.f32 %v601, %v606
        %s608 = sld [smem:[#allocation2 + $0x1]]
        %v609 = vstv %s608
        %v610 = vmul.f32 %v602, %v609
        %v611 = vadd.f32 %v607, %v610
        %s612 = sld [smem:[#allocation2 + $0x2]]
        %v613 = vstv %s612
        %v614 = vmul.f32 %v603, %v613
        %v615 = vadd.f32 %v611, %v614
        %s616 = sld [smem:[#allocation2 + $0x3]]
        %v617 = vstv %s616
        %v618 = vmul.f32 %v604, %v617
        %v619 = vadd.f32 %v615, %v618
        %s620 = sld [smem:[#allocation5]]
        %v621 = vstv %s620
        %v622 = vadd.f32 %v619, %v621
        %vm623 = vcmp.gt.f32.partialorder %v622, 0.0
        %v624 = vmul.f32 %v622, 0.1
        %v625 = vsel %vm623, %v622, %v624
        %vm626 = vcmask 64512
        %627 = vst.msk [vmem:[%s289] sm:$0xff] %vm626, %v625
        %s628 = sld [smem:[#allocation2 + $0x80]]
        %v629 = vstv %s628
        %v630 = vmul.f32 %v601, %v629
        %s631 = sld [smem:[#allocation2 + $0x81]]
        %v632 = vstv %s631
        %v633 = vmul.f32 %v602, %v632
        %v634 = vadd.f32 %v630, %v633
        %s635 = sld [smem:[#allocation2 + $0x82]]
        %v636 = vstv %s635
        %v637 = vmul.f32 %v603, %v636
        %v638 = vadd.f32 %v634, %v637
        %s639 = sld [smem:[#allocation2 + $0x83]]
        %v640 = vstv %s639
        %v641 = vmul.f32 %v604, %v640
        %v642 = vadd.f32 %v638, %v641
        %s643 = sld [smem:[#allocation5 + $0x1]]
        %v644 = vstv %s643
        %v645 = vadd.f32 %v642, %v644
        %vm646 = vcmp.gt.f32.partialorder %v645, 0.0
        %v647 = vmul.f32 %v645, 0.1
        %v648 = vsel %vm646, %v645, %v647
        %s649 = scalar_lea.vmem %s289, 8 [#allocation7]
        %650 = vst.msk [vmem:[%s649] sm:$0xff] %vm626, %v648
        %s651 = sld [smem:[#allocation2 + $0x100]]
        %v652 = vstv %s651
        %v653 = vmul.f32 %v601, %v652
        %s654 = sld [smem:[#allocation2 + $0x101]]
        %v655 = vstv %s654
        %v656 = vmul.f32 %v602, %v655
        %v657 = vadd.f32 %v653, %v656
        %s658 = sld [smem:[#allocation2 + $0x102]]
        %v659 = vstv %s658
        %v660 = vmul.f32 %v603, %v659
        %v661 = vadd.f32 %v657, %v660
        %s662 = sld [smem:[#allocation2 + $0x103]]
        %v663 = vstv %s662
        %v664 = vmul.f32 %v604, %v663
        %v665 = vadd.f32 %v661, %v664
        %s666 = sld [smem:[#allocation5 + $0x2]]
        %v667 = vstv %s666
        %v668 = vadd.f32 %v665, %v667
        %vm669 = vcmp.gt.f32.partialorder %v668, 0.0
        %v670 = vmul.f32 %v668, 0.1
        %v671 = vsel %vm669, %v668, %v670
        %s672 = scalar_lea.vmem %s289, 16 [#allocation7]
        %673 = vst.msk [vmem:[%s672] sm:$0xff] %vm626, %v671
        %s674 = sld [smem:[#allocation2 + $0x180]]
        %v675 = vstv %s674
        %v676 = vmul.f32 %v601, %v675
        %s677 = sld [smem:[#allocation2 + $0x181]]
        %v678 = vstv %s677
        %v679 = vmul.f32 %v602, %v678
        %v680 = vadd.f32 %v676, %v679
        %s681 = sld [smem:[#allocation2 + $0x182]]
        %v682 = vstv %s681
        %v683 = vmul.f32 %v603, %v682
        %v684 = vadd.f32 %v680, %v683
        %s685 = sld [smem:[#allocation2 + $0x183]]
        %v686 = vstv %s685
        %v687 = vmul.f32 %v604, %v686
        %v688 = vadd.f32 %v684, %v687
        %s689 = sld [smem:[#allocation5 + $0x3]]
        %v690 = vstv %s689
        %v691 = vadd.f32 %v688, %v690
        %vm692 = vcmp.gt.f32.partialorder %v691, 0.0
        %v693 = vmul.f32 %v691, 0.1
        %v694 = vsel %vm692, %v691, %v693
        %s695 = scalar_lea.vmem %s289, 24 [#allocation7]
        %696 = vst.msk [vmem:[%s695] sm:$0xff] %vm626, %v694
        %s697 = sld [smem:[#allocation2 + $0x200]]
        %v698 = vstv %s697
        %v699 = vmul.f32 %v601, %v698
        %s700 = sld [smem:[#allocation2 + $0x201]]
        %v701 = vstv %s700
        %v702 = vmul.f32 %v602, %v701
        %v703 = vadd.f32 %v699, %v702
        %s704 = sld [smem:[#allocation2 + $0x202]]
        %v705 = vstv %s704
        %v706 = vmul.f32 %v603, %v705
        %v707 = vadd.f32 %v703, %v706
        %s708 = sld [smem:[#allocation2 + $0x203]]
        %v709 = vstv %s708
        %v710 = vmul.f32 %v604, %v709
        %v711 = vadd.f32 %v707, %v710
        %s712 = sld [smem:[#allocation5 + $0x4]]
        %v713 = vstv %s712
        %v714 = vadd.f32 %v711, %v713
        %vm715 = vcmp.gt.f32.partialorder %v714, 0.0
        %v716 = vmul.f32 %v714, 0.1
        %v717 = vsel %vm715, %v714, %v716
        %s718 = scalar_lea.vmem %s289, 32 [#allocation7]
        %719 = vst.msk [vmem:[%s718] sm:$0xff] %vm626, %v717
        %s720 = sld [smem:[#allocation2 + $0x280]]
        %v721 = vstv %s720
        %v722 = vmul.f32 %v601, %v721
        %s723 = sld [smem:[#allocation2 + $0x281]]
        %v724 = vstv %s723
        %v725 = vmul.f32 %v602, %v724
        %v726 = vadd.f32 %v722, %v725
        %s727 = sld [smem:[#allocation2 + $0x282]]
        %v728 = vstv %s727
        %v729 = vmul.f32 %v603, %v728
        %v730 = vadd.f32 %v726, %v729
        %s731 = sld [smem:[#allocation2 + $0x283]]
        %v732 = vstv %s731
        %v733 = vmul.f32 %v604, %v732
        %v734 = vadd.f32 %v730, %v733
        %s735 = sld [smem:[#allocation5 + $0x5]]
        %v736 = vstv %s735
        %v737 = vadd.f32 %v734, %v736
        %vm738 = vcmp.gt.f32.partialorder %v737, 0.0
        %v739 = vmul.f32 %v737, 0.1
        %v740 = vsel %vm738, %v737, %v739
        %s741 = scalar_lea.vmem %s289, 40 [#allocation7]
        %742 = vst.msk [vmem:[%s741] sm:$0xff] %vm626, %v740
        %s743 = sld [smem:[#allocation2 + $0x300]]
        %v744 = vstv %s743
        %v745 = vmul.f32 %v601, %v744
        %s746 = sld [smem:[#allocation2 + $0x301]]
        %v747 = vstv %s746
        %v748 = vmul.f32 %v602, %v747
        %v749 = vadd.f32 %v745, %v748
        %s750 = sld [smem:[#allocation2 + $0x302]]
        %v751 = vstv %s750
        %v752 = vmul.f32 %v603, %v751
        %v753 = vadd.f32 %v749, %v752
        %s754 = sld [smem:[#allocation2 + $0x303]]
        %v755 = vstv %s754
        %v756 = vmul.f32 %v604, %v755
        %v757 = vadd.f32 %v753, %v756
        %s758 = sld [smem:[#allocation5 + $0x6]]
        %v759 = vstv %s758
        %v760 = vadd.f32 %v757, %v759
        %vm761 = vcmp.gt.f32.partialorder %v760, 0.0
        %v762 = vmul.f32 %v760, 0.1
        %v763 = vsel %vm761, %v760, %v762
        %s764 = scalar_lea.vmem %s289, 48 [#allocation7]
        %765 = vst.msk [vmem:[%s764] sm:$0xff] %vm626, %v763
        %s766 = sld [smem:[#allocation2 + $0x380]]
        %v767 = vstv %s766
        %v768 = vmul.f32 %v601, %v767
        %s769 = sld [smem:[#allocation2 + $0x381]]
        %v770 = vstv %s769
        %v771 = vmul.f32 %v602, %v770
        %v772 = vadd.f32 %v768, %v771
        %s773 = sld [smem:[#allocation2 + $0x382]]
        %v774 = vstv %s773
        %v775 = vmul.f32 %v603, %v774
        %v776 = vadd.f32 %v772, %v775
        %s777 = sld [smem:[#allocation2 + $0x383]]
        %v778 = vstv %s777
        %v779 = vmul.f32 %v604, %v778
        %v780 = vadd.f32 %v776, %v779
        %s781 = sld [smem:[#allocation5 + $0x7]]
        %v782 = vstv %s781
        %v783 = vadd.f32 %v780, %v782
        %vm784 = vcmp.gt.f32.partialorder %v783, 0.0
        %v785 = vmul.f32 %v783, 0.1
        %v786 = vsel %vm784, %v783, %v785
        %s787 = scalar_lea.vmem %s289, 56 [#allocation7]
        %788 = vst.msk [vmem:[%s787] sm:$0xff] %vm626, %v786
        %s789 = sand.u32 %s162, 1
        %s790 = scalar_lea.sflag [#allocation3], %s789
        %s791 = sand.u32 %s162, 1
        %s792 = smul.addr %s791, 64
        %s793 = scalar_lea.vmem [#allocation7], %s792
        // Predicated region
        $region49: #{fouri_down_forward.3} parent=39 // pred_check
          %p794 = pneg %p172
        $region50: #{fouri_down_forward.3} parent=39 // pred_check_branch
          %796 = sbr.rel (%p794) target = $region52
        $region51: #{fouri_down_forward.3} parent=39 // pred_region
          %798 = vsyncadd %s790, 0
          %s799 = smul.addr %s25, 8
          %s800 = sadd.s32 %s26, %s799
          %s801 = smul.addr %s800, 8
          %s802 = scalar_lea.hbm %s5, %s801
          %s803 = sshll.u32 %s793, 4
          %s804 = int_to_ptr.vmem [resolvable:$true] %s803
          %s805 = sshll.u32 %s802, 4
          %s806 = int_to_ptr.hbm [resolvable:$true] %s805
          %811 = dma.vmem_to_hbm [thread:$0]  %s804, 1024, %s806, %s790, 128, 128, 8
        $region52: #{fouri_down_forward.3} parent=39 // pred_fallthru
          _
      $region40: #{fouri_down_forward.3} parent=5 // pred_fallthru
        _
      %p812 = scmp.le.s32.totalorder 2, %s16
      // Predicated region
      $region53: #{fouri_down_forward.3} parent=5 // pred_check
        %p813 = pneg %p812
      $region54: #{fouri_down_forward.3} parent=5 // pred_check_branch
        %815 = sbr.rel (%p813) target = $region56
      $region55: #{fouri_down_forward.3} parent=5 // pred_region
        %s816 = ssub.s32 %s16, 2
        // Predicated region
        $region57: #{fouri_down_forward.3} parent=55 // pred_check
          %p817 = pneg %p178
        $region58: #{fouri_down_forward.3} parent=55 // pred_check_branch
          %819 = sbr.rel (%p817) target = $region60
        $region59: #{fouri_down_forward.3} parent=55 // pred_region
          %s820 = sand.u32 %s163, 1
          %s821 = scalar_lea.sflag [#allocation3], %s820
          %s822 = sand.u32 %s163, 1
          %s823 = smul.addr %s822, 64
          %s824 = scalar_lea.vmem [#allocation7], %s823
          %826 = dma.done %s821, 1024
        $region60: #{fouri_down_forward.3} parent=55 // pred_fallthru
          _
      $region56: #{fouri_down_forward.3} parent=5 // pred_fallthru
        _
    $region6: #{fouri_down_forward.3} parent=1 // loop_footer
      %s20 = sadd.s32 1, %s16
    $region7: #{fouri_down_forward.3} parent=1 // loop_footer_branch
      %15 = sbr.rel target = $region3
    $region8: #{fouri_down_forward.3} parent=1 // loop_exit
      _
    %827 = vsyncpa [#allocation3], 1
    %s828 = scalar_lea.sflag [#allocation3], 1
    %829 = vsyncpa %s828, 1
    %830 = vsyncpa [#allocation4], 1
    %s831 = scalar_lea.sflag [#allocation4], 1
    %832 = vsyncpa %s831, 1
    %833 = vsyncpa [#allocation6], 1

</llo_original>
